<compile_context>
chip_gen: v5e
topology: v5e:2x2
jax: 0.10.0
libtpu: 0.0.40
codegen_flags: <defaults>
</compile_context>

<pallas_src>
import functools

import jax
import jax.numpy as jnp
import numpy as np
from jax import lax
from jax.experimental import pallas as pl
from jax.experimental.pallas import tpu as pltpu


def _round_up(x, m):
    return (x + m - 1) // m * m


@functools.lru_cache(maxsize=None)
def _vmem_capacity_bytes():
    """Per-generation VMEM capacity (v5e/v6e: 128 MiB, v7x: 64 MiB per TC)."""
    try:
        return int(pltpu.get_tpu_info().vmem_capacity_bytes)
    except Exception:                      # conservative fallback (v7x-sized)
        return 64 * 1024 * 1024


@functools.lru_cache(maxsize=None)
def _supports_single_buffering():
    """One-time capability probe for pipeline_mode=pl.Buffered(1).

    Compile-only (lower+compile of a tiny kernel, never executed), so it
    cannot mask genuine runtime failures of the real kernel.
    """
    def _copy(x_ref, o_ref):
        o_ref[...] = x_ref[...]

    try:
        fn = pl.pallas_call(
            _copy,
            out_shape=jax.ShapeDtypeStruct((8, 128), jnp.float32),
            grid=(2,),
            in_specs=[pl.BlockSpec((8, 128), lambda i: (0, 0),
                                   pipeline_mode=pl.Buffered(1))],
            out_specs=pl.BlockSpec((8, 128), lambda i: (0, 0)),
        )
        jax.jit(fn).lower(jax.ShapeDtypeStruct((8, 128), jnp.float32)).compile()
        return True
    except Exception:                      # capability probe only
        return False


def _lstm_kernel(x_ref, h0_ref, c0_ref, wih_ref, whh_ref, b_ref,
                 out_ref, hN_ref, cN_ref,
                 xg_scr, h_scr, c_scr,
                 *, seq_len, block_steps, batch_rows):
    """One grid step = `block_steps` timesteps of the recurrence.

    x_ref   : (block_steps*batch_rows, In_p)  time-major, pre-flattened 2-D
              (no in-kernel reshape -> no relayout copy on the critical path)
    out_ref : (block_steps*batch_rows, H_p)
    """
    t_blk = pl.program_id(0)
    H_p = h_scr.shape[-1]

    @pl.when(t_blk == 0)
    def _():                               # load initial state once
        h_scr[...] = h0_ref[0].astype(jnp.float32)
        c_scr[...] = c0_ref[0].astype(jnp.float32)

    # Hoisted input projection: ONE lane-dense (TT*B, In) @ (In, 4H) MXU matmul
    # per grid step, staged into VMEM scratch so the (TT*B, 4H) f32 value does
    # not pin vregs across the serial recurrence below.
    xg_scr[...] = (
        jnp.dot(x_ref[...], wih_ref[...], preferred_element_type=jnp.float32)
        + b_ref[...])

    def step(i, carry):
        h, c = carry
        row0 = pl.multiple_of(i * batch_rows, batch_rows)
        # W_hh is re-read from VMEM inside the loop so its live range stays
        # within one iteration.
        # TODO(synk): hold W_hh resident in MXU weight registers across the
        # block via pltpu.matmul_push_rhs / matmul_acc_lhs / matmul_pop.
        gates = xg_scr[pl.ds(row0, batch_rows), :] + jnp.dot(
            h.astype(whh_ref.dtype), whh_ref[...],
            preferred_element_type=jnp.float32)
        i_g = jax.nn.sigmoid(gates[:, 0 * H_p:1 * H_p])
        f_g = jax.nn.sigmoid(gates[:, 1 * H_p:2 * H_p])
        g_g = jnp.tanh(gates[:, 2 * H_p:3 * H_p])
        o_g = jax.nn.sigmoid(gates[:, 3 * H_p:4 * H_p])
        c_new = f_g * c + i_g * g_g
        h_new = o_g * jnp.tanh(c_new)
        out_ref[pl.ds(row0, batch_rows), :] = h_new.astype(out_ref.dtype)
        # Freeze state on padded timesteps (global t >= seq_len) so h_n / c_n
        # reflect the last *real* timestep.
        valid = (t_blk * block_steps + i) < seq_len
        h = jnp.where(valid, h_new, h)
        c = jnp.where(valid, c_new, c)
        return h, c

    h, c = lax.fori_loop(0, block_steps, step, (h_scr[...], c_scr[...]),
                         unroll=True)
    h_scr[...] = h
    c_scr[...] = c

    # Final-state outputs written only on the last time block; their block
    # index is grid-invariant so the VMEM block stays resident until grid end.
    # NOTE: padded *batch rows* of h/c drift away from zero (bias broadcasts
    # into them).  Harmless: rows are independent and sliced off by the
    # wrapper; do not rely on them being zero.
    @pl.when(t_blk == pl.num_programs(0) - 1)
    def _():
        hN_ref[0] = h.astype(hN_ref.dtype)
        cN_ref[0] = c.astype(cN_ref.dtype)


def prepare_lstm_params(weight_ih, weight_hh, bias_ih, bias_hh, *,
                        mxu_dtype=jnp.bfloat16):
    """One-time weight prep (per-gate pad, transpose, cast).  Reuse across calls."""
    H = weight_hh.shape[1]
    In = weight_ih.shape[1]
    H_p = _round_up(H, 128)    # lane alignment -> lane-dense gate slices/stores
    In_p = _round_up(In, 8)

    # Per-gate padding keeps (i, f, g, o) chunk boundaries at multiples of H_p.
    wih4 = jnp.pad(weight_ih.reshape(4, H, In),
                   ((0, 0), (0, H_p - H), (0, In_p - In)))
    whh4 = jnp.pad(weight_hh.reshape(4, H, H),
                   ((0, 0), (0, H_p - H), (0, H_p - H)))
    bias4 = jnp.pad((bias_ih + bias_hh).reshape(4, H), ((0, 0), (0, H_p - H)))

    wih_t = wih4.reshape(4 * H_p, In_p).T.astype(mxu_dtype)   # [In_p, 4*H_p]
    whh_t = whh4.reshape(4 * H_p, H_p).T.astype(mxu_dtype)    # [H_p, 4*H_p]
    bias_row = bias4.reshape(1, 4 * H_p).astype(jnp.float32)
    return wih_t, whh_t, bias_row


@functools.partial(jax.jit, static_argnames=("hidden_size", "single_buffer"))
def _manual_lstm_impl(x, h0, c0, wih_t, whh_t, bias_row, *,
                      hidden_size, single_buffer):
    T, B, In = x.shape
    H = hidden_size
    In_p, G = wih_t.shape
    H_p = G // 4
    mxu_dtype = wih_t.dtype

    # ---- layout plumbing (zero-padding only; no extra FLOPs) ----
    B_p = _round_up(B, 8)                    # sublane alignment
    TT = min(16, _round_up(T, 8))            # timesteps per grid step (sweepable)
    T_pad = _round_up(T, TT)                 # pad time instead of shrinking TT
    nt = T_pad // TT

    x_p = jnp.pad(x.astype(mxu_dtype),
                  ((0, T_pad - T), (0, B_p - B), (0, In_p - In)))
    x_flat = x_p.reshape(T_pad * B_p, In_p)  # contiguous reshape (wrapper-side)
    h0_p = jnp.pad(h0.astype(jnp.float32), ((0, 0), (0, B_p - B), (0, H_p - H)))
    c0_p = jnp.pad(c0.astype(jnp.float32), ((0, 0), (0, B_p - B), (0, H_p - H)))

    # Grid-invariant operands: no second pipeline buffer (also h0/c0).
    inv = dict(pipeline_mode=pl.Buffered(1)) if single_buffer else {}

    grid_spec = pltpu.PrefetchScalarGridSpec(
        num_scalar_prefetch=0,
        grid=(nt,),
        in_specs=[
            pl.BlockSpec((TT * B_p, In_p), lambda t: (t, 0)),            # x
            pl.BlockSpec((1, B_p, H_p), lambda t: (0, 0, 0), **inv),     # h0
            pl.BlockSpec((1, B_p, H_p), lambda t: (0, 0, 0), **inv),     # c0
            pl.BlockSpec((In_p, 4 * H_p), lambda t: (0, 0), **inv),      # W_ih^T
            pl.BlockSpec((H_p, 4 * H_p), lambda t: (0, 0), **inv),       # W_hh^T
            pl.BlockSpec((1, 4 * H_p), lambda t: (0, 0), **inv),         # bias
        ],
        out_specs=[
            pl.BlockSpec((TT * B_p, H_p), lambda t: (t, 0)),             # outputs
            pl.BlockSpec((1, B_p, H_p), lambda t: (0, 0, 0)),            # h_n
            pl.BlockSpec((1, B_p, H_p), lambda t: (0, 0, 0)),            # c_n
        ],
        scratch_shapes=[
            pltpu.VMEM((TT * B_p, 4 * H_p), jnp.float32),   # staged x-projection
            pltpu.VMEM((B_p, H_p), jnp.float32),            # recurrent h
            pltpu.VMEM((B_p, H_p), jnp.float32),            # recurrent c
        ],
    )

    # ---- explicit VMEM budget, capped by the per-generation capacity ----
    w_isz = jnp.dtype(mxu_dtype).itemsize
    wbuf = 1 if single_buffer else 2
    weights_b = wbuf * ((In_p + H_p) * 4 * H_p * w_isz + 4 * H_p * 4)
    stream_b = 2 * (TT * B_p * In_p * w_isz + TT * B_p * H_p * 4)
    state_b = (wbuf * 2 + 4) * B_p * H_p * 4
    scratch_b = (TT * B_p * 4 * H_p + 2 * B_p * H_p) * 4
    est = weights_b + stream_b + state_b + scratch_b
    vmem_limit = int(min(0.8 * _vmem_capacity_bytes(),
                         max(4 * est, 32 * 1024 * 1024)))

    kernel = functools.partial(_lstm_kernel, seq_len=T, block_steps=TT,
                               batch_rows=B_p)

    out_flat, hN, cN = pl.pallas_call(
        kernel,
        out_shape=(
            jax.ShapeDtypeStruct((T_pad * B_p, H_p), jnp.float32),
            jax.ShapeDtypeStruct((1, B_p, H_p), jnp.float32),
            jax.ShapeDtypeStruct((1, B_p, H_p), jnp.float32),
        ),
        grid_spec=grid_spec,
        compiler_params=pltpu.CompilerParams(
            # Single sequential time axis; no batch-shard axis on 1-TC chips.
            # TODO(synk): on v7x, add a leading CORE_PARALLEL batch axis (=2).
            dimension_semantics=("arbitrary",),
            vmem_limit_bytes=vmem_limit),
    )(x_flat, h0_p, c0_p, wih_t, whh_t, bias_row)

    outputs = out_flat.reshape(T_pad, B_p, H_p)[:T, :B, :H]
    h_n = hN[:, :B, :H]
    c_n = cN[:, :B, :H]
    return outputs, (h_n, c_n)


def manual_lstm_pallas(x, h0, c0, weight_ih, weight_hh, bias_ih, bias_hh, *,
                       mxu_dtype=jnp.bfloat16, params=None):
    """x: [T, B, In]; h0/c0: [1, B, H]; weight_ih: [4H, In]; weight_hh: [4H, H].

    mxu_dtype=bf16 (default) feeds the MXU bf16 operands (recommended on
    v6e/v7x; state and nonlinearities stay f32).  mxu_dtype=float32 keeps f32
    matmuls.  For repeated calls, pass params=prepare_lstm_params(...) once.
    """
    if params is None:
        params = prepare_lstm_params(weight_ih, weight_hh, bias_ih, bias_hh,
                                     mxu_dtype=mxu_dtype)
    wih_t, whh_t, bias_row = params
    return _manual_lstm_impl(x, h0, c0, wih_t, whh_t, bias_row,
                             hidden_size=int(weight_hh.shape[1]),
                             single_buffer=_supports_single_buffering())


def manual_lstm_ref(x, h0, c0, weight_ih, weight_hh, bias_ih, bias_hh):
    """Pure-JAX reference mirroring the PyTorch forward exactly."""
    H = weight_hh.shape[1]

    def step(carry, x_t):
        h_prev, c_prev = carry
        gates = x_t @ weight_ih.T + bias_ih + h_prev @ weight_hh.T + bias_hh
        i = jax.nn.sigmoid(gates[:, 0 * H:1 * H])
        f = jax.nn.sigmoid(gates[:, 1 * H:2 * H])
        g = jnp.tanh(gates[:, 2 * H:3 * H])
        o = jax.nn.sigmoid(gates[:, 3 * H:4 * H])
        c = f * c_prev + i * g
        h = o * jnp.tanh(c)
        return (h, c), h

    (h_n, c_n), outs = jax.lax.scan(step, (h0[0], c0[0]), x)
    return outs, (h_n[None], c_n[None])


if __name__ == "__main__":
    # Deliberately unaligned shapes: T=37 exercises time padding + tail masking
    # and a multi-block (nt=3) state carry; B=4 / In=20 / H=48 exercise padding.
    seq_len, batch, input_size, hidden_size = 37, 4, 20, 48

    key = jax.random.PRNGKey(0)
    k_x, k_wih, k_whh = jax.random.split(key, 3)

    # Parameter init matching the module's __init__: randn * 0.01, zero biases.
    weight_ih = jax.random.normal(k_wih, (4 * hidden_size, input_size),
                                  dtype=jnp.float32) * 0.01
    weight_hh = jax.random.normal(k_whh, (4 * hidden_size, hidden_size),
                                  dtype=jnp.float32) * 0.01
    bias_ih = jnp.zeros((4 * hidden_size,), dtype=jnp.float32)
    bias_hh = jnp.zeros((4 * hidden_size,), dtype=jnp.float32)

    x = jax.random.normal(k_x, (seq_len, batch, input_size), dtype=jnp.float32)
    h0 = jnp.zeros((1, batch, hidden_size), dtype=jnp.float32)
    c0 = jnp.zeros((1, batch, hidden_size), dtype=jnp.float32)

    ref_out, (ref_h, ref_c) = manual_lstm_ref(
        x, h0, c0, weight_ih, weight_hh, bias_ih, bias_hh)

    # f32 MXU operands: tight check against the f32 reference.
    out32, (h32, c32) = manual_lstm_pallas(
        x, h0, c0, weight_ih, weight_hh, bias_ih, bias_hh,
        mxu_dtype=jnp.float32)
    jax.block_until_ready((out32, h32, c32))
    np.testing.assert_allclose(np.asarray(out32), np.asarray(ref_out),
                               rtol=2e-5, atol=2e-5)
    np.testing.assert_allclose(np.asarray(h32), np.asarray(ref_h),
                               rtol=2e-5, atol=2e-5)
    np.testing.assert_allclose(np.asarray(c32), np.asarray(ref_c),
                               rtol=2e-5, atol=2e-5)

    # bf16 MXU operands (default; recommended on v6e/v7x): looser tolerance.
    out16, (h16, c16) = manual_lstm_pallas(
        x, h0, c0, weight_ih, weight_hh, bias_ih, bias_hh,
        mxu_dtype=jnp.bfloat16)
    jax.block_until_ready((out16, h16, c16))
    np.testing.assert_allclose(np.asarray(out16), np.asarray(ref_out),
                               rtol=5e-2, atol=5e-3)
    np.testing.assert_allclose(np.asarray(h16), np.asarray(ref_h),
                               rtol=5e-2, atol=5e-3)
    np.testing.assert_allclose(np.asarray(c16), np.asarray(ref_c),
                               rtol=5e-2, atol=5e-3)

    print("KERNEL_OK")
</pallas_src>

<mosaic_0001>
module attributes {stable_mosaic.version = 11 : i64} {
  func.func @_lstm_kernel(%arg0: i32, %arg1: memref<128x24xf32, #tpu.memory_space<vmem>>, %arg2: memref<1x8x128xf32, #tpu.memory_space<vmem>>, %arg3: memref<1x8x128xf32, #tpu.memory_space<vmem>>, %arg4: memref<24x512xf32, #tpu.memory_space<vmem>>, %arg5: memref<128x512xf32, #tpu.memory_space<vmem>>, %arg6: memref<1x512xf32, #tpu.memory_space<vmem>>, %arg7: memref<128x128xf32, #tpu.memory_space<vmem>>, %arg8: memref<1x8x128xf32, #tpu.memory_space<vmem>>, %arg9: memref<1x8x128xf32, #tpu.memory_space<vmem>>, %arg10: memref<128x512xf32, #tpu.memory_space<vmem>>, %arg11: memref<8x128xf32, #tpu.memory_space<vmem>>, %arg12: memref<8x128xf32, #tpu.memory_space<vmem>>) attributes {dimension_semantics = [#tpu.dimension_semantics<arbitrary>], iteration_bounds = array<i64: 3>, scalar_prefetch = 0 : i64, scratch_operands = 3 : i64, tpu.core_type = #tpu.core_type<tc>, window_params = [{transform_indices = @transform_0, window_bounds = array<i64: 128, 24>}, {pipeline_mode = #tpu.pipeline_mode<synchronous>, transform_indices = @transform_1, window_bounds = array<i64: 1, 8, 128>}, {pipeline_mode = #tpu.pipeline_mode<synchronous>, transform_indices = @transform_2, window_bounds = array<i64: 1, 8, 128>}, {pipeline_mode = #tpu.pipeline_mode<synchronous>, transform_indices = @transform_3, window_bounds = array<i64: 24, 512>}, {pipeline_mode = #tpu.pipeline_mode<synchronous>, transform_indices = @transform_4, window_bounds = array<i64: 128, 512>}, {pipeline_mode = #tpu.pipeline_mode<synchronous>, transform_indices = @transform_5, window_bounds = array<i64: 1, 512>}, {transform_indices = @transform_6, window_bounds = array<i64: 128, 128>}, {pipeline_mode = #tpu.pipeline_mode<synchronous>, transform_indices = @transform_7, window_bounds = array<i64: 1, 8, 128>}, {pipeline_mode = #tpu.pipeline_mode<synchronous>, transform_indices = @transform_8, window_bounds = array<i64: 1, 8, 128>}]} {
    %c0_i32 = arith.constant 0 : i32
    %0 = arith.cmpi eq, %arg0, %c0_i32 : i32
    %1 = arith.extui %0 : i1 to i32
    %c0_i32_0 = arith.constant 0 : i32
    %2 = arith.cmpi ne, %1, %c0_i32_0 : i32
    scf.if %2 {
      %c0_194 = arith.constant 0 : index
      %c0_195 = arith.constant 0 : index
      %c0_196 = arith.constant 0 : index
      %641 = vector.load %arg2[%c0_194, %c0_195, %c0_196] : memref<1x8x128xf32, #tpu.memory_space<vmem>>, vector<1x8x128xf32>
      %642 = vector.shape_cast %641 : vector<1x8x128xf32> to vector<8x128xf32>
      %c0_197 = arith.constant 0 : index
      %c0_198 = arith.constant 0 : index
      %643 = vector.load %arg11[%c0_197, %c0_198] : memref<8x128xf32, #tpu.memory_space<vmem>>, vector<8x128xf32>
      tpu.vector_store %arg11[%c0_197, %c0_198], %642 {strides = array<i32>} : memref<8x128xf32, #tpu.memory_space<vmem>>, vector<8x128xf32>,
      %c0_199 = arith.constant 0 : index
      %c0_200 = arith.constant 0 : index
      %c0_201 = arith.constant 0 : index
      %644 = vector.load %arg3[%c0_199, %c0_200, %c0_201] : memref<1x8x128xf32, #tpu.memory_space<vmem>>, vector<1x8x128xf32>
      %645 = vector.shape_cast %644 : vector<1x8x128xf32> to vector<8x128xf32>
      %c0_202 = arith.constant 0 : index
      %c0_203 = arith.constant 0 : index
      %646 = vector.load %arg12[%c0_202, %c0_203] : memref<8x128xf32, #tpu.memory_space<vmem>>, vector<8x128xf32>
      tpu.vector_store %arg12[%c0_202, %c0_203], %645 {strides = array<i32>} : memref<8x128xf32, #tpu.memory_space<vmem>>, vector<8x128xf32>,
    } else {
    }
    %c0 = arith.constant 0 : index
    %c0_1 = arith.constant 0 : index
    %3 = vector.load %arg1[%c0, %c0_1] : memref<128x24xf32, #tpu.memory_space<vmem>>, vector<128x24xf32>
    %c0_2 = arith.constant 0 : index
    %c0_3 = arith.constant 0 : index
    %4 = vector.load %arg4[%c0_2, %c0_3] : memref<24x512xf32, #tpu.memory_space<vmem>>, vector<24x512xf32>
    %cst = arith.constant dense<0.000000e+00> : vector<128x512xf32>
    %5 = tpu.matmul %3, %4, %cst {dimension_numbers = #tpu.dot_dimension_numbers<[1], [0], [0], [1], [0, 0, 1, 1], [], []>} : vector<128x24xf32>, vector<24x512xf32>, vector<128x512xf32> -> vector<128x512xf32>
    %c0_4 = arith.constant 0 : index
    %c0_5 = arith.constant 0 : index
    %6 = vector.load %arg6[%c0_4, %c0_5] : memref<1x512xf32, #tpu.memory_space<vmem>>, vector<1x512xf32>
    %7 = vector.broadcast %6 : vector<1x512xf32> to vector<128x512xf32>
    %8 = arith.addf %5, %7 : vector<128x512xf32>
    %c0_6 = arith.constant 0 : index
    %c0_7 = arith.constant 0 : index
    %9 = vector.load %arg10[%c0_6, %c0_7] : memref<128x512xf32, #tpu.memory_space<vmem>>, vector<128x512xf32>
    tpu.vector_store %arg10[%c0_6, %c0_7], %8 {strides = array<i32>} : memref<128x512xf32, #tpu.memory_space<vmem>>, vector<128x512xf32>,
    %c0_8 = arith.constant 0 : index
    %c0_9 = arith.constant 0 : index
    %10 = vector.load %arg11[%c0_8, %c0_9] : memref<8x128xf32, #tpu.memory_space<vmem>>, vector<8x128xf32>
    %c0_10 = arith.constant 0 : index
    %c0_11 = arith.constant 0 : index
    %11 = vector.load %arg12[%c0_10, %c0_11] : memref<8x128xf32, #tpu.memory_space<vmem>>, vector<8x128xf32>
    %c0_i32_12 = arith.constant 0 : i32
    %c8_i32 = arith.constant 8 : i32
    %12 = arith.muli %c0_i32_12, %c8_i32 : i32
    %13 = tpu.assume_multiple %12, 8 : i32
    %14 = arith.index_cast %13 : i32 to index
    %c0_13 = arith.constant 0 : index
    %15 = vector.load %arg10[%14, %c0_13] : memref<128x512xf32, #tpu.memory_space<vmem>>, vector<8x512xf32>
    %c0_14 = arith.constant 0 : index
    %c0_15 = arith.constant 0 : index
    %16 = vector.load %arg5[%c0_14, %c0_15] : memref<128x512xf32, #tpu.memory_space<vmem>>, vector<128x512xf32>
    %cst_16 = arith.constant dense<0.000000e+00> : vector<8x512xf32>
    %17 = tpu.matmul %10, %16, %cst_16 {dimension_numbers = #tpu.dot_dimension_numbers<[1], [0], [0], [1], [0, 0, 1, 1], [], []>} : vector<8x128xf32>, vector<128x512xf32>, vector<8x512xf32> -> vector<8x512xf32>
    %18 = arith.addf %15, %17 : vector<8x512xf32>
    %19 = vector.extract_strided_slice %18 {offsets = [0, 0], sizes = [8, 128], strides = [1, 1]} : vector<8x512xf32> to vector<8x128xf32>
    %20 = arith.negf %19 : vector<8x128xf32>
    %21 = math.exp %20 : vector<8x128xf32>
    %cst_17 = arith.constant 1.000000e+00 : f32
    %22 = vector.broadcast %cst_17 : f32 to vector<8x128xf32>
    %23 = arith.addf %22, %21 : vector<8x128xf32>
    %24 = arith.divf %22, %23 : vector<8x128xf32>
    %25 = vector.extract_strided_slice %18 {offsets = [0, 128], sizes = [8, 128], strides = [1, 1]} : vector<8x512xf32> to vector<8x128xf32>
    %26 = arith.negf %25 : vector<8x128xf32>
    %27 = math.exp %26 : vector<8x128xf32>
    %cst_18 = arith.constant 1.000000e+00 : f32
    %28 = vector.broadcast %cst_18 : f32 to vector<8x128xf32>
    %29 = arith.addf %28, %27 : vector<8x128xf32>
    %30 = arith.divf %28, %29 : vector<8x128xf32>
    %31 = vector.extract_strided_slice %18 {offsets = [0, 256], sizes = [8, 128], strides = [1, 1]} : vector<8x512xf32> to vector<8x128xf32>
    %32 = math.tanh %31 : vector<8x128xf32>
    %33 = vector.extract_strided_slice %18 {offsets = [0, 384], sizes = [8, 128], strides = [1, 1]} : vector<8x512xf32> to vector<8x128xf32>
    %34 = arith.negf %33 : vector<8x128xf32>
    %35 = math.exp %34 : vector<8x128xf32>
    %cst_19 = arith.constant 1.000000e+00 : f32
    %36 = vector.broadcast %cst_19 : f32 to vector<8x128xf32>
    %37 = arith.addf %36, %35 : vector<8x128xf32>
    %38 = arith.divf %36, %37 : vector<8x128xf32>
    %39 = arith.mulf %30, %11 : vector<8x128xf32>
    %40 = arith.mulf %24, %32 : vector<8x128xf32>
    %41 = arith.addf %39, %40 : vector<8x128xf32>
    %42 = math.tanh %41 : vector<8x128xf32>
    %43 = arith.mulf %38, %42 : vector<8x128xf32>
    %44 = arith.index_cast %13 : i32 to index
    %c0_20 = arith.constant 0 : index
    %45 = vector.load %arg7[%44, %c0_20] : memref<128x128xf32, #tpu.memory_space<vmem>>, vector<8x128xf32>
    tpu.vector_store %arg7[%44, %c0_20], %43 {strides = array<i32>} : memref<128x128xf32, #tpu.memory_space<vmem>>, vector<8x128xf32>,
    %c16_i32 = arith.constant 16 : i32
    %46 = arith.muli %arg0, %c16_i32 : i32
    %47 = arith.addi %46, %c0_i32_12 : i32
    %c37_i32 = arith.constant 37 : i32
    %48 = arith.cmpi slt, %47, %c37_i32 : i32
    %49 = arith.select %48, %43, %10 : vector<8x128xf32>
    %50 = arith.select %48, %41, %11 : vector<8x128xf32>
    %c1_i32 = arith.constant 1 : i32
    %c8_i32_21 = arith.constant 8 : i32
    %51 = arith.muli %c1_i32, %c8_i32_21 : i32
    %52 = tpu.assume_multiple %51, 8 : i32
    %53 = arith.index_cast %52 : i32 to index
    %c0_22 = arith.constant 0 : index
    %54 = vector.load %arg10[%53, %c0_22] : memref<128x512xf32, #tpu.memory_space<vmem>>, vector<8x512xf32>
    %c0_23 = arith.constant 0 : index
    %c0_24 = arith.constant 0 : index
    %55 = vector.load %arg5[%c0_23, %c0_24] : memref<128x512xf32, #tpu.memory_space<vmem>>, vector<128x512xf32>
    %cst_25 = arith.constant dense<0.000000e+00> : vector<8x512xf32>
    %56 = tpu.matmul %49, %55, %cst_25 {dimension_numbers = #tpu.dot_dimension_numbers<[1], [0], [0], [1], [0, 0, 1, 1], [], []>} : vector<8x128xf32>, vector<128x512xf32>, vector<8x512xf32> -> vector<8x512xf32>
    %57 = arith.addf %54, %56 : vector<8x512xf32>
    %58 = vector.extract_strided_slice %57 {offsets = [0, 0], sizes = [8, 128], strides = [1, 1]} : vector<8x512xf32> to vector<8x128xf32>
    %59 = arith.negf %58 : vector<8x128xf32>
    %60 = math.exp %59 : vector<8x128xf32>
    %cst_26 = arith.constant 1.000000e+00 : f32
    %61 = vector.broadcast %cst_26 : f32 to vector<8x128xf32>
    %62 = arith.addf %61, %60 : vector<8x128xf32>
    %63 = arith.divf %61, %62 : vector<8x128xf32>
    %64 = vector.extract_strided_slice %57 {offsets = [0, 128], sizes = [8, 128], strides = [1, 1]} : vector<8x512xf32> to vector<8x128xf32>
    %65 = arith.negf %64 : vector<8x128xf32>
    %66 = math.exp %65 : vector<8x128xf32>
    %cst_27 = arith.constant 1.000000e+00 : f32
    %67 = vector.broadcast %cst_27 : f32 to vector<8x128xf32>
    %68 = arith.addf %67, %66 : vector<8x128xf32>
    %69 = arith.divf %67, %68 : vector<8x128xf32>
    %70 = vector.extract_strided_slice %57 {offsets = [0, 256], sizes = [8, 128], strides = [1, 1]} : vector<8x512xf32> to vector<8x128xf32>
    %71 = math.tanh %70 : vector<8x128xf32>
    %72 = vector.extract_strided_slice %57 {offsets = [0, 384], sizes = [8, 128], strides = [1, 1]} : vector<8x512xf32> to vector<8x128xf32>
    %73 = arith.negf %72 : vector<8x128xf32>
    %74 = math.exp %73 : vector<8x128xf32>
    %cst_28 = arith.constant 1.000000e+00 : f32
    %75 = vector.broadcast %cst_28 : f32 to vector<8x128xf32>
    %76 = arith.addf %75, %74 : vector<8x128xf32>
    %77 = arith.divf %75, %76 : vector<8x128xf32>
    %78 = arith.mulf %69, %50 : vector<8x128xf32>
    %79 = arith.mulf %63, %71 : vector<8x128xf32>
    %80 = arith.addf %78, %79 : vector<8x128xf32>
    %81 = math.tanh %80 : vector<8x128xf32>
    %82 = arith.mulf %77, %81 : vector<8x128xf32>
    %83 = arith.index_cast %52 : i32 to index
    %c0_29 = arith.constant 0 : index
    %84 = vector.load %arg7[%83, %c0_29] : memref<128x128xf32, #tpu.memory_space<vmem>>, vector<8x128xf32>
    tpu.vector_store %arg7[%83, %c0_29], %82 {strides = array<i32>} : memref<128x128xf32, #tpu.memory_space<vmem>>, vector<8x128xf32>,
    %c16_i32_30 = arith.constant 16 : i32
    %85 = arith.muli %arg0, %c16_i32_30 : i32
    %86 = arith.addi %85, %c1_i32 : i32
    %c37_i32_31 = arith.constant 37 : i32
    %87 = arith.cmpi slt, %86, %c37_i32_31 : i32
    %88 = arith.select %87, %82, %49 : vector<8x128xf32>
    %89 = arith.select %87, %80, %50 : vector<8x128xf32>
    %c2_i32 = arith.constant 2 : i32
    %c8_i32_32 = arith.constant 8 : i32
    %90 = arith.muli %c2_i32, %c8_i32_32 : i32
    %91 = tpu.assume_multiple %90, 8 : i32
    %92 = arith.index_cast %91 : i32 to index
    %c0_33 = arith.constant 0 : index
    %93 = vector.load %arg10[%92, %c0_33] : memref<128x512xf32, #tpu.memory_space<vmem>>, vector<8x512xf32>
    %c0_34 = arith.constant 0 : index
    %c0_35 = arith.constant 0 : index
    %94 = vector.load %arg5[%c0_34, %c0_35] : memref<128x512xf32, #tpu.memory_space<vmem>>, vector<128x512xf32>
    %cst_36 = arith.constant dense<0.000000e+00> : vector<8x512xf32>
    %95 = tpu.matmul %88, %94, %cst_36 {dimension_numbers = #tpu.dot_dimension_numbers<[1], [0], [0], [1], [0, 0, 1, 1], [], []>} : vector<8x128xf32>, vector<128x512xf32>, vector<8x512xf32> -> vector<8x512xf32>
    %96 = arith.addf %93, %95 : vector<8x512xf32>
    %97 = vector.extract_strided_slice %96 {offsets = [0, 0], sizes = [8, 128], strides = [1, 1]} : vector<8x512xf32> to vector<8x128xf32>
    %98 = arith.negf %97 : vector<8x128xf32>
    %99 = math.exp %98 : vector<8x128xf32>
    %cst_37 = arith.constant 1.000000e+00 : f32
    %100 = vector.broadcast %cst_37 : f32 to vector<8x128xf32>
    %101 = arith.addf %100, %99 : vector<8x128xf32>
    %102 = arith.divf %100, %101 : vector<8x128xf32>
    %103 = vector.extract_strided_slice %96 {offsets = [0, 128], sizes = [8, 128], strides = [1, 1]} : vector<8x512xf32> to vector<8x128xf32>
    %104 = arith.negf %103 : vector<8x128xf32>
    %105 = math.exp %104 : vector<8x128xf32>
    %cst_38 = arith.constant 1.000000e+00 : f32
    %106 = vector.broadcast %cst_38 : f32 to vector<8x128xf32>
    %107 = arith.addf %106, %105 : vector<8x128xf32>
    %108 = arith.divf %106, %107 : vector<8x128xf32>
    %109 = vector.extract_strided_slice %96 {offsets = [0, 256], sizes = [8, 128], strides = [1, 1]} : vector<8x512xf32> to vector<8x128xf32>
    %110 = math.tanh %109 : vector<8x128xf32>
    %111 = vector.extract_strided_slice %96 {offsets = [0, 384], sizes = [8, 128], strides = [1, 1]} : vector<8x512xf32> to vector<8x128xf32>
    %112 = arith.negf %111 : vector<8x128xf32>
    %113 = math.exp %112 : vector<8x128xf32>
    %cst_39 = arith.constant 1.000000e+00 : f32
    %114 = vector.broadcast %cst_39 : f32 to vector<8x128xf32>
    %115 = arith.addf %114, %113 : vector<8x128xf32>
    %116 = arith.divf %114, %115 : vector<8x128xf32>
    %117 = arith.mulf %108, %89 : vector<8x128xf32>
    %118 = arith.mulf %102, %110 : vector<8x128xf32>
    %119 = arith.addf %117, %118 : vector<8x128xf32>
    %120 = math.tanh %119 : vector<8x128xf32>
    %121 = arith.mulf %116, %120 : vector<8x128xf32>
    %122 = arith.index_cast %91 : i32 to index
    %c0_40 = arith.constant 0 : index
    %123 = vector.load %arg7[%122, %c0_40] : memref<128x128xf32, #tpu.memory_space<vmem>>, vector<8x128xf32>
    tpu.vector_store %arg7[%122, %c0_40], %121 {strides = array<i32>} : memref<128x128xf32, #tpu.memory_space<vmem>>, vector<8x128xf32>,
    %c16_i32_41 = arith.constant 16 : i32
    %124 = arith.muli %arg0, %c16_i32_41 : i32
    %125 = arith.addi %124, %c2_i32 : i32
    %c37_i32_42 = arith.constant 37 : i32
    %126 = arith.cmpi slt, %125, %c37_i32_42 : i32
    %127 = arith.select %126, %121, %88 : vector<8x128xf32>
    %128 = arith.select %126, %119, %89 : vector<8x128xf32>
    %c3_i32 = arith.constant 3 : i32
    %c8_i32_43 = arith.constant 8 : i32
    %129 = arith.muli %c3_i32, %c8_i32_43 : i32
    %130 = tpu.assume_multiple %129, 8 : i32
    %131 = arith.index_cast %130 : i32 to index
    %c0_44 = arith.constant 0 : index
    %132 = vector.load %arg10[%131, %c0_44] : memref<128x512xf32, #tpu.memory_space<vmem>>, vector<8x512xf32>
    %c0_45 = arith.constant 0 : index
    %c0_46 = arith.constant 0 : index
    %133 = vector.load %arg5[%c0_45, %c0_46] : memref<128x512xf32, #tpu.memory_space<vmem>>, vector<128x512xf32>
    %cst_47 = arith.constant dense<0.000000e+00> : vector<8x512xf32>
    %134 = tpu.matmul %127, %133, %cst_47 {dimension_numbers = #tpu.dot_dimension_numbers<[1], [0], [0], [1], [0, 0, 1, 1], [], []>} : vector<8x128xf32>, vector<128x512xf32>, vector<8x512xf32> -> vector<8x512xf32>
    %135 = arith.addf %132, %134 : vector<8x512xf32>
    %136 = vector.extract_strided_slice %135 {offsets = [0, 0], sizes = [8, 128], strides = [1, 1]} : vector<8x512xf32> to vector<8x128xf32>
    %137 = arith.negf %136 : vector<8x128xf32>
    %138 = math.exp %137 : vector<8x128xf32>
    %cst_48 = arith.constant 1.000000e+00 : f32
    %139 = vector.broadcast %cst_48 : f32 to vector<8x128xf32>
    %140 = arith.addf %139, %138 : vector<8x128xf32>
    %141 = arith.divf %139, %140 : vector<8x128xf32>
    %142 = vector.extract_strided_slice %135 {offsets = [0, 128], sizes = [8, 128], strides = [1, 1]} : vector<8x512xf32> to vector<8x128xf32>
    %143 = arith.negf %142 : vector<8x128xf32>
    %144 = math.exp %143 : vector<8x128xf32>
    %cst_49 = arith.constant 1.000000e+00 : f32
    %145 = vector.broadcast %cst_49 : f32 to vector<8x128xf32>
    %146 = arith.addf %145, %144 : vector<8x128xf32>
    %147 = arith.divf %145, %146 : vector<8x128xf32>
    %148 = vector.extract_strided_slice %135 {offsets = [0, 256], sizes = [8, 128], strides = [1, 1]} : vector<8x512xf32> to vector<8x128xf32>
    %149 = math.tanh %148 : vector<8x128xf32>
    %150 = vector.extract_strided_slice %135 {offsets = [0, 384], sizes = [8, 128], strides = [1, 1]} : vector<8x512xf32> to vector<8x128xf32>
    %151 = arith.negf %150 : vector<8x128xf32>
    %152 = math.exp %151 : vector<8x128xf32>
    %cst_50 = arith.constant 1.000000e+00 : f32
    %153 = vector.broadcast %cst_50 : f32 to vector<8x128xf32>
    %154 = arith.addf %153, %152 : vector<8x128xf32>
    %155 = arith.divf %153, %154 : vector<8x128xf32>
    %156 = arith.mulf %147, %128 : vector<8x128xf32>
    %157 = arith.mulf %141, %149 : vector<8x128xf32>
    %158 = arith.addf %156, %157 : vector<8x128xf32>
    %159 = math.tanh %158 : vector<8x128xf32>
    %160 = arith.mulf %155, %159 : vector<8x128xf32>
    %161 = arith.index_cast %130 : i32 to index
    %c0_51 = arith.constant 0 : index
    %162 = vector.load %arg7[%161, %c0_51] : memref<128x128xf32, #tpu.memory_space<vmem>>, vector<8x128xf32>
    tpu.vector_store %arg7[%161, %c0_51], %160 {strides = array<i32>} : memref<128x128xf32, #tpu.memory_space<vmem>>, vector<8x128xf32>,
    %c16_i32_52 = arith.constant 16 : i32
    %163 = arith.muli %arg0, %c16_i32_52 : i32
    %164 = arith.addi %163, %c3_i32 : i32
    %c37_i32_53 = arith.constant 37 : i32
    %165 = arith.cmpi slt, %164, %c37_i32_53 : i32
    %166 = arith.select %165, %160, %127 : vector<8x128xf32>
    %167 = arith.select %165, %158, %128 : vector<8x128xf32>
    %c4_i32 = arith.constant 4 : i32
    %c8_i32_54 = arith.constant 8 : i32
    %168 = arith.muli %c4_i32, %c8_i32_54 : i32
    %169 = tpu.assume_multiple %168, 8 : i32
    %170 = arith.index_cast %169 : i32 to index
    %c0_55 = arith.constant 0 : index
    %171 = vector.load %arg10[%170, %c0_55] : memref<128x512xf32, #tpu.memory_space<vmem>>, vector<8x512xf32>
    %c0_56 = arith.constant 0 : index
    %c0_57 = arith.constant 0 : index
    %172 = vector.load %arg5[%c0_56, %c0_57] : memref<128x512xf32, #tpu.memory_space<vmem>>, vector<128x512xf32>
    %cst_58 = arith.constant dense<0.000000e+00> : vector<8x512xf32>
    %173 = tpu.matmul %166, %172, %cst_58 {dimension_numbers = #tpu.dot_dimension_numbers<[1], [0], [0], [1], [0, 0, 1, 1], [], []>} : vector<8x128xf32>, vector<128x512xf32>, vector<8x512xf32> -> vector<8x512xf32>
    %174 = arith.addf %171, %173 : vector<8x512xf32>
    %175 = vector.extract_strided_slice %174 {offsets = [0, 0], sizes = [8, 128], strides = [1, 1]} : vector<8x512xf32> to vector<8x128xf32>
    %176 = arith.negf %175 : vector<8x128xf32>
    %177 = math.exp %176 : vector<8x128xf32>
    %cst_59 = arith.constant 1.000000e+00 : f32
    %178 = vector.broadcast %cst_59 : f32 to vector<8x128xf32>
    %179 = arith.addf %178, %177 : vector<8x128xf32>
    %180 = arith.divf %178, %179 : vector<8x128xf32>
    %181 = vector.extract_strided_slice %174 {offsets = [0, 128], sizes = [8, 128], strides = [1, 1]} : vector<8x512xf32> to vector<8x128xf32>
    %182 = arith.negf %181 : vector<8x128xf32>
    %183 = math.exp %182 : vector<8x128xf32>
    %cst_60 = arith.constant 1.000000e+00 : f32
    %184 = vector.broadcast %cst_60 : f32 to vector<8x128xf32>
    %185 = arith.addf %184, %183 : vector<8x128xf32>
    %186 = arith.divf %184, %185 : vector<8x128xf32>
    %187 = vector.extract_strided_slice %174 {offsets = [0, 256], sizes = [8, 128], strides = [1, 1]} : vector<8x512xf32> to vector<8x128xf32>
    %188 = math.tanh %187 : vector<8x128xf32>
    %189 = vector.extract_strided_slice %174 {offsets = [0, 384], sizes = [8, 128], strides = [1, 1]} : vector<8x512xf32> to vector<8x128xf32>
    %190 = arith.negf %189 : vector<8x128xf32>
    %191 = math.exp %190 : vector<8x128xf32>
    %cst_61 = arith.constant 1.000000e+00 : f32
    %192 = vector.broadcast %cst_61 : f32 to vector<8x128xf32>
    %193 = arith.addf %192, %191 : vector<8x128xf32>
    %194 = arith.divf %192, %193 : vector<8x128xf32>
    %195 = arith.mulf %186, %167 : vector<8x128xf32>
    %196 = arith.mulf %180, %188 : vector<8x128xf32>
    %197 = arith.addf %195, %196 : vector<8x128xf32>
    %198 = math.tanh %197 : vector<8x128xf32>
    %199 = arith.mulf %194, %198 : vector<8x128xf32>
    %200 = arith.index_cast %169 : i32 to index
    %c0_62 = arith.constant 0 : index
    %201 = vector.load %arg7[%200, %c0_62] : memref<128x128xf32, #tpu.memory_space<vmem>>, vector<8x128xf32>
    tpu.vector_store %arg7[%200, %c0_62], %199 {strides = array<i32>} : memref<128x128xf32, #tpu.memory_space<vmem>>, vector<8x128xf32>,
    %c16_i32_63 = arith.constant 16 : i32
    %202 = arith.muli %arg0, %c16_i32_63 : i32
    %203 = arith.addi %202, %c4_i32 : i32
    %c37_i32_64 = arith.constant 37 : i32
    %204 = arith.cmpi slt, %203, %c37_i32_64 : i32
    %205 = arith.select %204, %199, %166 : vector<8x128xf32>
    %206 = arith.select %204, %197, %167 : vector<8x128xf32>
    %c5_i32 = arith.constant 5 : i32
    %c8_i32_65 = arith.constant 8 : i32
    %207 = arith.muli %c5_i32, %c8_i32_65 : i32
    %208 = tpu.assume_multiple %207, 8 : i32
    %209 = arith.index_cast %208 : i32 to index
    %c0_66 = arith.constant 0 : index
    %210 = vector.load %arg10[%209, %c0_66] : memref<128x512xf32, #tpu.memory_space<vmem>>, vector<8x512xf32>
    %c0_67 = arith.constant 0 : index
    %c0_68 = arith.constant 0 : index
    %211 = vector.load %arg5[%c0_67, %c0_68] : memref<128x512xf32, #tpu.memory_space<vmem>>, vector<128x512xf32>
    %cst_69 = arith.constant dense<0.000000e+00> : vector<8x512xf32>
    %212 = tpu.matmul %205, %211, %cst_69 {dimension_numbers = #tpu.dot_dimension_numbers<[1], [0], [0], [1], [0, 0, 1, 1], [], []>} : vector<8x128xf32>, vector<128x512xf32>, vector<8x512xf32> -> vector<8x512xf32>
    %213 = arith.addf %210, %212 : vector<8x512xf32>
    %214 = vector.extract_strided_slice %213 {offsets = [0, 0], sizes = [8, 128], strides = [1, 1]} : vector<8x512xf32> to vector<8x128xf32>
    %215 = arith.negf %214 : vector<8x128xf32>
    %216 = math.exp %215 : vector<8x128xf32>
    %cst_70 = arith.constant 1.000000e+00 : f32
    %217 = vector.broadcast %cst_70 : f32 to vector<8x128xf32>
    %218 = arith.addf %217, %216 : vector<8x128xf32>
    %219 = arith.divf %217, %218 : vector<8x128xf32>
    %220 = vector.extract_strided_slice %213 {offsets = [0, 128], sizes = [8, 128], strides = [1, 1]} : vector<8x512xf32> to vector<8x128xf32>
    %221 = arith.negf %220 : vector<8x128xf32>
    %222 = math.exp %221 : vector<8x128xf32>
    %cst_71 = arith.constant 1.000000e+00 : f32
    %223 = vector.broadcast %cst_71 : f32 to vector<8x128xf32>
    %224 = arith.addf %223, %222 : vector<8x128xf32>
    %225 = arith.divf %223, %224 : vector<8x128xf32>
    %226 = vector.extract_strided_slice %213 {offsets = [0, 256], sizes = [8, 128], strides = [1, 1]} : vector<8x512xf32> to vector<8x128xf32>
    %227 = math.tanh %226 : vector<8x128xf32>
    %228 = vector.extract_strided_slice %213 {offsets = [0, 384], sizes = [8, 128], strides = [1, 1]} : vector<8x512xf32> to vector<8x128xf32>
    %229 = arith.negf %228 : vector<8x128xf32>
    %230 = math.exp %229 : vector<8x128xf32>
    %cst_72 = arith.constant 1.000000e+00 : f32
    %231 = vector.broadcast %cst_72 : f32 to vector<8x128xf32>
    %232 = arith.addf %231, %230 : vector<8x128xf32>
    %233 = arith.divf %231, %232 : vector<8x128xf32>
    %234 = arith.mulf %225, %206 : vector<8x128xf32>
    %235 = arith.mulf %219, %227 : vector<8x128xf32>
    %236 = arith.addf %234, %235 : vector<8x128xf32>
    %237 = math.tanh %236 : vector<8x128xf32>
    %238 = arith.mulf %233, %237 : vector<8x128xf32>
    %239 = arith.index_cast %208 : i32 to index
    %c0_73 = arith.constant 0 : index
    %240 = vector.load %arg7[%239, %c0_73] : memref<128x128xf32, #tpu.memory_space<vmem>>, vector<8x128xf32>
    tpu.vector_store %arg7[%239, %c0_73], %238 {strides = array<i32>} : memref<128x128xf32, #tpu.memory_space<vmem>>, vector<8x128xf32>,
    %c16_i32_74 = arith.constant 16 : i32
    %241 = arith.muli %arg0, %c16_i32_74 : i32
    %242 = arith.addi %241, %c5_i32 : i32
    %c37_i32_75 = arith.constant 37 : i32
    %243 = arith.cmpi slt, %242, %c37_i32_75 : i32
    %244 = arith.select %243, %238, %205 : vector<8x128xf32>
    %245 = arith.select %243, %236, %206 : vector<8x128xf32>
    %c6_i32 = arith.constant 6 : i32
    %c8_i32_76 = arith.constant 8 : i32
    %246 = arith.muli %c6_i32, %c8_i32_76 : i32
    %247 = tpu.assume_multiple %246, 8 : i32
    %248 = arith.index_cast %247 : i32 to index
    %c0_77 = arith.constant 0 : index
    %249 = vector.load %arg10[%248, %c0_77] : memref<128x512xf32, #tpu.memory_space<vmem>>, vector<8x512xf32>
    %c0_78 = arith.constant 0 : index
    %c0_79 = arith.constant 0 : index
    %250 = vector.load %arg5[%c0_78, %c0_79] : memref<128x512xf32, #tpu.memory_space<vmem>>, vector<128x512xf32>
    %cst_80 = arith.constant dense<0.000000e+00> : vector<8x512xf32>
    %251 = tpu.matmul %244, %250, %cst_80 {dimension_numbers = #tpu.dot_dimension_numbers<[1], [0], [0], [1], [0, 0, 1, 1], [], []>} : vector<8x128xf32>, vector<128x512xf32>, vector<8x512xf32> -> vector<8x512xf32>
    %252 = arith.addf %249, %251 : vector<8x512xf32>
    %253 = vector.extract_strided_slice %252 {offsets = [0, 0], sizes = [8, 128], strides = [1, 1]} : vector<8x512xf32> to vector<8x128xf32>
    %254 = arith.negf %253 : vector<8x128xf32>
    %255 = math.exp %254 : vector<8x128xf32>
    %cst_81 = arith.constant 1.000000e+00 : f32
    %256 = vector.broadcast %cst_81 : f32 to vector<8x128xf32>
    %257 = arith.addf %256, %255 : vector<8x128xf32>
    %258 = arith.divf %256, %257 : vector<8x128xf32>
    %259 = vector.extract_strided_slice %252 {offsets = [0, 128], sizes = [8, 128], strides = [1, 1]} : vector<8x512xf32> to vector<8x128xf32>
    %260 = arith.negf %259 : vector<8x128xf32>
    %261 = math.exp %260 : vector<8x128xf32>
    %cst_82 = arith.constant 1.000000e+00 : f32
    %262 = vector.broadcast %cst_82 : f32 to vector<8x128xf32>
    %263 = arith.addf %262, %261 : vector<8x128xf32>
    %264 = arith.divf %262, %263 : vector<8x128xf32>
    %265 = vector.extract_strided_slice %252 {offsets = [0, 256], sizes = [8, 128], strides = [1, 1]} : vector<8x512xf32> to vector<8x128xf32>
    %266 = math.tanh %265 : vector<8x128xf32>
    %267 = vector.extract_strided_slice %252 {offsets = [0, 384], sizes = [8, 128], strides = [1, 1]} : vector<8x512xf32> to vector<8x128xf32>
    %268 = arith.negf %267 : vector<8x128xf32>
    %269 = math.exp %268 : vector<8x128xf32>
    %cst_83 = arith.constant 1.000000e+00 : f32
    %270 = vector.broadcast %cst_83 : f32 to vector<8x128xf32>
    %271 = arith.addf %270, %269 : vector<8x128xf32>
    %272 = arith.divf %270, %271 : vector<8x128xf32>
    %273 = arith.mulf %264, %245 : vector<8x128xf32>
    %274 = arith.mulf %258, %266 : vector<8x128xf32>
    %275 = arith.addf %273, %274 : vector<8x128xf32>
    %276 = math.tanh %275 : vector<8x128xf32>
    %277 = arith.mulf %272, %276 : vector<8x128xf32>
    %278 = arith.index_cast %247 : i32 to index
    %c0_84 = arith.constant 0 : index
    %279 = vector.load %arg7[%278, %c0_84] : memref<128x128xf32, #tpu.memory_space<vmem>>, vector<8x128xf32>
    tpu.vector_store %arg7[%278, %c0_84], %277 {strides = array<i32>} : memref<128x128xf32, #tpu.memory_space<vmem>>, vector<8x128xf32>,
    %c16_i32_85 = arith.constant 16 : i32
    %280 = arith.muli %arg0, %c16_i32_85 : i32
    %281 = arith.addi %280, %c6_i32 : i32
    %c37_i32_86 = arith.constant 37 : i32
    %282 = arith.cmpi slt, %281, %c37_i32_86 : i32
    %283 = arith.select %282, %277, %244 : vector<8x128xf32>
    %284 = arith.select %282, %275, %245 : vector<8x128xf32>
    %c7_i32 = arith.constant 7 : i32
    %c8_i32_87 = arith.constant 8 : i32
    %285 = arith.muli %c7_i32, %c8_i32_87 : i32
    %286 = tpu.assume_multiple %285, 8 : i32
    %287 = arith.index_cast %286 : i32 to index
    %c0_88 = arith.constant 0 : index
    %288 = vector.load %arg10[%287, %c0_88] : memref<128x512xf32, #tpu.memory_space<vmem>>, vector<8x512xf32>
    %c0_89 = arith.constant 0 : index
    %c0_90 = arith.constant 0 : index
    %289 = vector.load %arg5[%c0_89, %c0_90] : memref<128x512xf32, #tpu.memory_space<vmem>>, vector<128x512xf32>
    %cst_91 = arith.constant dense<0.000000e+00> : vector<8x512xf32>
    %290 = tpu.matmul %283, %289, %cst_91 {dimension_numbers = #tpu.dot_dimension_numbers<[1], [0], [0], [1], [0, 0, 1, 1], [], []>} : vector<8x128xf32>, vector<128x512xf32>, vector<8x512xf32> -> vector<8x512xf32>
    %291 = arith.addf %288, %290 : vector<8x512xf32>
    %292 = vector.extract_strided_slice %291 {offsets = [0, 0], sizes = [8, 128], strides = [1, 1]} : vector<8x512xf32> to vector<8x128xf32>
    %293 = arith.negf %292 : vector<8x128xf32>
    %294 = math.exp %293 : vector<8x128xf32>
    %cst_92 = arith.constant 1.000000e+00 : f32
    %295 = vector.broadcast %cst_92 : f32 to vector<8x128xf32>
    %296 = arith.addf %295, %294 : vector<8x128xf32>
    %297 = arith.divf %295, %296 : vector<8x128xf32>
    %298 = vector.extract_strided_slice %291 {offsets = [0, 128], sizes = [8, 128], strides = [1, 1]} : vector<8x512xf32> to vector<8x128xf32>
    %299 = arith.negf %298 : vector<8x128xf32>
    %300 = math.exp %299 : vector<8x128xf32>
    %cst_93 = arith.constant 1.000000e+00 : f32
    %301 = vector.broadcast %cst_93 : f32 to vector<8x128xf32>
    %302 = arith.addf %301, %300 : vector<8x128xf32>
    %303 = arith.divf %301, %302 : vector<8x128xf32>
    %304 = vector.extract_strided_slice %291 {offsets = [0, 256], sizes = [8, 128], strides = [1, 1]} : vector<8x512xf32> to vector<8x128xf32>
    %305 = math.tanh %304 : vector<8x128xf32>
    %306 = vector.extract_strided_slice %291 {offsets = [0, 384], sizes = [8, 128], strides = [1, 1]} : vector<8x512xf32> to vector<8x128xf32>
    %307 = arith.negf %306 : vector<8x128xf32>
    %308 = math.exp %307 : vector<8x128xf32>
    %cst_94 = arith.constant 1.000000e+00 : f32
    %309 = vector.broadcast %cst_94 : f32 to vector<8x128xf32>
    %310 = arith.addf %309, %308 : vector<8x128xf32>
    %311 = arith.divf %309, %310 : vector<8x128xf32>
    %312 = arith.mulf %303, %284 : vector<8x128xf32>
    %313 = arith.mulf %297, %305 : vector<8x128xf32>
    %314 = arith.addf %312, %313 : vector<8x128xf32>
    %315 = math.tanh %314 : vector<8x128xf32>
    %316 = arith.mulf %311, %315 : vector<8x128xf32>
    %317 = arith.index_cast %286 : i32 to index
    %c0_95 = arith.constant 0 : index
    %318 = vector.load %arg7[%317, %c0_95] : memref<128x128xf32, #tpu.memory_space<vmem>>, vector<8x128xf32>
    tpu.vector_store %arg7[%317, %c0_95], %316 {strides = array<i32>} : memref<128x128xf32, #tpu.memory_space<vmem>>, vector<8x128xf32>,
    %c16_i32_96 = arith.constant 16 : i32
    %319 = arith.muli %arg0, %c16_i32_96 : i32
    %320 = arith.addi %319, %c7_i32 : i32
    %c37_i32_97 = arith.constant 37 : i32
    %321 = arith.cmpi slt, %320, %c37_i32_97 : i32
    %322 = arith.select %321, %316, %283 : vector<8x128xf32>
    %323 = arith.select %321, %314, %284 : vector<8x128xf32>
    %c8_i32_98 = arith.constant 8 : i32
    %c8_i32_99 = arith.constant 8 : i32
    %324 = arith.muli %c8_i32_98, %c8_i32_99 : i32
    %325 = tpu.assume_multiple %324, 8 : i32
    %326 = arith.index_cast %325 : i32 to index
    %c0_100 = arith.constant 0 : index
    %327 = vector.load %arg10[%326, %c0_100] : memref<128x512xf32, #tpu.memory_space<vmem>>, vector<8x512xf32>
    %c0_101 = arith.constant 0 : index
    %c0_102 = arith.constant 0 : index
    %328 = vector.load %arg5[%c0_101, %c0_102] : memref<128x512xf32, #tpu.memory_space<vmem>>, vector<128x512xf32>
    %cst_103 = arith.constant dense<0.000000e+00> : vector<8x512xf32>
    %329 = tpu.matmul %322, %328, %cst_103 {dimension_numbers = #tpu.dot_dimension_numbers<[1], [0], [0], [1], [0, 0, 1, 1], [], []>} : vector<8x128xf32>, vector<128x512xf32>, vector<8x512xf32> -> vector<8x512xf32>
    %330 = arith.addf %327, %329 : vector<8x512xf32>
    %331 = vector.extract_strided_slice %330 {offsets = [0, 0], sizes = [8, 128], strides = [1, 1]} : vector<8x512xf32> to vector<8x128xf32>
    %332 = arith.negf %331 : vector<8x128xf32>
    %333 = math.exp %332 : vector<8x128xf32>
    %cst_104 = arith.constant 1.000000e+00 : f32
    %334 = vector.broadcast %cst_104 : f32 to vector<8x128xf32>
    %335 = arith.addf %334, %333 : vector<8x128xf32>
    %336 = arith.divf %334, %335 : vector<8x128xf32>
    %337 = vector.extract_strided_slice %330 {offsets = [0, 128], sizes = [8, 128], strides = [1, 1]} : vector<8x512xf32> to vector<8x128xf32>
    %338 = arith.negf %337 : vector<8x128xf32>
    %339 = math.exp %338 : vector<8x128xf32>
    %cst_105 = arith.constant 1.000000e+00 : f32
    %340 = vector.broadcast %cst_105 : f32 to vector<8x128xf32>
    %341 = arith.addf %340, %339 : vector<8x128xf32>
    %342 = arith.divf %340, %341 : vector<8x128xf32>
    %343 = vector.extract_strided_slice %330 {offsets = [0, 256], sizes = [8, 128], strides = [1, 1]} : vector<8x512xf32> to vector<8x128xf32>
    %344 = math.tanh %343 : vector<8x128xf32>
    %345 = vector.extract_strided_slice %330 {offsets = [0, 384], sizes = [8, 128], strides = [1, 1]} : vector<8x512xf32> to vector<8x128xf32>
    %346 = arith.negf %345 : vector<8x128xf32>
    %347 = math.exp %346 : vector<8x128xf32>
    %cst_106 = arith.constant 1.000000e+00 : f32
    %348 = vector.broadcast %cst_106 : f32 to vector<8x128xf32>
    %349 = arith.addf %348, %347 : vector<8x128xf32>
    %350 = arith.divf %348, %349 : vector<8x128xf32>
    %351 = arith.mulf %342, %323 : vector<8x128xf32>
    %352 = arith.mulf %336, %344 : vector<8x128xf32>
    %353 = arith.addf %351, %352 : vector<8x128xf32>
    %354 = math.tanh %353 : vector<8x128xf32>
    %355 = arith.mulf %350, %354 : vector<8x128xf32>
    %356 = arith.index_cast %325 : i32 to index
    %c0_107 = arith.constant 0 : index
    %357 = vector.load %arg7[%356, %c0_107] : memref<128x128xf32, #tpu.memory_space<vmem>>, vector<8x128xf32>
    tpu.vector_store %arg7[%356, %c0_107], %355 {strides = array<i32>} : memref<128x128xf32, #tpu.memory_space<vmem>>, vector<8x128xf32>,
    %c16_i32_108 = arith.constant 16 : i32
    %358 = arith.muli %arg0, %c16_i32_108 : i32
    %359 = arith.addi %358, %c8_i32_98 : i32
    %c37_i32_109 = arith.constant 37 : i32
    %360 = arith.cmpi slt, %359, %c37_i32_109 : i32
    %361 = arith.select %360, %355, %322 : vector<8x128xf32>
    %362 = arith.select %360, %353, %323 : vector<8x128xf32>
    %c9_i32 = arith.constant 9 : i32
    %c8_i32_110 = arith.constant 8 : i32
    %363 = arith.muli %c9_i32, %c8_i32_110 : i32
    %364 = tpu.assume_multiple %363, 8 : i32
    %365 = arith.index_cast %364 : i32 to index
    %c0_111 = arith.constant 0 : index
    %366 = vector.load %arg10[%365, %c0_111] : memref<128x512xf32, #tpu.memory_space<vmem>>, vector<8x512xf32>
    %c0_112 = arith.constant 0 : index
    %c0_113 = arith.constant 0 : index
    %367 = vector.load %arg5[%c0_112, %c0_113] : memref<128x512xf32, #tpu.memory_space<vmem>>, vector<128x512xf32>
    %cst_114 = arith.constant dense<0.000000e+00> : vector<8x512xf32>
    %368 = tpu.matmul %361, %367, %cst_114 {dimension_numbers = #tpu.dot_dimension_numbers<[1], [0], [0], [1], [0, 0, 1, 1], [], []>} : vector<8x128xf32>, vector<128x512xf32>, vector<8x512xf32> -> vector<8x512xf32>
    %369 = arith.addf %366, %368 : vector<8x512xf32>
    %370 = vector.extract_strided_slice %369 {offsets = [0, 0], sizes = [8, 128], strides = [1, 1]} : vector<8x512xf32> to vector<8x128xf32>
    %371 = arith.negf %370 : vector<8x128xf32>
    %372 = math.exp %371 : vector<8x128xf32>
    %cst_115 = arith.constant 1.000000e+00 : f32
    %373 = vector.broadcast %cst_115 : f32 to vector<8x128xf32>
    %374 = arith.addf %373, %372 : vector<8x128xf32>
    %375 = arith.divf %373, %374 : vector<8x128xf32>
    %376 = vector.extract_strided_slice %369 {offsets = [0, 128], sizes = [8, 128], strides = [1, 1]} : vector<8x512xf32> to vector<8x128xf32>
    %377 = arith.negf %376 : vector<8x128xf32>
    %378 = math.exp %377 : vector<8x128xf32>
    %cst_116 = arith.constant 1.000000e+00 : f32
    %379 = vector.broadcast %cst_116 : f32 to vector<8x128xf32>
    %380 = arith.addf %379, %378 : vector<8x128xf32>
    %381 = arith.divf %379, %380 : vector<8x128xf32>
    %382 = vector.extract_strided_slice %369 {offsets = [0, 256], sizes = [8, 128], strides = [1, 1]} : vector<8x512xf32> to vector<8x128xf32>
    %383 = math.tanh %382 : vector<8x128xf32>
    %384 = vector.extract_strided_slice %369 {offsets = [0, 384], sizes = [8, 128], strides = [1, 1]} : vector<8x512xf32> to vector<8x128xf32>
    %385 = arith.negf %384 : vector<8x128xf32>
    %386 = math.exp %385 : vector<8x128xf32>
    %cst_117 = arith.constant 1.000000e+00 : f32
    %387 = vector.broadcast %cst_117 : f32 to vector<8x128xf32>
    %388 = arith.addf %387, %386 : vector<8x128xf32>
    %389 = arith.divf %387, %388 : vector<8x128xf32>
    %390 = arith.mulf %381, %362 : vector<8x128xf32>
    %391 = arith.mulf %375, %383 : vector<8x128xf32>
    %392 = arith.addf %390, %391 : vector<8x128xf32>
    %393 = math.tanh %392 : vector<8x128xf32>
    %394 = arith.mulf %389, %393 : vector<8x128xf32>
    %395 = arith.index_cast %364 : i32 to index
    %c0_118 = arith.constant 0 : index
    %396 = vector.load %arg7[%395, %c0_118] : memref<128x128xf32, #tpu.memory_space<vmem>>, vector<8x128xf32>
    tpu.vector_store %arg7[%395, %c0_118], %394 {strides = array<i32>} : memref<128x128xf32, #tpu.memory_space<vmem>>, vector<8x128xf32>,
    %c16_i32_119 = arith.constant 16 : i32
    %397 = arith.muli %arg0, %c16_i32_119 : i32
    %398 = arith.addi %397, %c9_i32 : i32
    %c37_i32_120 = arith.constant 37 : i32
    %399 = arith.cmpi slt, %398, %c37_i32_120 : i32
    %400 = arith.select %399, %394, %361 : vector<8x128xf32>
    %401 = arith.select %399, %392, %362 : vector<8x128xf32>
    %c10_i32 = arith.constant 10 : i32
    %c8_i32_121 = arith.constant 8 : i32
    %402 = arith.muli %c10_i32, %c8_i32_121 : i32
    %403 = tpu.assume_multiple %402, 8 : i32
    %404 = arith.index_cast %403 : i32 to index
    %c0_122 = arith.constant 0 : index
    %405 = vector.load %arg10[%404, %c0_122] : memref<128x512xf32, #tpu.memory_space<vmem>>, vector<8x512xf32>
    %c0_123 = arith.constant 0 : index
    %c0_124 = arith.constant 0 : index
    %406 = vector.load %arg5[%c0_123, %c0_124] : memref<128x512xf32, #tpu.memory_space<vmem>>, vector<128x512xf32>
    %cst_125 = arith.constant dense<0.000000e+00> : vector<8x512xf32>
    %407 = tpu.matmul %400, %406, %cst_125 {dimension_numbers = #tpu.dot_dimension_numbers<[1], [0], [0], [1], [0, 0, 1, 1], [], []>} : vector<8x128xf32>, vector<128x512xf32>, vector<8x512xf32> -> vector<8x512xf32>
    %408 = arith.addf %405, %407 : vector<8x512xf32>
    %409 = vector.extract_strided_slice %408 {offsets = [0, 0], sizes = [8, 128], strides = [1, 1]} : vector<8x512xf32> to vector<8x128xf32>
    %410 = arith.negf %409 : vector<8x128xf32>
    %411 = math.exp %410 : vector<8x128xf32>
    %cst_126 = arith.constant 1.000000e+00 : f32
    %412 = vector.broadcast %cst_126 : f32 to vector<8x128xf32>
    %413 = arith.addf %412, %411 : vector<8x128xf32>
    %414 = arith.divf %412, %413 : vector<8x128xf32>
    %415 = vector.extract_strided_slice %408 {offsets = [0, 128], sizes = [8, 128], strides = [1, 1]} : vector<8x512xf32> to vector<8x128xf32>
    %416 = arith.negf %415 : vector<8x128xf32>
    %417 = math.exp %416 : vector<8x128xf32>
    %cst_127 = arith.constant 1.000000e+00 : f32
    %418 = vector.broadcast %cst_127 : f32 to vector<8x128xf32>
    %419 = arith.addf %418, %417 : vector<8x128xf32>
    %420 = arith.divf %418, %419 : vector<8x128xf32>
    %421 = vector.extract_strided_slice %408 {offsets = [0, 256], sizes = [8, 128], strides = [1, 1]} : vector<8x512xf32> to vector<8x128xf32>
    %422 = math.tanh %421 : vector<8x128xf32>
    %423 = vector.extract_strided_slice %408 {offsets = [0, 384], sizes = [8, 128], strides = [1, 1]} : vector<8x512xf32> to vector<8x128xf32>
    %424 = arith.negf %423 : vector<8x128xf32>
    %425 = math.exp %424 : vector<8x128xf32>
    %cst_128 = arith.constant 1.000000e+00 : f32
    %426 = vector.broadcast %cst_128 : f32 to vector<8x128xf32>
    %427 = arith.addf %426, %425 : vector<8x128xf32>
    %428 = arith.divf %426, %427 : vector<8x128xf32>
    %429 = arith.mulf %420, %401 : vector<8x128xf32>
    %430 = arith.mulf %414, %422 : vector<8x128xf32>
    %431 = arith.addf %429, %430 : vector<8x128xf32>
    %432 = math.tanh %431 : vector<8x128xf32>
    %433 = arith.mulf %428, %432 : vector<8x128xf32>
    %434 = arith.index_cast %403 : i32 to index
    %c0_129 = arith.constant 0 : index
    %435 = vector.load %arg7[%434, %c0_129] : memref<128x128xf32, #tpu.memory_space<vmem>>, vector<8x128xf32>
    tpu.vector_store %arg7[%434, %c0_129], %433 {strides = array<i32>} : memref<128x128xf32, #tpu.memory_space<vmem>>, vector<8x128xf32>,
    %c16_i32_130 = arith.constant 16 : i32
    %436 = arith.muli %arg0, %c16_i32_130 : i32
    %437 = arith.addi %436, %c10_i32 : i32
    %c37_i32_131 = arith.constant 37 : i32
    %438 = arith.cmpi slt, %437, %c37_i32_131 : i32
    %439 = arith.select %438, %433, %400 : vector<8x128xf32>
    %440 = arith.select %438, %431, %401 : vector<8x128xf32>
    %c11_i32 = arith.constant 11 : i32
    %c8_i32_132 = arith.constant 8 : i32
    %441 = arith.muli %c11_i32, %c8_i32_132 : i32
    %442 = tpu.assume_multiple %441, 8 : i32
    %443 = arith.index_cast %442 : i32 to index
    %c0_133 = arith.constant 0 : index
    %444 = vector.load %arg10[%443, %c0_133] : memref<128x512xf32, #tpu.memory_space<vmem>>, vector<8x512xf32>
    %c0_134 = arith.constant 0 : index
    %c0_135 = arith.constant 0 : index
    %445 = vector.load %arg5[%c0_134, %c0_135] : memref<128x512xf32, #tpu.memory_space<vmem>>, vector<128x512xf32>
    %cst_136 = arith.constant dense<0.000000e+00> : vector<8x512xf32>
    %446 = tpu.matmul %439, %445, %cst_136 {dimension_numbers = #tpu.dot_dimension_numbers<[1], [0], [0], [1], [0, 0, 1, 1], [], []>} : vector<8x128xf32>, vector<128x512xf32>, vector<8x512xf32> -> vector<8x512xf32>
    %447 = arith.addf %444, %446 : vector<8x512xf32>
    %448 = vector.extract_strided_slice %447 {offsets = [0, 0], sizes = [8, 128], strides = [1, 1]} : vector<8x512xf32> to vector<8x128xf32>
    %449 = arith.negf %448 : vector<8x128xf32>
    %450 = math.exp %449 : vector<8x128xf32>
    %cst_137 = arith.constant 1.000000e+00 : f32
    %451 = vector.broadcast %cst_137 : f32 to vector<8x128xf32>
    %452 = arith.addf %451, %450 : vector<8x128xf32>
    %453 = arith.divf %451, %452 : vector<8x128xf32>
    %454 = vector.extract_strided_slice %447 {offsets = [0, 128], sizes = [8, 128], strides = [1, 1]} : vector<8x512xf32> to vector<8x128xf32>
    %455 = arith.negf %454 : vector<8x128xf32>
    %456 = math.exp %455 : vector<8x128xf32>
    %cst_138 = arith.constant 1.000000e+00 : f32
    %457 = vector.broadcast %cst_138 : f32 to vector<8x128xf32>
    %458 = arith.addf %457, %456 : vector<8x128xf32>
    %459 = arith.divf %457, %458 : vector<8x128xf32>
    %460 = vector.extract_strided_slice %447 {offsets = [0, 256], sizes = [8, 128], strides = [1, 1]} : vector<8x512xf32> to vector<8x128xf32>
    %461 = math.tanh %460 : vector<8x128xf32>
    %462 = vector.extract_strided_slice %447 {offsets = [0, 384], sizes = [8, 128], strides = [1, 1]} : vector<8x512xf32> to vector<8x128xf32>
    %463 = arith.negf %462 : vector<8x128xf32>
    %464 = math.exp %463 : vector<8x128xf32>
    %cst_139 = arith.constant 1.000000e+00 : f32
    %465 = vector.broadcast %cst_139 : f32 to vector<8x128xf32>
    %466 = arith.addf %465, %464 : vector<8x128xf32>
    %467 = arith.divf %465, %466 : vector<8x128xf32>
    %468 = arith.mulf %459, %440 : vector<8x128xf32>
    %469 = arith.mulf %453, %461 : vector<8x128xf32>
    %470 = arith.addf %468, %469 : vector<8x128xf32>
    %471 = math.tanh %470 : vector<8x128xf32>
    %472 = arith.mulf %467, %471 : vector<8x128xf32>
    %473 = arith.index_cast %442 : i32 to index
    %c0_140 = arith.constant 0 : index
    %474 = vector.load %arg7[%473, %c0_140] : memref<128x128xf32, #tpu.memory_space<vmem>>, vector<8x128xf32>
    tpu.vector_store %arg7[%473, %c0_140], %472 {strides = array<i32>} : memref<128x128xf32, #tpu.memory_space<vmem>>, vector<8x128xf32>,
    %c16_i32_141 = arith.constant 16 : i32
    %475 = arith.muli %arg0, %c16_i32_141 : i32
    %476 = arith.addi %475, %c11_i32 : i32
    %c37_i32_142 = arith.constant 37 : i32
    %477 = arith.cmpi slt, %476, %c37_i32_142 : i32
    %478 = arith.select %477, %472, %439 : vector<8x128xf32>
    %479 = arith.select %477, %470, %440 : vector<8x128xf32>
    %c12_i32 = arith.constant 12 : i32
    %c8_i32_143 = arith.constant 8 : i32
    %480 = arith.muli %c12_i32, %c8_i32_143 : i32
    %481 = tpu.assume_multiple %480, 8 : i32
    %482 = arith.index_cast %481 : i32 to index
    %c0_144 = arith.constant 0 : index
    %483 = vector.load %arg10[%482, %c0_144] : memref<128x512xf32, #tpu.memory_space<vmem>>, vector<8x512xf32>
    %c0_145 = arith.constant 0 : index
    %c0_146 = arith.constant 0 : index
    %484 = vector.load %arg5[%c0_145, %c0_146] : memref<128x512xf32, #tpu.memory_space<vmem>>, vector<128x512xf32>
    %cst_147 = arith.constant dense<0.000000e+00> : vector<8x512xf32>
    %485 = tpu.matmul %478, %484, %cst_147 {dimension_numbers = #tpu.dot_dimension_numbers<[1], [0], [0], [1], [0, 0, 1, 1], [], []>} : vector<8x128xf32>, vector<128x512xf32>, vector<8x512xf32> -> vector<8x512xf32>
    %486 = arith.addf %483, %485 : vector<8x512xf32>
    %487 = vector.extract_strided_slice %486 {offsets = [0, 0], sizes = [8, 128], strides = [1, 1]} : vector<8x512xf32> to vector<8x128xf32>
    %488 = arith.negf %487 : vector<8x128xf32>
    %489 = math.exp %488 : vector<8x128xf32>
    %cst_148 = arith.constant 1.000000e+00 : f32
    %490 = vector.broadcast %cst_148 : f32 to vector<8x128xf32>
    %491 = arith.addf %490, %489 : vector<8x128xf32>
    %492 = arith.divf %490, %491 : vector<8x128xf32>
    %493 = vector.extract_strided_slice %486 {offsets = [0, 128], sizes = [8, 128], strides = [1, 1]} : vector<8x512xf32> to vector<8x128xf32>
    %494 = arith.negf %493 : vector<8x128xf32>
    %495 = math.exp %494 : vector<8x128xf32>
    %cst_149 = arith.constant 1.000000e+00 : f32
    %496 = vector.broadcast %cst_149 : f32 to vector<8x128xf32>
    %497 = arith.addf %496, %495 : vector<8x128xf32>
    %498 = arith.divf %496, %497 : vector<8x128xf32>
    %499 = vector.extract_strided_slice %486 {offsets = [0, 256], sizes = [8, 128], strides = [1, 1]} : vector<8x512xf32> to vector<8x128xf32>
    %500 = math.tanh %499 : vector<8x128xf32>
    %501 = vector.extract_strided_slice %486 {offsets = [0, 384], sizes = [8, 128], strides = [1, 1]} : vector<8x512xf32> to vector<8x128xf32>
    %502 = arith.negf %501 : vector<8x128xf32>
    %503 = math.exp %502 : vector<8x128xf32>
    %cst_150 = arith.constant 1.000000e+00 : f32
    %504 = vector.broadcast %cst_150 : f32 to vector<8x128xf32>
    %505 = arith.addf %504, %503 : vector<8x128xf32>
    %506 = arith.divf %504, %505 : vector<8x128xf32>
    %507 = arith.mulf %498, %479 : vector<8x128xf32>
    %508 = arith.mulf %492, %500 : vector<8x128xf32>
    %509 = arith.addf %507, %508 : vector<8x128xf32>
    %510 = math.tanh %509 : vector<8x128xf32>
    %511 = arith.mulf %506, %510 : vector<8x128xf32>
    %512 = arith.index_cast %481 : i32 to index
    %c0_151 = arith.constant 0 : index
    %513 = vector.load %arg7[%512, %c0_151] : memref<128x128xf32, #tpu.memory_space<vmem>>, vector<8x128xf32>
    tpu.vector_store %arg7[%512, %c0_151], %511 {strides = array<i32>} : memref<128x128xf32, #tpu.memory_space<vmem>>, vector<8x128xf32>,
    %c16_i32_152 = arith.constant 16 : i32
    %514 = arith.muli %arg0, %c16_i32_152 : i32
    %515 = arith.addi %514, %c12_i32 : i32
    %c37_i32_153 = arith.constant 37 : i32
    %516 = arith.cmpi slt, %515, %c37_i32_153 : i32
    %517 = arith.select %516, %511, %478 : vector<8x128xf32>
    %518 = arith.select %516, %509, %479 : vector<8x128xf32>
    %c13_i32 = arith.constant 13 : i32
    %c8_i32_154 = arith.constant 8 : i32
    %519 = arith.muli %c13_i32, %c8_i32_154 : i32
    %520 = tpu.assume_multiple %519, 8 : i32
    %521 = arith.index_cast %520 : i32 to index
    %c0_155 = arith.constant 0 : index
    %522 = vector.load %arg10[%521, %c0_155] : memref<128x512xf32, #tpu.memory_space<vmem>>, vector<8x512xf32>
    %c0_156 = arith.constant 0 : index
    %c0_157 = arith.constant 0 : index
    %523 = vector.load %arg5[%c0_156, %c0_157] : memref<128x512xf32, #tpu.memory_space<vmem>>, vector<128x512xf32>
    %cst_158 = arith.constant dense<0.000000e+00> : vector<8x512xf32>
    %524 = tpu.matmul %517, %523, %cst_158 {dimension_numbers = #tpu.dot_dimension_numbers<[1], [0], [0], [1], [0, 0, 1, 1], [], []>} : vector<8x128xf32>, vector<128x512xf32>, vector<8x512xf32> -> vector<8x512xf32>
    %525 = arith.addf %522, %524 : vector<8x512xf32>
    %526 = vector.extract_strided_slice %525 {offsets = [0, 0], sizes = [8, 128], strides = [1, 1]} : vector<8x512xf32> to vector<8x128xf32>
    %527 = arith.negf %526 : vector<8x128xf32>
    %528 = math.exp %527 : vector<8x128xf32>
    %cst_159 = arith.constant 1.000000e+00 : f32
    %529 = vector.broadcast %cst_159 : f32 to vector<8x128xf32>
    %530 = arith.addf %529, %528 : vector<8x128xf32>
    %531 = arith.divf %529, %530 : vector<8x128xf32>
    %532 = vector.extract_strided_slice %525 {offsets = [0, 128], sizes = [8, 128], strides = [1, 1]} : vector<8x512xf32> to vector<8x128xf32>
    %533 = arith.negf %532 : vector<8x128xf32>
    %534 = math.exp %533 : vector<8x128xf32>
    %cst_160 = arith.constant 1.000000e+00 : f32
    %535 = vector.broadcast %cst_160 : f32 to vector<8x128xf32>
    %536 = arith.addf %535, %534 : vector<8x128xf32>
    %537 = arith.divf %535, %536 : vector<8x128xf32>
    %538 = vector.extract_strided_slice %525 {offsets = [0, 256], sizes = [8, 128], strides = [1, 1]} : vector<8x512xf32> to vector<8x128xf32>
    %539 = math.tanh %538 : vector<8x128xf32>
    %540 = vector.extract_strided_slice %525 {offsets = [0, 384], sizes = [8, 128], strides = [1, 1]} : vector<8x512xf32> to vector<8x128xf32>
    %541 = arith.negf %540 : vector<8x128xf32>
    %542 = math.exp %541 : vector<8x128xf32>
    %cst_161 = arith.constant 1.000000e+00 : f32
    %543 = vector.broadcast %cst_161 : f32 to vector<8x128xf32>
    %544 = arith.addf %543, %542 : vector<8x128xf32>
    %545 = arith.divf %543, %544 : vector<8x128xf32>
    %546 = arith.mulf %537, %518 : vector<8x128xf32>
    %547 = arith.mulf %531, %539 : vector<8x128xf32>
    %548 = arith.addf %546, %547 : vector<8x128xf32>
    %549 = math.tanh %548 : vector<8x128xf32>
    %550 = arith.mulf %545, %549 : vector<8x128xf32>
    %551 = arith.index_cast %520 : i32 to index
    %c0_162 = arith.constant 0 : index
    %552 = vector.load %arg7[%551, %c0_162] : memref<128x128xf32, #tpu.memory_space<vmem>>, vector<8x128xf32>
    tpu.vector_store %arg7[%551, %c0_162], %550 {strides = array<i32>} : memref<128x128xf32, #tpu.memory_space<vmem>>, vector<8x128xf32>,
    %c16_i32_163 = arith.constant 16 : i32
    %553 = arith.muli %arg0, %c16_i32_163 : i32
    %554 = arith.addi %553, %c13_i32 : i32
    %c37_i32_164 = arith.constant 37 : i32
    %555 = arith.cmpi slt, %554, %c37_i32_164 : i32
    %556 = arith.select %555, %550, %517 : vector<8x128xf32>
    %557 = arith.select %555, %548, %518 : vector<8x128xf32>
    %c14_i32 = arith.constant 14 : i32
    %c8_i32_165 = arith.constant 8 : i32
    %558 = arith.muli %c14_i32, %c8_i32_165 : i32
    %559 = tpu.assume_multiple %558, 8 : i32
    %560 = arith.index_cast %559 : i32 to index
    %c0_166 = arith.constant 0 : index
    %561 = vector.load %arg10[%560, %c0_166] : memref<128x512xf32, #tpu.memory_space<vmem>>, vector<8x512xf32>
    %c0_167 = arith.constant 0 : index
    %c0_168 = arith.constant 0 : index
    %562 = vector.load %arg5[%c0_167, %c0_168] : memref<128x512xf32, #tpu.memory_space<vmem>>, vector<128x512xf32>
    %cst_169 = arith.constant dense<0.000000e+00> : vector<8x512xf32>
    %563 = tpu.matmul %556, %562, %cst_169 {dimension_numbers = #tpu.dot_dimension_numbers<[1], [0], [0], [1], [0, 0, 1, 1], [], []>} : vector<8x128xf32>, vector<128x512xf32>, vector<8x512xf32> -> vector<8x512xf32>
    %564 = arith.addf %561, %563 : vector<8x512xf32>
    %565 = vector.extract_strided_slice %564 {offsets = [0, 0], sizes = [8, 128], strides = [1, 1]} : vector<8x512xf32> to vector<8x128xf32>
    %566 = arith.negf %565 : vector<8x128xf32>
    %567 = math.exp %566 : vector<8x128xf32>
    %cst_170 = arith.constant 1.000000e+00 : f32
    %568 = vector.broadcast %cst_170 : f32 to vector<8x128xf32>
    %569 = arith.addf %568, %567 : vector<8x128xf32>
    %570 = arith.divf %568, %569 : vector<8x128xf32>
    %571 = vector.extract_strided_slice %564 {offsets = [0, 128], sizes = [8, 128], strides = [1, 1]} : vector<8x512xf32> to vector<8x128xf32>
    %572 = arith.negf %571 : vector<8x128xf32>
    %573 = math.exp %572 : vector<8x128xf32>
    %cst_171 = arith.constant 1.000000e+00 : f32
    %574 = vector.broadcast %cst_171 : f32 to vector<8x128xf32>
    %575 = arith.addf %574, %573 : vector<8x128xf32>
    %576 = arith.divf %574, %575 : vector<8x128xf32>
    %577 = vector.extract_strided_slice %564 {offsets = [0, 256], sizes = [8, 128], strides = [1, 1]} : vector<8x512xf32> to vector<8x128xf32>
    %578 = math.tanh %577 : vector<8x128xf32>
    %579 = vector.extract_strided_slice %564 {offsets = [0, 384], sizes = [8, 128], strides = [1, 1]} : vector<8x512xf32> to vector<8x128xf32>
    %580 = arith.negf %579 : vector<8x128xf32>
    %581 = math.exp %580 : vector<8x128xf32>
    %cst_172 = arith.constant 1.000000e+00 : f32
    %582 = vector.broadcast %cst_172 : f32 to vector<8x128xf32>
    %583 = arith.addf %582, %581 : vector<8x128xf32>
    %584 = arith.divf %582, %583 : vector<8x128xf32>
    %585 = arith.mulf %576, %557 : vector<8x128xf32>
    %586 = arith.mulf %570, %578 : vector<8x128xf32>
    %587 = arith.addf %585, %586 : vector<8x128xf32>
    %588 = math.tanh %587 : vector<8x128xf32>
    %589 = arith.mulf %584, %588 : vector<8x128xf32>
    %590 = arith.index_cast %559 : i32 to index
    %c0_173 = arith.constant 0 : index
    %591 = vector.load %arg7[%590, %c0_173] : memref<128x128xf32, #tpu.memory_space<vmem>>, vector<8x128xf32>
    tpu.vector_store %arg7[%590, %c0_173], %589 {strides = array<i32>} : memref<128x128xf32, #tpu.memory_space<vmem>>, vector<8x128xf32>,
    %c16_i32_174 = arith.constant 16 : i32
    %592 = arith.muli %arg0, %c16_i32_174 : i32
    %593 = arith.addi %592, %c14_i32 : i32
    %c37_i32_175 = arith.constant 37 : i32
    %594 = arith.cmpi slt, %593, %c37_i32_175 : i32
    %595 = arith.select %594, %589, %556 : vector<8x128xf32>
    %596 = arith.select %594, %587, %557 : vector<8x128xf32>
    %c15_i32 = arith.constant 15 : i32
    %c8_i32_176 = arith.constant 8 : i32
    %597 = arith.muli %c15_i32, %c8_i32_176 : i32
    %598 = tpu.assume_multiple %597, 8 : i32
    %599 = arith.index_cast %598 : i32 to index
    %c0_177 = arith.constant 0 : index
    %600 = vector.load %arg10[%599, %c0_177] : memref<128x512xf32, #tpu.memory_space<vmem>>, vector<8x512xf32>
    %c0_178 = arith.constant 0 : index
    %c0_179 = arith.constant 0 : index
    %601 = vector.load %arg5[%c0_178, %c0_179] : memref<128x512xf32, #tpu.memory_space<vmem>>, vector<128x512xf32>
    %cst_180 = arith.constant dense<0.000000e+00> : vector<8x512xf32>
    %602 = tpu.matmul %595, %601, %cst_180 {dimension_numbers = #tpu.dot_dimension_numbers<[1], [0], [0], [1], [0, 0, 1, 1], [], []>} : vector<8x128xf32>, vector<128x512xf32>, vector<8x512xf32> -> vector<8x512xf32>
    %603 = arith.addf %600, %602 : vector<8x512xf32>
    %604 = vector.extract_strided_slice %603 {offsets = [0, 0], sizes = [8, 128], strides = [1, 1]} : vector<8x512xf32> to vector<8x128xf32>
    %605 = arith.negf %604 : vector<8x128xf32>
    %606 = math.exp %605 : vector<8x128xf32>
    %cst_181 = arith.constant 1.000000e+00 : f32
    %607 = vector.broadcast %cst_181 : f32 to vector<8x128xf32>
    %608 = arith.addf %607, %606 : vector<8x128xf32>
    %609 = arith.divf %607, %608 : vector<8x128xf32>
    %610 = vector.extract_strided_slice %603 {offsets = [0, 128], sizes = [8, 128], strides = [1, 1]} : vector<8x512xf32> to vector<8x128xf32>
    %611 = arith.negf %610 : vector<8x128xf32>
    %612 = math.exp %611 : vector<8x128xf32>
    %cst_182 = arith.constant 1.000000e+00 : f32
    %613 = vector.broadcast %cst_182 : f32 to vector<8x128xf32>
    %614 = arith.addf %613, %612 : vector<8x128xf32>
    %615 = arith.divf %613, %614 : vector<8x128xf32>
    %616 = vector.extract_strided_slice %603 {offsets = [0, 256], sizes = [8, 128], strides = [1, 1]} : vector<8x512xf32> to vector<8x128xf32>
    %617 = math.tanh %616 : vector<8x128xf32>
    %618 = vector.extract_strided_slice %603 {offsets = [0, 384], sizes = [8, 128], strides = [1, 1]} : vector<8x512xf32> to vector<8x128xf32>
    %619 = arith.negf %618 : vector<8x128xf32>
    %620 = math.exp %619 : vector<8x128xf32>
    %cst_183 = arith.constant 1.000000e+00 : f32
    %621 = vector.broadcast %cst_183 : f32 to vector<8x128xf32>
    %622 = arith.addf %621, %620 : vector<8x128xf32>
    %623 = arith.divf %621, %622 : vector<8x128xf32>
    %624 = arith.mulf %615, %596 : vector<8x128xf32>
    %625 = arith.mulf %609, %617 : vector<8x128xf32>
    %626 = arith.addf %624, %625 : vector<8x128xf32>
    %627 = math.tanh %626 : vector<8x128xf32>
    %628 = arith.mulf %623, %627 : vector<8x128xf32>
    %629 = arith.index_cast %598 : i32 to index
    %c0_184 = arith.constant 0 : index
    %630 = vector.load %arg7[%629, %c0_184] : memref<128x128xf32, #tpu.memory_space<vmem>>, vector<8x128xf32>
    tpu.vector_store %arg7[%629, %c0_184], %628 {strides = array<i32>} : memref<128x128xf32, #tpu.memory_space<vmem>>, vector<8x128xf32>,
    %c16_i32_185 = arith.constant 16 : i32
    %631 = arith.muli %arg0, %c16_i32_185 : i32
    %632 = arith.addi %631, %c15_i32 : i32
    %c37_i32_186 = arith.constant 37 : i32
    %633 = arith.cmpi slt, %632, %c37_i32_186 : i32
    %634 = arith.select %633, %628, %595 : vector<8x128xf32>
    %635 = arith.select %633, %626, %596 : vector<8x128xf32>
    %c16_i32_187 = arith.constant 16 : i32
    %c0_188 = arith.constant 0 : index
    %c0_189 = arith.constant 0 : index
    %636 = vector.load %arg11[%c0_188, %c0_189] : memref<8x128xf32, #tpu.memory_space<vmem>>, vector<8x128xf32>
    tpu.vector_store %arg11[%c0_188, %c0_189], %634 {strides = array<i32>} : memref<8x128xf32, #tpu.memory_space<vmem>>, vector<8x128xf32>,
    %c0_190 = arith.constant 0 : index
    %c0_191 = arith.constant 0 : index
    %637 = vector.load %arg12[%c0_190, %c0_191] : memref<8x128xf32, #tpu.memory_space<vmem>>, vector<8x128xf32>
    tpu.vector_store %arg12[%c0_190, %c0_191], %635 {strides = array<i32>} : memref<8x128xf32, #tpu.memory_space<vmem>>, vector<8x128xf32>,
    %c2_i32_192 = arith.constant 2 : i32
    %638 = arith.cmpi eq, %arg0, %c2_i32_192 : i32
    %639 = arith.extui %638 : i1 to i32
    %c0_i32_193 = arith.constant 0 : i32
    %640 = arith.cmpi ne, %639, %c0_i32_193 : i32
    scf.if %640 {
      %c0_194 = arith.constant 0 : index
      %c0_195 = arith.constant 0 : index
      %c0_196 = arith.constant 0 : index
      %641 = vector.load %arg8[%c0_194, %c0_195, %c0_196] : memref<1x8x128xf32, #tpu.memory_space<vmem>>, vector<1x8x128xf32>
      %642 = vector.shape_cast %641 : vector<1x8x128xf32> to vector<8x128xf32>
      %643 = vector.shape_cast %634 : vector<8x128xf32> to vector<1x8x128xf32>
      tpu.vector_store %arg8[%c0_194, %c0_195, %c0_196], %643 {strides = array<i32>} : memref<1x8x128xf32, #tpu.memory_space<vmem>>, vector<1x8x128xf32>,
      %c0_197 = arith.constant 0 : index
      %c0_198 = arith.constant 0 : index
      %c0_199 = arith.constant 0 : index
      %644 = vector.load %arg9[%c0_197, %c0_198, %c0_199] : memref<1x8x128xf32, #tpu.memory_space<vmem>>, vector<1x8x128xf32>
      %645 = vector.shape_cast %644 : vector<1x8x128xf32> to vector<8x128xf32>
      %646 = vector.shape_cast %635 : vector<8x128xf32> to vector<1x8x128xf32>
      tpu.vector_store %arg9[%c0_197, %c0_198, %c0_199], %646 {strides = array<i32>} : memref<1x8x128xf32, #tpu.memory_space<vmem>>, vector<1x8x128xf32>,
    } else {
    }
    return
  }
  func.func @transform_0(%arg0: i32) -> (i32, i32) {
    %c0_i32 = arith.constant 0 : i32
    %c0_i32_0 = arith.constant 0 : i32
    return %arg0, %c0_i32 : i32, i32
  }
  func.func @transform_1(%arg0: i32) -> (i32, i32, i32) {
    %c0_i32 = arith.constant 0 : i32
    %c0_i32_0 = arith.constant 0 : i32
    %c0_i32_1 = arith.constant 0 : i32
    %c0_i32_2 = arith.constant 0 : i32
    return %c0_i32, %c0_i32_0, %c0_i32_1 : i32, i32, i32
  }
  func.func @transform_2(%arg0: i32) -> (i32, i32, i32) {
    %c0_i32 = arith.constant 0 : i32
    %c0_i32_0 = arith.constant 0 : i32
    %c0_i32_1 = arith.constant 0 : i32
    %c0_i32_2 = arith.constant 0 : i32
    return %c0_i32, %c0_i32_0, %c0_i32_1 : i32, i32, i32
  }
  func.func @transform_3(%arg0: i32) -> (i32, i32) {
    %c0_i32 = arith.constant 0 : i32
    %c0_i32_0 = arith.constant 0 : i32
    %c0_i32_1 = arith.constant 0 : i32
    return %c0_i32, %c0_i32_0 : i32, i32
  }
  func.func @transform_4(%arg0: i32) -> (i32, i32) {
    %c0_i32 = arith.constant 0 : i32
    %c0_i32_0 = arith.constant 0 : i32
    %c0_i32_1 = arith.constant 0 : i32
    return %c0_i32, %c0_i32_0 : i32, i32
  }
  func.func @transform_5(%arg0: i32) -> (i32, i32) {
    %c0_i32 = arith.constant 0 : i32
    %c0_i32_0 = arith.constant 0 : i32
    %c0_i32_1 = arith.constant 0 : i32
    return %c0_i32, %c0_i32_0 : i32, i32
  }
  func.func @transform_6(%arg0: i32) -> (i32, i32) {
    %c0_i32 = arith.constant 0 : i32
    %c0_i32_0 = arith.constant 0 : i32
    return %arg0, %c0_i32 : i32, i32
  }
  func.func @transform_7(%arg0: i32) -> (i32, i32, i32) {
    %c0_i32 = arith.constant 0 : i32
    %c0_i32_0 = arith.constant 0 : i32
    %c0_i32_1 = arith.constant 0 : i32
    %c0_i32_2 = arith.constant 0 : i32
    return %c0_i32, %c0_i32_0, %c0_i32_1 : i32, i32, i32
  }
  func.func @transform_8(%arg0: i32) -> (i32, i32, i32) {
    %c0_i32 = arith.constant 0 : i32
    %c0_i32_0 = arith.constant 0 : i32
    %c0_i32_1 = arith.constant 0 : i32
    %c0_i32_2 = arith.constant 0 : i32
    return %c0_i32, %c0_i32_0, %c0_i32_1 : i32, i32, i32
  }
}

</mosaic_0001>

<llo_original>
// kernel: _manual_lstm_impl.1
$region0: #{_manual_lstm_impl.1}
  #allocation0 [shape = 'u32[]', space=smem, size = 0x4, offset = 0x4, fixed_abs, tag = 'smem constant byte address 0x4 - core index']
  #allocation1 [shape = 'u32[72,128]{1,0:T(1,128)}', space=vmem, size = 0x9000, scoped, tag = 'internal scratch']
  #allocation2 [shape = 'f32[128,512]{1,0:T(8,128)}', space=vmem, size = 0x40000, scoped, tag = 'scratch operand']
  #allocation3 [shape = 'f32[8,128]{1,0:T(8,128)}', space=vmem, size = 0x1000, scoped, tag = 'scratch operand']
  #allocation4 [shape = 'f32[8,128]{1,0:T(8,128)}', space=vmem, size = 0x1000, scoped, tag = 'scratch operand']
  %s0 = inlined_call_operand.vmem [shape: f32[384,24], index: 0, kind: input, shape index: {}]
  %s1 = inlined_call_operand.vmem [shape: f32[1,8,128], index: 1, kind: input, shape index: {}]
  %s2 = inlined_call_operand.vmem [shape: f32[1,8,128], index: 2, kind: input, shape index: {}]
  %s3 = inlined_call_operand.vmem [shape: f32[24,512], index: 3, kind: input, shape index: {}]
  %s4 = inlined_call_operand.vmem [shape: f32[128,512], index: 4, kind: input, shape index: {}]
  %s5 = inlined_call_operand.vmem [shape: f32[1,512], index: 5, kind: input, shape index: {}]
  %s6 = inlined_call_operand.vmem [shape: f32[384,128], index: 6, kind: output, shape index: {0}]
  %s7 = inlined_call_operand.vmem [shape: f32[1,8,128], index: 7, kind: output, shape index: {1}]
  %s8 = inlined_call_operand.vmem [shape: f32[1,8,128], index: 8, kind: output, shape index: {2}]
  %9 = xla_tuple %s6, %s7, %s8
  %s10 = sld [smem:[#allocation0]]
  $region81: #{_manual_lstm_impl.1} parent=0
    _
  %s12 = ssub.s32 1, %s10
  %s13 = scalar_select 0, %s12, %s10
  loop: start=0, step=1, limit=5
  $region2: #{_manual_lstm_impl.1} parent=0 // loop_pre_header
    _
  $region3: #{_manual_lstm_impl.1} parent=0 // loop_header
    %s15 = sphi 0, %s19
    %p16 = scmp.ge.s32.totalorder %s15, 5
    %s25 = sphi 0, %s27
    %s28 = sphi 0, %s25
    %s29 = sphi 0, %s28
    %s45 = sphi 0, %s29
    %s49 = sphi 0, %s49
    %s51 = sphi 0, %s49
    %s52 = sphi 0, %s51
    %s66 = sphi 0, %s52
    %s70 = sphi 0, %s70
    %s72 = sphi 0, %s70
    %s73 = sphi 0, %s72
    %s87 = sphi 0, %s73
    %s91 = sphi 0, %s91
    %s93 = sphi 0, %s91
    %s94 = sphi 0, %s93
    %s108 = sphi 0, %s94
    %s112 = sphi 0, %s112
    %s114 = sphi 0, %s112
    %s115 = sphi 0, %s114
    %s129 = sphi 0, %s115
    %s133 = sphi 0, %s133
    %s135 = sphi 0, %s133
    %s136 = sphi 0, %s135
    %s150 = sphi 0, %s136
    %s156 = sphi 0, %s158
    %s159 = sphi 0, %s156
    %s160 = sphi 0, %s159
    %s176 = sphi 0, %s160
    %s180 = sphi 0, %s180
    %s182 = sphi 0, %s180
    %s183 = sphi 0, %s182
    %s197 = sphi 0, %s183
    %s201 = sphi 0, %s201
    %s203 = sphi 0, %s201
    %s204 = sphi 0, %s203
    %s218 = sphi 0, %s204
  $region4: #{_manual_lstm_impl.1} parent=0 // loop_header_branch
    %18 = sbr.rel (%p16) target = $region8
  $region5: #{_manual_lstm_impl.1} parent=0 // loop_body
    %s20 = ssub.s32 %s15, 1
    %s21 = ssub.s32 %s15, 2
    %s22 = sadd.s32 %s15, 1
    %s23 = ssub.s32 %s15, %s22
    %p24 = scmp.eq.s32.totalorder %s23, 0
    %s26 = sadd.s32 %s25, 1
    %s27 = scalar_select %p24, %s25, %s26
    %p30 = pneg %p24
    %p31 = scmp.eq.s32.totalorder %s15, 2
    %p32 = por %p30, %p31
    %p33 = scmp.ne.s32.totalorder %s25, %s28
    %p34 = scmp.eq.s32.totalorder %s15, 0
    %p35 = por %p33, %p34
    %p36 = scmp.ne.s32.totalorder %s25, %s28
    %p37 = scmp.eq.s32.totalorder %s20, 2
    %p38 = por %p36, %p37
    %p39 = scmp.ne.s32.totalorder %s28, %s29
    %p40 = scmp.eq.s32.totalorder %s20, 0
    %p41 = por %p39, %p40
    %p42 = scmp.ne.s32.totalorder %s28, %s29
    %p43 = scmp.eq.s32.totalorder %s21, 2
    %p44 = por %p42, %p43
    %p46 = scmp.ne.s32.totalorder %s29, %s45
    %p47 = scmp.eq.s32.totalorder %s21, 0
    %p48 = por %p46, %p47
    %s50 = sadd.s32 %s49, 1
    %p53 = scmp.eq.s32.totalorder %s15, 2
    %p54 = scmp.ne.s32.totalorder %s49, %s51
    %p55 = scmp.eq.s32.totalorder %s15, 0
    %p56 = por %p54, %p55
    %p57 = scmp.ne.s32.totalorder %s49, %s51
    %p58 = scmp.eq.s32.totalorder %s20, 2
    %p59 = por %p57, %p58
    %p60 = scmp.ne.s32.totalorder %s51, %s52
    %p61 = scmp.eq.s32.totalorder %s20, 0
    %p62 = por %p60, %p61
    %p63 = scmp.ne.s32.totalorder %s51, %s52
    %p64 = scmp.eq.s32.totalorder %s21, 2
    %p65 = por %p63, %p64
    %p67 = scmp.ne.s32.totalorder %s52, %s66
    %p68 = scmp.eq.s32.totalorder %s21, 0
    %p69 = por %p67, %p68
    %s71 = sadd.s32 %s70, 1
    %p74 = scmp.eq.s32.totalorder %s15, 2
    %p75 = scmp.ne.s32.totalorder %s70, %s72
    %p76 = scmp.eq.s32.totalorder %s15, 0
    %p77 = por %p75, %p76
    %p78 = scmp.ne.s32.totalorder %s70, %s72
    %p79 = scmp.eq.s32.totalorder %s20, 2
    %p80 = por %p78, %p79
    %p81 = scmp.ne.s32.totalorder %s72, %s73
    %p82 = scmp.eq.s32.totalorder %s20, 0
    %p83 = por %p81, %p82
    %p84 = scmp.ne.s32.totalorder %s72, %s73
    %p85 = scmp.eq.s32.totalorder %s21, 2
    %p86 = por %p84, %p85
    %p88 = scmp.ne.s32.totalorder %s73, %s87
    %p89 = scmp.eq.s32.totalorder %s21, 0
    %p90 = por %p88, %p89
    %s92 = sadd.s32 %s91, 1
    %p95 = scmp.eq.s32.totalorder %s15, 2
    %p96 = scmp.ne.s32.totalorder %s91, %s93
    %p97 = scmp.eq.s32.totalorder %s15, 0
    %p98 = por %p96, %p97
    %p99 = scmp.ne.s32.totalorder %s91, %s93
    %p100 = scmp.eq.s32.totalorder %s20, 2
    %p101 = por %p99, %p100
    %p102 = scmp.ne.s32.totalorder %s93, %s94
    %p103 = scmp.eq.s32.totalorder %s20, 0
    %p104 = por %p102, %p103
    %p105 = scmp.ne.s32.totalorder %s93, %s94
    %p106 = scmp.eq.s32.totalorder %s21, 2
    %p107 = por %p105, %p106
    %p109 = scmp.ne.s32.totalorder %s94, %s108
    %p110 = scmp.eq.s32.totalorder %s21, 0
    %p111 = por %p109, %p110
    %s113 = sadd.s32 %s112, 1
    %p116 = scmp.eq.s32.totalorder %s15, 2
    %p117 = scmp.ne.s32.totalorder %s112, %s114
    %p118 = scmp.eq.s32.totalorder %s15, 0
    %p119 = por %p117, %p118
    %p120 = scmp.ne.s32.totalorder %s112, %s114
    %p121 = scmp.eq.s32.totalorder %s20, 2
    %p122 = por %p120, %p121
    %p123 = scmp.ne.s32.totalorder %s114, %s115
    %p124 = scmp.eq.s32.totalorder %s20, 0
    %p125 = por %p123, %p124
    %p126 = scmp.ne.s32.totalorder %s114, %s115
    %p127 = scmp.eq.s32.totalorder %s21, 2
    %p128 = por %p126, %p127
    %p130 = scmp.ne.s32.totalorder %s115, %s129
    %p131 = scmp.eq.s32.totalorder %s21, 0
    %p132 = por %p130, %p131
    %s134 = sadd.s32 %s133, 1
    %p137 = scmp.eq.s32.totalorder %s15, 2
    %p138 = scmp.ne.s32.totalorder %s133, %s135
    %p139 = scmp.eq.s32.totalorder %s15, 0
    %p140 = por %p138, %p139
    %p141 = scmp.ne.s32.totalorder %s133, %s135
    %p142 = scmp.eq.s32.totalorder %s20, 2
    %p143 = por %p141, %p142
    %p144 = scmp.ne.s32.totalorder %s135, %s136
    %p145 = scmp.eq.s32.totalorder %s20, 0
    %p146 = por %p144, %p145
    %p147 = scmp.ne.s32.totalorder %s135, %s136
    %p148 = scmp.eq.s32.totalorder %s21, 2
    %p149 = por %p147, %p148
    %p151 = scmp.ne.s32.totalorder %s136, %s150
    %p152 = scmp.eq.s32.totalorder %s21, 0
    %p153 = por %p151, %p152
    %s154 = ssub.s32 %s15, %s22
    %p155 = scmp.eq.s32.totalorder %s154, 0
    %s157 = sadd.s32 %s156, 1
    %s158 = scalar_select %p155, %s156, %s157
    %p161 = pneg %p155
    %p162 = scmp.eq.s32.totalorder %s15, 2
    %p163 = por %p161, %p162
    %p164 = scmp.ne.s32.totalorder %s156, %s159
    %p165 = scmp.eq.s32.totalorder %s15, 0
    %p166 = por %p164, %p165
    %p167 = scmp.ne.s32.totalorder %s156, %s159
    %p168 = scmp.eq.s32.totalorder %s20, 2
    %p169 = por %p167, %p168
    %p170 = scmp.ne.s32.totalorder %s159, %s160
    %p171 = scmp.eq.s32.totalorder %s20, 0
    %p172 = por %p170, %p171
    %p173 = scmp.ne.s32.totalorder %s159, %s160
    %p174 = scmp.eq.s32.totalorder %s21, 2
    %p175 = por %p173, %p174
    %p177 = scmp.ne.s32.totalorder %s160, %s176
    %p178 = scmp.eq.s32.totalorder %s21, 0
    %p179 = por %p177, %p178
    %s181 = sadd.s32 %s180, 1
    %p184 = scmp.eq.s32.totalorder %s15, 2
    %p185 = scmp.ne.s32.totalorder %s180, %s182
    %p186 = scmp.eq.s32.totalorder %s15, 0
    %p187 = por %p185, %p186
    %p188 = scmp.ne.s32.totalorder %s180, %s182
    %p189 = scmp.eq.s32.totalorder %s20, 2
    %p190 = por %p188, %p189
    %p191 = scmp.ne.s32.totalorder %s182, %s183
    %p192 = scmp.eq.s32.totalorder %s20, 0
    %p193 = por %p191, %p192
    %p194 = scmp.ne.s32.totalorder %s182, %s183
    %p195 = scmp.eq.s32.totalorder %s21, 2
    %p196 = por %p194, %p195
    %p198 = scmp.ne.s32.totalorder %s183, %s197
    %p199 = scmp.eq.s32.totalorder %s21, 0
    %p200 = por %p198, %p199
    %s202 = sadd.s32 %s201, 1
    %p205 = scmp.eq.s32.totalorder %s15, 2
    %p206 = scmp.ne.s32.totalorder %s201, %s203
    %p207 = scmp.eq.s32.totalorder %s15, 0
    %p208 = por %p206, %p207
    %p209 = scmp.ne.s32.totalorder %s201, %s203
    %p210 = scmp.eq.s32.totalorder %s20, 2
    %p211 = por %p209, %p210
    %p212 = scmp.ne.s32.totalorder %s203, %s204
    %p213 = scmp.eq.s32.totalorder %s20, 0
    %p214 = por %p212, %p213
    %p215 = scmp.ne.s32.totalorder %s203, %s204
    %p216 = scmp.eq.s32.totalorder %s21, 2
    %p217 = por %p215, %p216
    %p219 = scmp.ne.s32.totalorder %s204, %s218
    %p220 = scmp.eq.s32.totalorder %s21, 0
    %p221 = por %p219, %p220
    %p222 = scmp.le.s32.totalorder 1, %s15
    %p223 = scmp.lt.s32.totalorder %s15, 4
    %p224 = pnand %p222, %p223
    %p225 = pneg %p224
    // Predicated region
    $region9: #{_manual_lstm_impl.1} parent=5 // pred_check
      _
    $region10: #{_manual_lstm_impl.1} parent=5 // pred_check_branch
      %227 = sbr.rel (%p224) target = $region12
    $region11: #{_manual_lstm_impl.1} parent=5 // pred_region
      %s228 = ssub.s32 %s15, 1
      // Predicated region
      $region13: #{_manual_lstm_impl.1} parent=11 // pred_check
        %p229 = pneg %p62
      $region14: #{_manual_lstm_impl.1} parent=11 // pred_check_branch
        %231 = sbr.rel (%p229) target = $region16
      $region15: #{_manual_lstm_impl.1} parent=11 // pred_region
        _
      $region16: #{_manual_lstm_impl.1} parent=11 // pred_fallthru
        _
      // Predicated region
      $region17: #{_manual_lstm_impl.1} parent=11 // pred_check
        %p232 = pneg %p83
      $region18: #{_manual_lstm_impl.1} parent=11 // pred_check_branch
        %234 = sbr.rel (%p232) target = $region20
      $region19: #{_manual_lstm_impl.1} parent=11 // pred_region
        _
      $region20: #{_manual_lstm_impl.1} parent=11 // pred_fallthru
        _
      // Predicated region
      $region21: #{_manual_lstm_impl.1} parent=11 // pred_check
        %p235 = pneg %p104
      $region22: #{_manual_lstm_impl.1} parent=11 // pred_check_branch
        %237 = sbr.rel (%p235) target = $region24
      $region23: #{_manual_lstm_impl.1} parent=11 // pred_region
        _
      $region24: #{_manual_lstm_impl.1} parent=11 // pred_fallthru
        _
      // Predicated region
      $region25: #{_manual_lstm_impl.1} parent=11 // pred_check
        %p238 = pneg %p125
      $region26: #{_manual_lstm_impl.1} parent=11 // pred_check_branch
        %240 = sbr.rel (%p238) target = $region28
      $region27: #{_manual_lstm_impl.1} parent=11 // pred_region
        _
      $region28: #{_manual_lstm_impl.1} parent=11 // pred_fallthru
        _
      // Predicated region
      $region29: #{_manual_lstm_impl.1} parent=11 // pred_check
        %p241 = pneg %p146
      $region30: #{_manual_lstm_impl.1} parent=11 // pred_check_branch
        %243 = sbr.rel (%p241) target = $region32
      $region31: #{_manual_lstm_impl.1} parent=11 // pred_region
        _
      $region32: #{_manual_lstm_impl.1} parent=11 // pred_fallthru
        _
    $region12: #{_manual_lstm_impl.1} parent=5 // pred_fallthru
      _
    %p244 = scmp.lt.s32.totalorder %s15, 3
    // Predicated region
    $region33: #{_manual_lstm_impl.1} parent=5 // pred_check
      %p245 = pneg %p244
    $region34: #{_manual_lstm_impl.1} parent=5 // pred_check_branch
      %247 = sbr.rel (%p245) target = $region36
    $region35: #{_manual_lstm_impl.1} parent=5 // pred_region
      // Predicated region
      $region37: #{_manual_lstm_impl.1} parent=35 // pred_check
        %p248 = pneg %p35
      $region38: #{_manual_lstm_impl.1} parent=35 // pred_check_branch
        %250 = sbr.rel (%p248) target = $region40
      $region39: #{_manual_lstm_impl.1} parent=35 // pred_region
        %s251 = smul.u32 16, %s15
        %p252 = scmp.lt.s32.totalorder %s251, 47
        %s253 = scalar_select %p252, %s251, 47
        %s254 = smul.addr %s253, 8
        %s255 = scalar_lea.vmem %s0, %s254
        %s256 = smul.u32 16, %s15
      $region40: #{_manual_lstm_impl.1} parent=35 // pred_fallthru
        _
    $region36: #{_manual_lstm_impl.1} parent=5 // pred_fallthru
      _
    %p257 = scmp.le.s32.totalorder 1, %s15
    %p258 = scmp.lt.s32.totalorder %s15, 4
    %p259 = pnand %p257, %p258
    %p260 = pneg %p259
    // Predicated region
    $region41: #{_manual_lstm_impl.1} parent=5 // pred_check
      _
    $region42: #{_manual_lstm_impl.1} parent=5 // pred_check_branch
      %262 = sbr.rel (%p259) target = $region44
    $region43: #{_manual_lstm_impl.1} parent=5 // pred_region
      %s263 = ssub.s32 %s15, 1
      %s264 = smul.u32 16, %s20
      %p265 = scmp.lt.s32.totalorder %s264, 47
      %s266 = scalar_select %p265, %s264, 47
      %s267 = smul.addr %s266, 8
      %s268 = scalar_lea.vmem %s0, %s267
      %p269 = pneg %p41
      %p270 = pneg %p38
      %p271 = pneg %p62
      %p272 = pneg %p59
      %p273 = pneg %p83
      %p274 = pneg %p80
      %p275 = pneg %p104
      %p276 = pneg %p101
      %p277 = pneg %p125
      %p278 = pneg %p122
      %p279 = pneg %p146
      %p280 = pneg %p143
      %p281 = pneg %p172
      %p282 = pneg %p169
      %s283 = smul.u32 16, %s20
      %p284 = scmp.lt.s32.totalorder %s283, 47
      %s285 = scalar_select %p284, %s283, 47
      %s286 = smul.addr %s285, 8
      %s287 = scalar_lea.vmem %s6, %s286
      %p288 = pneg %p193
      %p289 = pneg %p190
      %p290 = pneg %p214
      %p291 = pneg %p211
      %s292 = smul.u32 16, %s20
      %p293 = scmp.lt.s32.totalorder %s292, 47
      %s294 = scalar_select %p293, %s292, 47
      %s295 = smul.addr %s294, 8
      %s296 = scalar_lea.vmem %s0, %s295
      %s297 = smul.u32 16, %s20
      %s298 = smul.u32 16, %s20
      %p299 = scmp.lt.s32.totalorder %s298, 47
      %s300 = scalar_select %p299, %s298, 47
      %s301 = smul.addr %s300, 8
      %s302 = scalar_lea.vmem %s6, %s301
      %s303 = smul.u32 16, %s20
      %p304 = scmp.eq.s32.totalorder %s20, 0
      // Predicated region
      $region45: #{_manual_lstm_impl.1} parent=43 // pred_check
        %p305 = pneg %p304
      $region46: #{_manual_lstm_impl.1} parent=43 // pred_check_branch
        %307 = sbr.rel (%p305) target = $region48
      $region47: #{_manual_lstm_impl.1} parent=43 // pred_region
        %v308 = vld [vmem:[%s1] sm:$0xff]
        %309 = vst [vmem:[#allocation3] sm:$0xff] %v308
        %v310 = vld [vmem:[%s2] sm:$0xff]
        %311 = vst [vmem:[#allocation4] sm:$0xff] %v310
      $region48: #{_manual_lstm_impl.1} parent=43 // pred_fallthru
        _
      %v312 = vld [vmem:[%s296] sm:$0xff]
      %v313 = vld [vmem:[%s296 + $0x8] sm:$0xff]
      %v314 = vld [vmem:[%s296 + $0x10] sm:$0xff]
      %v315 = vld [vmem:[%s296 + $0x18] sm:$0xff]
      %v316 = vld [vmem:[%s296 + $0x20] sm:$0xff]
      %v317 = vld [vmem:[%s296 + $0x28] sm:$0xff]
      %v318 = vld [vmem:[%s296 + $0x30] sm:$0xff]
      %v319 = vld [vmem:[%s296 + $0x38] sm:$0xff]
      %v320 = vld [vmem:[%s296 + $0x40] sm:$0xff]
      %v321 = vld [vmem:[%s296 + $0x48] sm:$0xff]
      %v322 = vld [vmem:[%s296 + $0x50] sm:$0xff]
      %v323 = vld [vmem:[%s296 + $0x58] sm:$0xff]
      %v324 = vld [vmem:[%s296 + $0x60] sm:$0xff]
      %v325 = vld [vmem:[%s296 + $0x68] sm:$0xff]
      %v326 = vld [vmem:[%s296 + $0x70] sm:$0xff]
      %v327 = vld [vmem:[%s296 + $0x78] sm:$0xff]
      %v328 = vld [vmem:[%s3] sm:$0xff]
      %v329 = vld [vmem:[%s3 + $0x8] sm:$0xff]
      %v330 = vld [vmem:[%s3 + $0x10] sm:$0xff]
      %v331 = vld [vmem:[%s3 + $0x18] sm:$0xff]
      %v332 = vld [vmem:[%s3 + $0x20] sm:$0xff]
      %v333 = vld [vmem:[%s3 + $0x28] sm:$0xff]
      %v334 = vld [vmem:[%s3 + $0x30] sm:$0xff]
      %v335 = vld [vmem:[%s3 + $0x38] sm:$0xff]
      %v336 = vld [vmem:[%s3 + $0x40] sm:$0xff]
      %v337 = vld [vmem:[%s3 + $0x48] sm:$0xff]
      %v338 = vld [vmem:[%s3 + $0x50] sm:$0xff]
      %v339 = vld [vmem:[%s3 + $0x58] sm:$0xff]
      %v340 = vld [vmem:[%s5] sm:$0xf]
      %v342 = vperm.slane %v340, 0
      %v343 = vperm.slane %v340, 1
      %v344 = vperm.slane %v340, 2
      %v345 = vperm.slane %v340, 3
      %vm350 = vcmask 195584
      %v352 = vsel %vm350, %v312, 0
      %v355 = vsel %vm350, %v313, 0
      %v358 = vsel %vm350, %v314, 0
      %v361 = vsel %vm350, %v315, 0
      %v364 = vsel %vm350, %v316, 0
      %v367 = vsel %vm350, %v317, 0
      %v370 = vsel %vm350, %v318, 0
      %v373 = vsel %vm350, %v319, 0
      %v376 = vsel %vm350, %v320, 0
      %v379 = vsel %vm350, %v321, 0
      %v382 = vsel %vm350, %v322, 0
      %v385 = vsel %vm350, %v323, 0
      %v388 = vsel %vm350, %v324, 0
      %v391 = vsel %vm350, %v325, 0
      %v394 = vsel %vm350, %v326, 0
      %v397 = vsel %vm350, %v327, 0
      %399 = vmatpush.msra.mxu0 0.0
      %400 = vmatpush.msra.mxu0 0.0
      %401 = vmatpush.msra.mxu0 0.0
      %402 = vmatpush.msra.mxu0 0.0
      %403 = vmatpush.msra.mxu0 0.0
      %404 = vmatpush.msra.mxu0 0.0
      %405 = vmatpush.msra.mxu0 0.0
      %406 = vmatpush.msra.mxu0 0.0
      %407 = vmatpush.msra.mxu0 0.0
      %408 = vmatpush.msra.mxu0 0.0
      %409 = vmatpush.msra.mxu0 0.0
      %410 = vmatpush.msra.mxu0 0.0
      %411 = vmatpush.msra.mxu0 0.0
      %412 = vmatpush.msra.mxu0 %v336
      %413 = vmatpush.msra.mxu0 %v332
      %414 = vmatpush.msra.mxu0 %v328
      %415 = vmatmul.f32.gmra.mxu0 %v352
      %v416 = vpop.f32.mrf.mxu0
      %v417 = vadd.f32 %v342, %v416
      %418 = vmatmul.f32.gmra.mxu0 %v355
      %v419 = vpop.f32.mrf.mxu0
      %v420 = vadd.f32 %v342, %v419
      %421 = vmatmul.f32.gmra.mxu0 %v358
      %v422 = vpop.f32.mrf.mxu0
      %v423 = vadd.f32 %v342, %v422
      %424 = vmatmul.f32.gmra.mxu0 %v361
      %v425 = vpop.f32.mrf.mxu0
      %v426 = vadd.f32 %v342, %v425
      %427 = vmatmul.f32.gmra.mxu0 %v364
      %v428 = vpop.f32.mrf.mxu0
      %v429 = vadd.f32 %v342, %v428
      %430 = vmatmul.f32.gmra.mxu0 %v367
      %v431 = vpop.f32.mrf.mxu0
      %v432 = vadd.f32 %v342, %v431
      %433 = vmatmul.f32.gmra.mxu0 %v370
      %v434 = vpop.f32.mrf.mxu0
      %v435 = vadd.f32 %v342, %v434
      %436 = vmatmul.f32.gmra.mxu0 %v373
      %v437 = vpop.f32.mrf.mxu0
      %v438 = vadd.f32 %v342, %v437
      %439 = vmatmul.f32.gmra.mxu0 %v376
      %v440 = vpop.f32.mrf.mxu0
      %v441 = vadd.f32 %v342, %v440
      %442 = vmatmul.f32.gmra.mxu0 %v379
      %v443 = vpop.f32.mrf.mxu0
      %v444 = vadd.f32 %v342, %v443
      %445 = vmatmul.f32.gmra.mxu0 %v382
      %v446 = vpop.f32.mrf.mxu0
      %v447 = vadd.f32 %v342, %v446
      %448 = vmatmul.f32.gmra.mxu0 %v385
      %v449 = vpop.f32.mrf.mxu0
      %v450 = vadd.f32 %v342, %v449
      %451 = vmatmul.f32.gmra.mxu0 %v388
      %v452 = vpop.f32.mrf.mxu0
      %v453 = vadd.f32 %v342, %v452
      %454 = vmatmul.f32.gmra.mxu0 %v391
      %v455 = vpop.f32.mrf.mxu0
      %v456 = vadd.f32 %v342, %v455
      %457 = vmatmul.f32.gmra.mxu0 %v394
      %v458 = vpop.f32.mrf.mxu0
      %v459 = vadd.f32 %v342, %v458
      %460 = vmatmul.f32.gmra.mxu0 %v397
      %v461 = vpop.f32.mrf.mxu0
      %v462 = vadd.f32 %v342, %v461
      %463 = vdwg.mxu0
      %464 = vmatpush.msra.mxu0 0.0
      %465 = vmatpush.msra.mxu0 0.0
      %466 = vmatpush.msra.mxu0 0.0
      %467 = vmatpush.msra.mxu0 0.0
      %468 = vmatpush.msra.mxu0 0.0
      %469 = vmatpush.msra.mxu0 0.0
      %470 = vmatpush.msra.mxu0 0.0
      %471 = vmatpush.msra.mxu0 0.0
      %472 = vmatpush.msra.mxu0 0.0
      %473 = vmatpush.msra.mxu0 0.0
      %474 = vmatpush.msra.mxu0 0.0
      %475 = vmatpush.msra.mxu0 0.0
      %476 = vmatpush.msra.mxu0 0.0
      %477 = vmatpush.msra.mxu0 %v337
      %478 = vmatpush.msra.mxu0 %v333
      %479 = vmatpush.msra.mxu0 %v329
      %480 = vmatmul.f32.gmra.mxu0 %v352
      %v481 = vpop.f32.mrf.mxu0
      %v482 = vadd.f32 %v343, %v481
      %483 = vmatmul.f32.gmra.mxu0 %v355
      %v484 = vpop.f32.mrf.mxu0
      %v485 = vadd.f32 %v343, %v484
      %486 = vmatmul.f32.gmra.mxu0 %v358
      %v487 = vpop.f32.mrf.mxu0
      %v488 = vadd.f32 %v343, %v487
      %489 = vmatmul.f32.gmra.mxu0 %v361
      %v490 = vpop.f32.mrf.mxu0
      %v491 = vadd.f32 %v343, %v490
      %492 = vmatmul.f32.gmra.mxu0 %v364
      %v493 = vpop.f32.mrf.mxu0
      %v494 = vadd.f32 %v343, %v493
      %495 = vmatmul.f32.gmra.mxu0 %v367
      %v496 = vpop.f32.mrf.mxu0
      %v497 = vadd.f32 %v343, %v496
      %498 = vmatmul.f32.gmra.mxu0 %v370
      %v499 = vpop.f32.mrf.mxu0
      %v500 = vadd.f32 %v343, %v499
      %501 = vmatmul.f32.gmra.mxu0 %v373
      %v502 = vpop.f32.mrf.mxu0
      %v503 = vadd.f32 %v343, %v502
      %504 = vmatmul.f32.gmra.mxu0 %v376
      %v505 = vpop.f32.mrf.mxu0
      %v506 = vadd.f32 %v343, %v505
      %507 = vmatmul.f32.gmra.mxu0 %v379
      %v508 = vpop.f32.mrf.mxu0
      %v509 = vadd.f32 %v343, %v508
      %510 = vmatmul.f32.gmra.mxu0 %v382
      %v511 = vpop.f32.mrf.mxu0
      %v512 = vadd.f32 %v343, %v511
      %513 = vmatmul.f32.gmra.mxu0 %v385
      %v514 = vpop.f32.mrf.mxu0
      %v515 = vadd.f32 %v343, %v514
      %516 = vmatmul.f32.gmra.mxu0 %v388
      %v517 = vpop.f32.mrf.mxu0
      %v518 = vadd.f32 %v343, %v517
      %519 = vmatmul.f32.gmra.mxu0 %v391
      %v520 = vpop.f32.mrf.mxu0
      %v521 = vadd.f32 %v343, %v520
      %522 = vmatmul.f32.gmra.mxu0 %v394
      %v523 = vpop.f32.mrf.mxu0
      %v524 = vadd.f32 %v343, %v523
      %525 = vmatmul.f32.gmra.mxu0 %v397
      %v526 = vpop.f32.mrf.mxu0
      %v527 = vadd.f32 %v343, %v526
      %528 = vdwg.mxu0
      %529 = vmatpush.msra.mxu0 0.0
      %530 = vmatpush.msra.mxu0 0.0
      %531 = vmatpush.msra.mxu0 0.0
      %532 = vmatpush.msra.mxu0 0.0
      %533 = vmatpush.msra.mxu0 0.0
      %534 = vmatpush.msra.mxu0 0.0
      %535 = vmatpush.msra.mxu0 0.0
      %536 = vmatpush.msra.mxu0 0.0
      %537 = vmatpush.msra.mxu0 0.0
      %538 = vmatpush.msra.mxu0 0.0
      %539 = vmatpush.msra.mxu0 0.0
      %540 = vmatpush.msra.mxu0 0.0
      %541 = vmatpush.msra.mxu0 0.0
      %542 = vmatpush.msra.mxu0 %v338
      %543 = vmatpush.msra.mxu0 %v334
      %544 = vmatpush.msra.mxu0 %v330
      %545 = vmatmul.f32.gmra.mxu0 %v352
      %v546 = vpop.f32.mrf.mxu0
      %v547 = vadd.f32 %v344, %v546
      %548 = vmatmul.f32.gmra.mxu0 %v355
      %v549 = vpop.f32.mrf.mxu0
      %v550 = vadd.f32 %v344, %v549
      %551 = vmatmul.f32.gmra.mxu0 %v358
      %v552 = vpop.f32.mrf.mxu0
      %v553 = vadd.f32 %v344, %v552
      %554 = vmatmul.f32.gmra.mxu0 %v361
      %v555 = vpop.f32.mrf.mxu0
      %v556 = vadd.f32 %v344, %v555
      %557 = vmatmul.f32.gmra.mxu0 %v364
      %v558 = vpop.f32.mrf.mxu0
      %v559 = vadd.f32 %v344, %v558
      %560 = vmatmul.f32.gmra.mxu0 %v367
      %v561 = vpop.f32.mrf.mxu0
      %v562 = vadd.f32 %v344, %v561
      %563 = vmatmul.f32.gmra.mxu0 %v370
      %v564 = vpop.f32.mrf.mxu0
      %v565 = vadd.f32 %v344, %v564
      %566 = vmatmul.f32.gmra.mxu0 %v373
      %v567 = vpop.f32.mrf.mxu0
      %v568 = vadd.f32 %v344, %v567
      %569 = vmatmul.f32.gmra.mxu0 %v376
      %v570 = vpop.f32.mrf.mxu0
      %v571 = vadd.f32 %v344, %v570
      %572 = vmatmul.f32.gmra.mxu0 %v379
      %v573 = vpop.f32.mrf.mxu0
      %v574 = vadd.f32 %v344, %v573
      %575 = vmatmul.f32.gmra.mxu0 %v382
      %v576 = vpop.f32.mrf.mxu0
      %v577 = vadd.f32 %v344, %v576
      %578 = vmatmul.f32.gmra.mxu0 %v385
      %v579 = vpop.f32.mrf.mxu0
      %v580 = vadd.f32 %v344, %v579
      %581 = vmatmul.f32.gmra.mxu0 %v388
      %v582 = vpop.f32.mrf.mxu0
      %v583 = vadd.f32 %v344, %v582
      %584 = vmatmul.f32.gmra.mxu0 %v391
      %v585 = vpop.f32.mrf.mxu0
      %v586 = vadd.f32 %v344, %v585
      %587 = vmatmul.f32.gmra.mxu0 %v394
      %v588 = vpop.f32.mrf.mxu0
      %v589 = vadd.f32 %v344, %v588
      %590 = vmatmul.f32.gmra.mxu0 %v397
      %v591 = vpop.f32.mrf.mxu0
      %v592 = vadd.f32 %v344, %v591
      %593 = vdwg.mxu0
      %594 = vmatpush.msra.mxu0 0.0
      %595 = vmatpush.msra.mxu0 0.0
      %596 = vmatpush.msra.mxu0 0.0
      %597 = vmatpush.msra.mxu0 0.0
      %598 = vmatpush.msra.mxu0 0.0
      %599 = vmatpush.msra.mxu0 0.0
      %600 = vmatpush.msra.mxu0 0.0
      %601 = vmatpush.msra.mxu0 0.0
      %602 = vmatpush.msra.mxu0 0.0
      %603 = vmatpush.msra.mxu0 0.0
      %604 = vmatpush.msra.mxu0 0.0
      %605 = vmatpush.msra.mxu0 0.0
      %606 = vmatpush.msra.mxu0 0.0
      %607 = vmatpush.msra.mxu0 %v339
      %608 = vmatpush.msra.mxu0 %v335
      %609 = vmatpush.msra.mxu0 %v331
      %610 = vmatmul.f32.gmra.mxu0 %v352
      %v611 = vpop.f32.mrf.mxu0
      %v612 = vadd.f32 %v345, %v611
      %613 = vmatmul.f32.gmra.mxu0 %v355
      %v614 = vpop.f32.mrf.mxu0
      %v615 = vadd.f32 %v345, %v614
      %616 = vmatmul.f32.gmra.mxu0 %v358
      %v617 = vpop.f32.mrf.mxu0
      %v618 = vadd.f32 %v345, %v617
      %619 = vmatmul.f32.gmra.mxu0 %v361
      %v620 = vpop.f32.mrf.mxu0
      %v621 = vadd.f32 %v345, %v620
      %622 = vmatmul.f32.gmra.mxu0 %v364
      %v623 = vpop.f32.mrf.mxu0
      %v624 = vadd.f32 %v345, %v623
      %625 = vmatmul.f32.gmra.mxu0 %v367
      %v626 = vpop.f32.mrf.mxu0
      %v627 = vadd.f32 %v345, %v626
      %628 = vmatmul.f32.gmra.mxu0 %v370
      %v629 = vpop.f32.mrf.mxu0
      %v630 = vadd.f32 %v345, %v629
      %631 = vmatmul.f32.gmra.mxu0 %v373
      %v632 = vpop.f32.mrf.mxu0
      %v633 = vadd.f32 %v345, %v632
      %634 = vmatmul.f32.gmra.mxu0 %v376
      %v635 = vpop.f32.mrf.mxu0
      %v636 = vadd.f32 %v345, %v635
      %637 = vmatmul.f32.gmra.mxu0 %v379
      %v638 = vpop.f32.mrf.mxu0
      %v639 = vadd.f32 %v345, %v638
      %640 = vmatmul.f32.gmra.mxu0 %v382
      %v641 = vpop.f32.mrf.mxu0
      %v642 = vadd.f32 %v345, %v641
      %643 = vmatmul.f32.gmra.mxu0 %v385
      %v644 = vpop.f32.mrf.mxu0
      %v645 = vadd.f32 %v345, %v644
      %646 = vmatmul.f32.gmra.mxu0 %v388
      %v647 = vpop.f32.mrf.mxu0
      %v648 = vadd.f32 %v345, %v647
      %649 = vmatmul.f32.gmra.mxu0 %v391
      %v650 = vpop.f32.mrf.mxu0
      %v651 = vadd.f32 %v345, %v650
      %652 = vmatmul.f32.gmra.mxu0 %v394
      %v653 = vpop.f32.mrf.mxu0
      %v654 = vadd.f32 %v345, %v653
      %655 = vmatmul.f32.gmra.mxu0 %v397
      %v656 = vpop.f32.mrf.mxu0
      %v657 = vadd.f32 %v345, %v656
      %658 = vdwg.mxu0
      %659 = vst [vmem:[#allocation2] sm:$0xff] %v417
      %660 = vst [vmem:[#allocation2 + $0x8] sm:$0xff] %v482
      %661 = vst [vmem:[#allocation2 + $0x10] sm:$0xff] %v547
      %662 = vst [vmem:[#allocation2 + $0x18] sm:$0xff] %v612
      %663 = vst [vmem:[#allocation2 + $0x20] sm:$0xff] %v420
      %664 = vst [vmem:[#allocation2 + $0x28] sm:$0xff] %v485
      %665 = vst [vmem:[#allocation2 + $0x30] sm:$0xff] %v550
      %666 = vst [vmem:[#allocation2 + $0x38] sm:$0xff] %v615
      %667 = vst [vmem:[#allocation2 + $0x40] sm:$0xff] %v423
      %668 = vst [vmem:[#allocation2 + $0x48] sm:$0xff] %v488
      %669 = vst [vmem:[#allocation2 + $0x50] sm:$0xff] %v553
      %670 = vst [vmem:[#allocation2 + $0x58] sm:$0xff] %v618
      %671 = vst [vmem:[#allocation2 + $0x60] sm:$0xff] %v426
      %672 = vst [vmem:[#allocation2 + $0x68] sm:$0xff] %v491
      %673 = vst [vmem:[#allocation2 + $0x70] sm:$0xff] %v556
      %674 = vst [vmem:[#allocation2 + $0x78] sm:$0xff] %v621
      %675 = vst [vmem:[#allocation2 + $0x80] sm:$0xff] %v429
      %676 = vst [vmem:[#allocation2 + $0x88] sm:$0xff] %v494
      %677 = vst [vmem:[#allocation2 + $0x90] sm:$0xff] %v559
      %678 = vst [vmem:[#allocation2 + $0x98] sm:$0xff] %v624
      %679 = vst [vmem:[#allocation2 + $0xa0] sm:$0xff] %v432
      %680 = vst [vmem:[#allocation2 + $0xa8] sm:$0xff] %v497
      %681 = vst [vmem:[#allocation2 + $0xb0] sm:$0xff] %v562
      %682 = vst [vmem:[#allocation2 + $0xb8] sm:$0xff] %v627
      %683 = vst [vmem:[#allocation2 + $0xc0] sm:$0xff] %v435
      %684 = vst [vmem:[#allocation2 + $0xc8] sm:$0xff] %v500
      %685 = vst [vmem:[#allocation2 + $0xd0] sm:$0xff] %v565
      %686 = vst [vmem:[#allocation2 + $0xd8] sm:$0xff] %v630
      %687 = vst [vmem:[#allocation2 + $0xe0] sm:$0xff] %v438
      %688 = vst [vmem:[#allocation2 + $0xe8] sm:$0xff] %v503
      %689 = vst [vmem:[#allocation2 + $0xf0] sm:$0xff] %v568
      %690 = vst [vmem:[#allocation2 + $0xf8] sm:$0xff] %v633
      %691 = vst [vmem:[#allocation2 + $0x100] sm:$0xff] %v441
      %692 = vst [vmem:[#allocation2 + $0x108] sm:$0xff] %v506
      %693 = vst [vmem:[#allocation2 + $0x110] sm:$0xff] %v571
      %694 = vst [vmem:[#allocation2 + $0x118] sm:$0xff] %v636
      %695 = vst [vmem:[#allocation2 + $0x120] sm:$0xff] %v444
      %696 = vst [vmem:[#allocation2 + $0x128] sm:$0xff] %v509
      %697 = vst [vmem:[#allocation2 + $0x130] sm:$0xff] %v574
      %698 = vst [vmem:[#allocation2 + $0x138] sm:$0xff] %v639
      %699 = vst [vmem:[#allocation2 + $0x140] sm:$0xff] %v447
      %700 = vst [vmem:[#allocation2 + $0x148] sm:$0xff] %v512
      %701 = vst [vmem:[#allocation2 + $0x150] sm:$0xff] %v577
      %702 = vst [vmem:[#allocation2 + $0x158] sm:$0xff] %v642
      %703 = vst [vmem:[#allocation2 + $0x160] sm:$0xff] %v450
      %704 = vst [vmem:[#allocation2 + $0x168] sm:$0xff] %v515
      %705 = vst [vmem:[#allocation2 + $0x170] sm:$0xff] %v580
      %706 = vst [vmem:[#allocation2 + $0x178] sm:$0xff] %v645
      %707 = vst [vmem:[#allocation2 + $0x180] sm:$0xff] %v453
      %708 = vst [vmem:[#allocation2 + $0x188] sm:$0xff] %v518
      %709 = vst [vmem:[#allocation2 + $0x190] sm:$0xff] %v583
      %710 = vst [vmem:[#allocation2 + $0x198] sm:$0xff] %v648
      %711 = vst [vmem:[#allocation2 + $0x1a0] sm:$0xff] %v456
      %712 = vst [vmem:[#allocation2 + $0x1a8] sm:$0xff] %v521
      %713 = vst [vmem:[#allocation2 + $0x1b0] sm:$0xff] %v586
      %714 = vst [vmem:[#allocation2 + $0x1b8] sm:$0xff] %v651
      %715 = vst [vmem:[#allocation2 + $0x1c0] sm:$0xff] %v459
      %716 = vst [vmem:[#allocation2 + $0x1c8] sm:$0xff] %v524
      %717 = vst [vmem:[#allocation2 + $0x1d0] sm:$0xff] %v589
      %718 = vst [vmem:[#allocation2 + $0x1d8] sm:$0xff] %v654
      %719 = vst [vmem:[#allocation2 + $0x1e0] sm:$0xff] %v462
      %720 = vst [vmem:[#allocation2 + $0x1e8] sm:$0xff] %v527
      %721 = vst [vmem:[#allocation2 + $0x1f0] sm:$0xff] %v592
      %722 = vst [vmem:[#allocation2 + $0x1f8] sm:$0xff] %v657
      %v723 = vld [vmem:[#allocation3] sm:$0xff]
      %v724 = vld [vmem:[#allocation4] sm:$0xff]
      %s725 = smul.u32 0, 4
      %s726 = smul.addr %s725, 8
      %s727 = scalar_lea.vmem [#allocation2], %s726
      %v728 = vld [vmem:[%s727] sm:$0xff]
      %v729 = vld [vmem:[%s727 + $0x8] sm:$0xff]
      %v730 = vld [vmem:[%s727 + $0x10] sm:$0xff]
      %v731 = vld [vmem:[%s727 + $0x18] sm:$0xff]
      %v732 = vld [vmem:[%s4] sm:$0xff]
      %v733 = vld [vmem:[%s4 + $0x8] sm:$0xff]
      %v734 = vld [vmem:[%s4 + $0x10] sm:$0xff]
      %v735 = vld [vmem:[%s4 + $0x18] sm:$0xff]
      %v736 = vld [vmem:[%s4 + $0x20] sm:$0xff]
      %v737 = vld [vmem:[%s4 + $0x28] sm:$0xff]
      %v738 = vld [vmem:[%s4 + $0x30] sm:$0xff]
      %v739 = vld [vmem:[%s4 + $0x38] sm:$0xff]
      %v740 = vld [vmem:[%s4 + $0x40] sm:$0xff]
      %v741 = vld [vmem:[%s4 + $0x48] sm:$0xff]
      %v742 = vld [vmem:[%s4 + $0x50] sm:$0xff]
      %v743 = vld [vmem:[%s4 + $0x58] sm:$0xff]
      %v744 = vld [vmem:[%s4 + $0x60] sm:$0xff]
      %v745 = vld [vmem:[%s4 + $0x68] sm:$0xff]
      %v746 = vld [vmem:[%s4 + $0x70] sm:$0xff]
      %v747 = vld [vmem:[%s4 + $0x78] sm:$0xff]
      %v748 = vld [vmem:[%s4 + $0x80] sm:$0xff]
      %v749 = vld [vmem:[%s4 + $0x88] sm:$0xff]
      %v750 = vld [vmem:[%s4 + $0x90] sm:$0xff]
      %v751 = vld [vmem:[%s4 + $0x98] sm:$0xff]
      %v752 = vld [vmem:[%s4 + $0xa0] sm:$0xff]
      %v753 = vld [vmem:[%s4 + $0xa8] sm:$0xff]
      %v754 = vld [vmem:[%s4 + $0xb0] sm:$0xff]
      %v755 = vld [vmem:[%s4 + $0xb8] sm:$0xff]
      %v756 = vld [vmem:[%s4 + $0xc0] sm:$0xff]
      %v757 = vld [vmem:[%s4 + $0xc8] sm:$0xff]
      %v758 = vld [vmem:[%s4 + $0xd0] sm:$0xff]
      %v759 = vld [vmem:[%s4 + $0xd8] sm:$0xff]
      %v760 = vld [vmem:[%s4 + $0xe0] sm:$0xff]
      %v761 = vld [vmem:[%s4 + $0xe8] sm:$0xff]
      %v762 = vld [vmem:[%s4 + $0xf0] sm:$0xff]
      %v763 = vld [vmem:[%s4 + $0xf8] sm:$0xff]
      %v764 = vld [vmem:[%s4 + $0x100] sm:$0xff]
      %v765 = vld [vmem:[%s4 + $0x108] sm:$0xff]
      %v766 = vld [vmem:[%s4 + $0x110] sm:$0xff]
      %v767 = vld [vmem:[%s4 + $0x118] sm:$0xff]
      %v768 = vld [vmem:[%s4 + $0x120] sm:$0xff]
      %v769 = vld [vmem:[%s4 + $0x128] sm:$0xff]
      %v770 = vld [vmem:[%s4 + $0x130] sm:$0xff]
      %v771 = vld [vmem:[%s4 + $0x138] sm:$0xff]
      %v772 = vld [vmem:[%s4 + $0x140] sm:$0xff]
      %v773 = vld [vmem:[%s4 + $0x148] sm:$0xff]
      %v774 = vld [vmem:[%s4 + $0x150] sm:$0xff]
      %v775 = vld [vmem:[%s4 + $0x158] sm:$0xff]
      %v776 = vld [vmem:[%s4 + $0x160] sm:$0xff]
      %v777 = vld [vmem:[%s4 + $0x168] sm:$0xff]
      %v778 = vld [vmem:[%s4 + $0x170] sm:$0xff]
      %v779 = vld [vmem:[%s4 + $0x178] sm:$0xff]
      %v780 = vld [vmem:[%s4 + $0x180] sm:$0xff]
      %v781 = vld [vmem:[%s4 + $0x188] sm:$0xff]
      %v782 = vld [vmem:[%s4 + $0x190] sm:$0xff]
      %v783 = vld [vmem:[%s4 + $0x198] sm:$0xff]
      %v784 = vld [vmem:[%s4 + $0x1a0] sm:$0xff]
      %v785 = vld [vmem:[%s4 + $0x1a8] sm:$0xff]
      %v786 = vld [vmem:[%s4 + $0x1b0] sm:$0xff]
      %v787 = vld [vmem:[%s4 + $0x1b8] sm:$0xff]
      %v788 = vld [vmem:[%s4 + $0x1c0] sm:$0xff]
      %v789 = vld [vmem:[%s4 + $0x1c8] sm:$0xff]
      %v790 = vld [vmem:[%s4 + $0x1d0] sm:$0xff]
      %v791 = vld [vmem:[%s4 + $0x1d8] sm:$0xff]
      %v792 = vld [vmem:[%s4 + $0x1e0] sm:$0xff]
      %v793 = vld [vmem:[%s4 + $0x1e8] sm:$0xff]
      %v794 = vld [vmem:[%s4 + $0x1f0] sm:$0xff]
      %v795 = vld [vmem:[%s4 + $0x1f8] sm:$0xff]
      %796 = vmatpush.msra.mxu0 %v792
      %797 = vmatpush.msra.mxu0 %v788
      %798 = vmatpush.msra.mxu0 %v784
      %799 = vmatpush.msra.mxu0 %v780
      %800 = vmatpush.msra.mxu0 %v776
      %801 = vmatpush.msra.mxu0 %v772
      %802 = vmatpush.msra.mxu0 %v768
      %803 = vmatpush.msra.mxu0 %v764
      %804 = vmatpush.msra.mxu0 %v760
      %805 = vmatpush.msra.mxu0 %v756
      %806 = vmatpush.msra.mxu0 %v752
      %807 = vmatpush.msra.mxu0 %v748
      %808 = vmatpush.msra.mxu0 %v744
      %809 = vmatpush.msra.mxu0 %v740
      %810 = vmatpush.msra.mxu0 %v736
      %811 = vmatpush.msra.mxu0 %v732
      %812 = vmatmul.f32.gmra.mxu0 %v723
      %v813 = vpop.f32.mrf.mxu0
      %v814 = vadd.f32 0.0, %v813
      %815 = vdwg.mxu0
      %816 = vmatpush.msra.mxu0 %v793
      %817 = vmatpush.msra.mxu0 %v789
      %818 = vmatpush.msra.mxu0 %v785
      %819 = vmatpush.msra.mxu0 %v781
      %820 = vmatpush.msra.mxu0 %v777
      %821 = vmatpush.msra.mxu0 %v773
      %822 = vmatpush.msra.mxu0 %v769
      %823 = vmatpush.msra.mxu0 %v765
      %824 = vmatpush.msra.mxu0 %v761
      %825 = vmatpush.msra.mxu0 %v757
      %826 = vmatpush.msra.mxu0 %v753
      %827 = vmatpush.msra.mxu0 %v749
      %828 = vmatpush.msra.mxu0 %v745
      %829 = vmatpush.msra.mxu0 %v741
      %830 = vmatpush.msra.mxu0 %v737
      %831 = vmatpush.msra.mxu0 %v733
      %832 = vmatmul.f32.gmra.mxu0 %v723
      %v833 = vpop.f32.mrf.mxu0
      %v834 = vadd.f32 0.0, %v833
      %835 = vdwg.mxu0
      %836 = vmatpush.msra.mxu0 %v794
      %837 = vmatpush.msra.mxu0 %v790
      %838 = vmatpush.msra.mxu0 %v786
      %839 = vmatpush.msra.mxu0 %v782
      %840 = vmatpush.msra.mxu0 %v778
      %841 = vmatpush.msra.mxu0 %v774
      %842 = vmatpush.msra.mxu0 %v770
      %843 = vmatpush.msra.mxu0 %v766
      %844 = vmatpush.msra.mxu0 %v762
      %845 = vmatpush.msra.mxu0 %v758
      %846 = vmatpush.msra.mxu0 %v754
      %847 = vmatpush.msra.mxu0 %v750
      %848 = vmatpush.msra.mxu0 %v746
      %849 = vmatpush.msra.mxu0 %v742
      %850 = vmatpush.msra.mxu0 %v738
      %851 = vmatpush.msra.mxu0 %v734
      %852 = vmatmul.f32.gmra.mxu0 %v723
      %v853 = vpop.f32.mrf.mxu0
      %v854 = vadd.f32 0.0, %v853
      %855 = vdwg.mxu0
      %856 = vmatpush.msra.mxu0 %v795
      %857 = vmatpush.msra.mxu0 %v791
      %858 = vmatpush.msra.mxu0 %v787
      %859 = vmatpush.msra.mxu0 %v783
      %860 = vmatpush.msra.mxu0 %v779
      %861 = vmatpush.msra.mxu0 %v775
      %862 = vmatpush.msra.mxu0 %v771
      %863 = vmatpush.msra.mxu0 %v767
      %864 = vmatpush.msra.mxu0 %v763
      %865 = vmatpush.msra.mxu0 %v759
      %866 = vmatpush.msra.mxu0 %v755
      %867 = vmatpush.msra.mxu0 %v751
      %868 = vmatpush.msra.mxu0 %v747
      %869 = vmatpush.msra.mxu0 %v743
      %870 = vmatpush.msra.mxu0 %v739
      %871 = vmatpush.msra.mxu0 %v735
      %872 = vmatmul.f32.gmra.mxu0 %v723
      %v873 = vpop.f32.mrf.mxu0
      %v874 = vadd.f32 0.0, %v873
      %875 = vdwg.mxu0
      %v876 = vadd.f32 %v728, %v814
      %v877 = vadd.f32 %v729, %v834
      %v878 = vadd.f32 %v730, %v854
      %v879 = vadd.f32 %v731, %v874
      %v880 = vxor.u32 %v876, 2147483648
      %v881 = vmul.f32 %v880, 1.442695
      %v882 = vpow.pop %v881
      %v883 = vadd.f32 %v882, 1.0
      %v884 = vrcp.pop %v883
      %v885 = vmul.f32 %v883, %v884
      %v886 = vsub.f32 1.0, %v885
      %v887 = vmul.f32 %v884, %v886
      %v888 = vadd.f32 %v884, %v887
      %vm889 = vweird.f32 %v883
      %vm890 = vweird.f32 %v884
      %vm891 = vmor %vm889, %vm890
      %v892 = vsel %vm891, %v884, %v888
      %v893 = vand.u32 2147483647, %v883
      %vm894 = vcmp.eq.f32.partialorder %v893, 8.507059e+37
      %v895 = vand.u32 %v883, 2147483648
      %v896 = vor.u32 1.1754944e-38, %v895
      %v897 = vsel %vm894, %v896, %v892
      %v898 = vmul.f32 1.0, %v897
      %v899 = vxor.u32 %v877, 2147483648
      %v900 = vmul.f32 %v899, 1.442695
      %v901 = vpow.pop %v900
      %v902 = vadd.f32 %v901, 1.0
      %v903 = vrcp.pop %v902
      %v904 = vmul.f32 %v902, %v903
      %v905 = vsub.f32 1.0, %v904
      %v906 = vmul.f32 %v903, %v905
      %v907 = vadd.f32 %v903, %v906
      %vm908 = vweird.f32 %v902
      %vm909 = vweird.f32 %v903
      %vm910 = vmor %vm908, %vm909
      %v911 = vsel %vm910, %v903, %v907
      %v912 = vand.u32 2147483647, %v902
      %vm913 = vcmp.eq.f32.partialorder %v912, 8.507059e+37
      %v914 = vand.u32 %v902, 2147483648
      %v915 = vor.u32 1.1754944e-38, %v914
      %v916 = vsel %vm913, %v915, %v911
      %v917 = vmul.f32 1.0, %v916
      %v918 = vtanh.pop %v878
      %v919 = vxor.u32 %v879, 2147483648
      %v920 = vmul.f32 %v919, 1.442695
      %v921 = vpow.pop %v920
      %v922 = vadd.f32 %v921, 1.0
      %v923 = vrcp.pop %v922
      %v924 = vmul.f32 %v922, %v923
      %v925 = vsub.f32 1.0, %v924
      %v926 = vmul.f32 %v923, %v925
      %v927 = vadd.f32 %v923, %v926
      %vm928 = vweird.f32 %v922
      %vm929 = vweird.f32 %v923
      %vm930 = vmor %vm928, %vm929
      %v931 = vsel %vm930, %v923, %v927
      %v932 = vand.u32 2147483647, %v922
      %vm933 = vcmp.eq.f32.partialorder %v932, 8.507059e+37
      %v934 = vand.u32 %v922, 2147483648
      %v935 = vor.u32 1.1754944e-38, %v934
      %v936 = vsel %vm933, %v935, %v931
      %v937 = vmul.f32 1.0, %v936
      %v938 = vmul.f32 %v917, %v724
      %v939 = vmul.f32 %v898, %v918
      %v940 = vadd.f32 %v938, %v939
      %v941 = vtanh.pop %v940
      %v942 = vmul.f32 %v937, %v941
      %943 = vst [vmem:[%s302] sm:$0xff] %v942
      %s944 = smul.u32 %s20, 16
      %p945 = scmp.lt.s32.totalorder %s944, 37
      %s946 = scalar_select %p945, 1, 0
      %v947 = vstv %s946
      %vm948 = vcmp.eq.s32.totalorder %v947, 1
      %v949 = vsel %vm948, %v942, %v723
      %v950 = vsel %vm948, %v940, %v724
      %s951 = smul.u32 1, 4
      %s952 = smul.addr %s951, 8
      %s953 = scalar_lea.vmem [#allocation2], %s952
      %v954 = vld [vmem:[%s953] sm:$0xff]
      %v955 = vld [vmem:[%s953 + $0x8] sm:$0xff]
      %v956 = vld [vmem:[%s953 + $0x10] sm:$0xff]
      %v957 = vld [vmem:[%s953 + $0x18] sm:$0xff]
      %v958 = vld [vmem:[%s4] sm:$0xff]
      %v959 = vld [vmem:[%s4 + $0x8] sm:$0xff]
      %v960 = vld [vmem:[%s4 + $0x10] sm:$0xff]
      %v961 = vld [vmem:[%s4 + $0x18] sm:$0xff]
      %v962 = vld [vmem:[%s4 + $0x20] sm:$0xff]
      %v963 = vld [vmem:[%s4 + $0x28] sm:$0xff]
      %v964 = vld [vmem:[%s4 + $0x30] sm:$0xff]
      %v965 = vld [vmem:[%s4 + $0x38] sm:$0xff]
      %v966 = vld [vmem:[%s4 + $0x40] sm:$0xff]
      %v967 = vld [vmem:[%s4 + $0x48] sm:$0xff]
      %v968 = vld [vmem:[%s4 + $0x50] sm:$0xff]
      %v969 = vld [vmem:[%s4 + $0x58] sm:$0xff]
      %v970 = vld [vmem:[%s4 + $0x60] sm:$0xff]
      %v971 = vld [vmem:[%s4 + $0x68] sm:$0xff]
      %v972 = vld [vmem:[%s4 + $0x70] sm:$0xff]
      %v973 = vld [vmem:[%s4 + $0x78] sm:$0xff]
      %v974 = vld [vmem:[%s4 + $0x80] sm:$0xff]
      %v975 = vld [vmem:[%s4 + $0x88] sm:$0xff]
      %v976 = vld [vmem:[%s4 + $0x90] sm:$0xff]
      %v977 = vld [vmem:[%s4 + $0x98] sm:$0xff]
      %v978 = vld [vmem:[%s4 + $0xa0] sm:$0xff]
      %v979 = vld [vmem:[%s4 + $0xa8] sm:$0xff]
      %v980 = vld [vmem:[%s4 + $0xb0] sm:$0xff]
      %v981 = vld [vmem:[%s4 + $0xb8] sm:$0xff]
      %v982 = vld [vmem:[%s4 + $0xc0] sm:$0xff]
      %v983 = vld [vmem:[%s4 + $0xc8] sm:$0xff]
      %v984 = vld [vmem:[%s4 + $0xd0] sm:$0xff]
      %v985 = vld [vmem:[%s4 + $0xd8] sm:$0xff]
      %v986 = vld [vmem:[%s4 + $0xe0] sm:$0xff]
      %v987 = vld [vmem:[%s4 + $0xe8] sm:$0xff]
      %v988 = vld [vmem:[%s4 + $0xf0] sm:$0xff]
      %v989 = vld [vmem:[%s4 + $0xf8] sm:$0xff]
      %v990 = vld [vmem:[%s4 + $0x100] sm:$0xff]
      %v991 = vld [vmem:[%s4 + $0x108] sm:$0xff]
      %v992 = vld [vmem:[%s4 + $0x110] sm:$0xff]
      %v993 = vld [vmem:[%s4 + $0x118] sm:$0xff]
      %v994 = vld [vmem:[%s4 + $0x120] sm:$0xff]
      %v995 = vld [vmem:[%s4 + $0x128] sm:$0xff]
      %v996 = vld [vmem:[%s4 + $0x130] sm:$0xff]
      %v997 = vld [vmem:[%s4 + $0x138] sm:$0xff]
      %v998 = vld [vmem:[%s4 + $0x140] sm:$0xff]
      %v999 = vld [vmem:[%s4 + $0x148] sm:$0xff]
      %v1000 = vld [vmem:[%s4 + $0x150] sm:$0xff]
      %v1001 = vld [vmem:[%s4 + $0x158] sm:$0xff]
      %v1002 = vld [vmem:[%s4 + $0x160] sm:$0xff]
      %v1003 = vld [vmem:[%s4 + $0x168] sm:$0xff]
      %v1004 = vld [vmem:[%s4 + $0x170] sm:$0xff]
      %v1005 = vld [vmem:[%s4 + $0x178] sm:$0xff]
      %v1006 = vld [vmem:[%s4 + $0x180] sm:$0xff]
      %v1007 = vld [vmem:[%s4 + $0x188] sm:$0xff]
      %v1008 = vld [vmem:[%s4 + $0x190] sm:$0xff]
      %v1009 = vld [vmem:[%s4 + $0x198] sm:$0xff]
      %v1010 = vld [vmem:[%s4 + $0x1a0] sm:$0xff]
      %v1011 = vld [vmem:[%s4 + $0x1a8] sm:$0xff]
      %v1012 = vld [vmem:[%s4 + $0x1b0] sm:$0xff]
      %v1013 = vld [vmem:[%s4 + $0x1b8] sm:$0xff]
      %v1014 = vld [vmem:[%s4 + $0x1c0] sm:$0xff]
      %v1015 = vld [vmem:[%s4 + $0x1c8] sm:$0xff]
      %v1016 = vld [vmem:[%s4 + $0x1d0] sm:$0xff]
      %v1017 = vld [vmem:[%s4 + $0x1d8] sm:$0xff]
      %v1018 = vld [vmem:[%s4 + $0x1e0] sm:$0xff]
      %v1019 = vld [vmem:[%s4 + $0x1e8] sm:$0xff]
      %v1020 = vld [vmem:[%s4 + $0x1f0] sm:$0xff]
      %v1021 = vld [vmem:[%s4 + $0x1f8] sm:$0xff]
      %1022 = vmatpush.msra.mxu0 %v1018
      %1023 = vmatpush.msra.mxu0 %v1014
      %1024 = vmatpush.msra.mxu0 %v1010
      %1025 = vmatpush.msra.mxu0 %v1006
      %1026 = vmatpush.msra.mxu0 %v1002
      %1027 = vmatpush.msra.mxu0 %v998
      %1028 = vmatpush.msra.mxu0 %v994
      %1029 = vmatpush.msra.mxu0 %v990
      %1030 = vmatpush.msra.mxu0 %v986
      %1031 = vmatpush.msra.mxu0 %v982
      %1032 = vmatpush.msra.mxu0 %v978
      %1033 = vmatpush.msra.mxu0 %v974
      %1034 = vmatpush.msra.mxu0 %v970
      %1035 = vmatpush.msra.mxu0 %v966
      %1036 = vmatpush.msra.mxu0 %v962
      %1037 = vmatpush.msra.mxu0 %v958
      %1038 = vmatmul.f32.gmra.mxu0 %v949
      %v1039 = vpop.f32.mrf.mxu0
      %v1040 = vadd.f32 0.0, %v1039
      %1041 = vdwg.mxu0
      %1042 = vmatpush.msra.mxu0 %v1019
      %1043 = vmatpush.msra.mxu0 %v1015
      %1044 = vmatpush.msra.mxu0 %v1011
      %1045 = vmatpush.msra.mxu0 %v1007
      %1046 = vmatpush.msra.mxu0 %v1003
      %1047 = vmatpush.msra.mxu0 %v999
      %1048 = vmatpush.msra.mxu0 %v995
      %1049 = vmatpush.msra.mxu0 %v991
      %1050 = vmatpush.msra.mxu0 %v987
      %1051 = vmatpush.msra.mxu0 %v983
      %1052 = vmatpush.msra.mxu0 %v979
      %1053 = vmatpush.msra.mxu0 %v975
      %1054 = vmatpush.msra.mxu0 %v971
      %1055 = vmatpush.msra.mxu0 %v967
      %1056 = vmatpush.msra.mxu0 %v963
      %1057 = vmatpush.msra.mxu0 %v959
      %1058 = vmatmul.f32.gmra.mxu0 %v949
      %v1059 = vpop.f32.mrf.mxu0
      %v1060 = vadd.f32 0.0, %v1059
      %1061 = vdwg.mxu0
      %1062 = vmatpush.msra.mxu0 %v1020
      %1063 = vmatpush.msra.mxu0 %v1016
      %1064 = vmatpush.msra.mxu0 %v1012
      %1065 = vmatpush.msra.mxu0 %v1008
      %1066 = vmatpush.msra.mxu0 %v1004
      %1067 = vmatpush.msra.mxu0 %v1000
      %1068 = vmatpush.msra.mxu0 %v996
      %1069 = vmatpush.msra.mxu0 %v992
      %1070 = vmatpush.msra.mxu0 %v988
      %1071 = vmatpush.msra.mxu0 %v984
      %1072 = vmatpush.msra.mxu0 %v980
      %1073 = vmatpush.msra.mxu0 %v976
      %1074 = vmatpush.msra.mxu0 %v972
      %1075 = vmatpush.msra.mxu0 %v968
      %1076 = vmatpush.msra.mxu0 %v964
      %1077 = vmatpush.msra.mxu0 %v960
      %1078 = vmatmul.f32.gmra.mxu0 %v949
      %v1079 = vpop.f32.mrf.mxu0
      %v1080 = vadd.f32 0.0, %v1079
      %1081 = vdwg.mxu0
      %1082 = vmatpush.msra.mxu0 %v1021
      %1083 = vmatpush.msra.mxu0 %v1017
      %1084 = vmatpush.msra.mxu0 %v1013
      %1085 = vmatpush.msra.mxu0 %v1009
      %1086 = vmatpush.msra.mxu0 %v1005
      %1087 = vmatpush.msra.mxu0 %v1001
      %1088 = vmatpush.msra.mxu0 %v997
      %1089 = vmatpush.msra.mxu0 %v993
      %1090 = vmatpush.msra.mxu0 %v989
      %1091 = vmatpush.msra.mxu0 %v985
      %1092 = vmatpush.msra.mxu0 %v981
      %1093 = vmatpush.msra.mxu0 %v977
      %1094 = vmatpush.msra.mxu0 %v973
      %1095 = vmatpush.msra.mxu0 %v969
      %1096 = vmatpush.msra.mxu0 %v965
      %1097 = vmatpush.msra.mxu0 %v961
      %1098 = vmatmul.f32.gmra.mxu0 %v949
      %v1099 = vpop.f32.mrf.mxu0
      %v1100 = vadd.f32 0.0, %v1099
      %1101 = vdwg.mxu0
      %v1102 = vadd.f32 %v954, %v1040
      %v1103 = vadd.f32 %v955, %v1060
      %v1104 = vadd.f32 %v956, %v1080
      %v1105 = vadd.f32 %v957, %v1100
      %v1106 = vxor.u32 %v1102, 2147483648
      %v1107 = vmul.f32 %v1106, 1.442695
      %v1108 = vpow.pop %v1107
      %v1109 = vadd.f32 %v1108, 1.0
      %v1110 = vrcp.pop %v1109
      %v1111 = vmul.f32 %v1109, %v1110
      %v1112 = vsub.f32 1.0, %v1111
      %v1113 = vmul.f32 %v1110, %v1112
      %v1114 = vadd.f32 %v1110, %v1113
      %vm1115 = vweird.f32 %v1109
      %vm1116 = vweird.f32 %v1110
      %vm1117 = vmor %vm1115, %vm1116
      %v1118 = vsel %vm1117, %v1110, %v1114
      %v1119 = vand.u32 2147483647, %v1109
      %vm1120 = vcmp.eq.f32.partialorder %v1119, 8.507059e+37
      %v1121 = vand.u32 %v1109, 2147483648
      %v1122 = vor.u32 1.1754944e-38, %v1121
      %v1123 = vsel %vm1120, %v1122, %v1118
      %v1124 = vmul.f32 1.0, %v1123
      %v1125 = vxor.u32 %v1103, 2147483648
      %v1126 = vmul.f32 %v1125, 1.442695
      %v1127 = vpow.pop %v1126
      %v1128 = vadd.f32 %v1127, 1.0
      %v1129 = vrcp.pop %v1128
      %v1130 = vmul.f32 %v1128, %v1129
      %v1131 = vsub.f32 1.0, %v1130
      %v1132 = vmul.f32 %v1129, %v1131
      %v1133 = vadd.f32 %v1129, %v1132
      %vm1134 = vweird.f32 %v1128
      %vm1135 = vweird.f32 %v1129
      %vm1136 = vmor %vm1134, %vm1135
      %v1137 = vsel %vm1136, %v1129, %v1133
      %v1138 = vand.u32 2147483647, %v1128
      %vm1139 = vcmp.eq.f32.partialorder %v1138, 8.507059e+37
      %v1140 = vand.u32 %v1128, 2147483648
      %v1141 = vor.u32 1.1754944e-38, %v1140
      %v1142 = vsel %vm1139, %v1141, %v1137
      %v1143 = vmul.f32 1.0, %v1142
      %v1144 = vtanh.pop %v1104
      %v1145 = vxor.u32 %v1105, 2147483648
      %v1146 = vmul.f32 %v1145, 1.442695
      %v1147 = vpow.pop %v1146
      %v1148 = vadd.f32 %v1147, 1.0
      %v1149 = vrcp.pop %v1148
      %v1150 = vmul.f32 %v1148, %v1149
      %v1151 = vsub.f32 1.0, %v1150
      %v1152 = vmul.f32 %v1149, %v1151
      %v1153 = vadd.f32 %v1149, %v1152
      %vm1154 = vweird.f32 %v1148
      %vm1155 = vweird.f32 %v1149
      %vm1156 = vmor %vm1154, %vm1155
      %v1157 = vsel %vm1156, %v1149, %v1153
      %v1158 = vand.u32 2147483647, %v1148
      %vm1159 = vcmp.eq.f32.partialorder %v1158, 8.507059e+37
      %v1160 = vand.u32 %v1148, 2147483648
      %v1161 = vor.u32 1.1754944e-38, %v1160
      %v1162 = vsel %vm1159, %v1161, %v1157
      %v1163 = vmul.f32 1.0, %v1162
      %v1164 = vmul.f32 %v1143, %v950
      %v1165 = vmul.f32 %v1124, %v1144
      %v1166 = vadd.f32 %v1164, %v1165
      %v1167 = vtanh.pop %v1166
      %v1168 = vmul.f32 %v1163, %v1167
      %s1169 = scalar_lea.vmem %s302, 8
      %1170 = vst [vmem:[%s1169] sm:$0xff] %v1168
      %s1171 = sadd.s32 %s944, 1
      %p1172 = scmp.lt.s32.totalorder %s1171, 37
      %s1173 = scalar_select %p1172, 1, 0
      %v1174 = vstv %s1173
      %vm1175 = vcmp.eq.s32.totalorder %v1174, 1
      %v1176 = vsel %vm1175, %v1168, %v949
      %v1177 = vsel %vm1175, %v1166, %v950
      %s1178 = smul.u32 2, 4
      %s1179 = smul.addr %s1178, 8
      %s1180 = scalar_lea.vmem [#allocation2], %s1179
      %v1181 = vld [vmem:[%s1180] sm:$0xff]
      %v1182 = vld [vmem:[%s1180 + $0x8] sm:$0xff]
      %v1183 = vld [vmem:[%s1180 + $0x10] sm:$0xff]
      %v1184 = vld [vmem:[%s1180 + $0x18] sm:$0xff]
      %v1185 = vld [vmem:[%s4] sm:$0xff]
      %v1186 = vld [vmem:[%s4 + $0x8] sm:$0xff]
      %v1187 = vld [vmem:[%s4 + $0x10] sm:$0xff]
      %v1188 = vld [vmem:[%s4 + $0x18] sm:$0xff]
      %v1189 = vld [vmem:[%s4 + $0x20] sm:$0xff]
      %v1190 = vld [vmem:[%s4 + $0x28] sm:$0xff]
      %v1191 = vld [vmem:[%s4 + $0x30] sm:$0xff]
      %v1192 = vld [vmem:[%s4 + $0x38] sm:$0xff]
      %v1193 = vld [vmem:[%s4 + $0x40] sm:$0xff]
      %v1194 = vld [vmem:[%s4 + $0x48] sm:$0xff]
      %v1195 = vld [vmem:[%s4 + $0x50] sm:$0xff]
      %v1196 = vld [vmem:[%s4 + $0x58] sm:$0xff]
      %v1197 = vld [vmem:[%s4 + $0x60] sm:$0xff]
      %v1198 = vld [vmem:[%s4 + $0x68] sm:$0xff]
      %v1199 = vld [vmem:[%s4 + $0x70] sm:$0xff]
      %v1200 = vld [vmem:[%s4 + $0x78] sm:$0xff]
      %v1201 = vld [vmem:[%s4 + $0x80] sm:$0xff]
      %v1202 = vld [vmem:[%s4 + $0x88] sm:$0xff]
      %v1203 = vld [vmem:[%s4 + $0x90] sm:$0xff]
      %v1204 = vld [vmem:[%s4 + $0x98] sm:$0xff]
      %v1205 = vld [vmem:[%s4 + $0xa0] sm:$0xff]
      %v1206 = vld [vmem:[%s4 + $0xa8] sm:$0xff]
      %v1207 = vld [vmem:[%s4 + $0xb0] sm:$0xff]
      %v1208 = vld [vmem:[%s4 + $0xb8] sm:$0xff]
      %v1209 = vld [vmem:[%s4 + $0xc0] sm:$0xff]
      %v1210 = vld [vmem:[%s4 + $0xc8] sm:$0xff]
      %v1211 = vld [vmem:[%s4 + $0xd0] sm:$0xff]
      %v1212 = vld [vmem:[%s4 + $0xd8] sm:$0xff]
      %v1213 = vld [vmem:[%s4 + $0xe0] sm:$0xff]
      %v1214 = vld [vmem:[%s4 + $0xe8] sm:$0xff]
      %v1215 = vld [vmem:[%s4 + $0xf0] sm:$0xff]
      %v1216 = vld [vmem:[%s4 + $0xf8] sm:$0xff]
      %v1217 = vld [vmem:[%s4 + $0x100] sm:$0xff]
      %v1218 = vld [vmem:[%s4 + $0x108] sm:$0xff]
      %v1219 = vld [vmem:[%s4 + $0x110] sm:$0xff]
      %v1220 = vld [vmem:[%s4 + $0x118] sm:$0xff]
      %v1221 = vld [vmem:[%s4 + $0x120] sm:$0xff]
      %v1222 = vld [vmem:[%s4 + $0x128] sm:$0xff]
      %v1223 = vld [vmem:[%s4 + $0x130] sm:$0xff]
      %v1224 = vld [vmem:[%s4 + $0x138] sm:$0xff]
      %v1225 = vld [vmem:[%s4 + $0x140] sm:$0xff]
      %v1226 = vld [vmem:[%s4 + $0x148] sm:$0xff]
      %v1227 = vld [vmem:[%s4 + $0x150] sm:$0xff]
      %v1228 = vld [vmem:[%s4 + $0x158] sm:$0xff]
      %v1229 = vld [vmem:[%s4 + $0x160] sm:$0xff]
      %v1230 = vld [vmem:[%s4 + $0x168] sm:$0xff]
      %v1231 = vld [vmem:[%s4 + $0x170] sm:$0xff]
      %v1232 = vld [vmem:[%s4 + $0x178] sm:$0xff]
      %v1233 = vld [vmem:[%s4 + $0x180] sm:$0xff]
      %v1234 = vld [vmem:[%s4 + $0x188] sm:$0xff]
      %v1235 = vld [vmem:[%s4 + $0x190] sm:$0xff]
      %v1236 = vld [vmem:[%s4 + $0x198] sm:$0xff]
      %v1237 = vld [vmem:[%s4 + $0x1a0] sm:$0xff]
      %v1238 = vld [vmem:[%s4 + $0x1a8] sm:$0xff]
      %v1239 = vld [vmem:[%s4 + $0x1b0] sm:$0xff]
      %v1240 = vld [vmem:[%s4 + $0x1b8] sm:$0xff]
      %v1241 = vld [vmem:[%s4 + $0x1c0] sm:$0xff]
      %v1242 = vld [vmem:[%s4 + $0x1c8] sm:$0xff]
      %v1243 = vld [vmem:[%s4 + $0x1d0] sm:$0xff]
      %v1244 = vld [vmem:[%s4 + $0x1d8] sm:$0xff]
      %v1245 = vld [vmem:[%s4 + $0x1e0] sm:$0xff]
      %v1246 = vld [vmem:[%s4 + $0x1e8] sm:$0xff]
      %v1247 = vld [vmem:[%s4 + $0x1f0] sm:$0xff]
      %v1248 = vld [vmem:[%s4 + $0x1f8] sm:$0xff]
      %1249 = vmatpush.msra.mxu0 %v1245
      %1250 = vmatpush.msra.mxu0 %v1241
      %1251 = vmatpush.msra.mxu0 %v1237
      %1252 = vmatpush.msra.mxu0 %v1233
      %1253 = vmatpush.msra.mxu0 %v1229
      %1254 = vmatpush.msra.mxu0 %v1225
      %1255 = vmatpush.msra.mxu0 %v1221
      %1256 = vmatpush.msra.mxu0 %v1217
      %1257 = vmatpush.msra.mxu0 %v1213
      %1258 = vmatpush.msra.mxu0 %v1209
      %1259 = vmatpush.msra.mxu0 %v1205
      %1260 = vmatpush.msra.mxu0 %v1201
      %1261 = vmatpush.msra.mxu0 %v1197
      %1262 = vmatpush.msra.mxu0 %v1193
      %1263 = vmatpush.msra.mxu0 %v1189
      %1264 = vmatpush.msra.mxu0 %v1185
      %1265 = vmatmul.f32.gmra.mxu0 %v1176
      %v1266 = vpop.f32.mrf.mxu0
      %v1267 = vadd.f32 0.0, %v1266
      %1268 = vdwg.mxu0
      %1269 = vmatpush.msra.mxu0 %v1246
      %1270 = vmatpush.msra.mxu0 %v1242
      %1271 = vmatpush.msra.mxu0 %v1238
      %1272 = vmatpush.msra.mxu0 %v1234
      %1273 = vmatpush.msra.mxu0 %v1230
      %1274 = vmatpush.msra.mxu0 %v1226
      %1275 = vmatpush.msra.mxu0 %v1222
      %1276 = vmatpush.msra.mxu0 %v1218
      %1277 = vmatpush.msra.mxu0 %v1214
      %1278 = vmatpush.msra.mxu0 %v1210
      %1279 = vmatpush.msra.mxu0 %v1206
      %1280 = vmatpush.msra.mxu0 %v1202
      %1281 = vmatpush.msra.mxu0 %v1198
      %1282 = vmatpush.msra.mxu0 %v1194
      %1283 = vmatpush.msra.mxu0 %v1190
      %1284 = vmatpush.msra.mxu0 %v1186
      %1285 = vmatmul.f32.gmra.mxu0 %v1176
      %v1286 = vpop.f32.mrf.mxu0
      %v1287 = vadd.f32 0.0, %v1286
      %1288 = vdwg.mxu0
      %1289 = vmatpush.msra.mxu0 %v1247
      %1290 = vmatpush.msra.mxu0 %v1243
      %1291 = vmatpush.msra.mxu0 %v1239
      %1292 = vmatpush.msra.mxu0 %v1235
      %1293 = vmatpush.msra.mxu0 %v1231
      %1294 = vmatpush.msra.mxu0 %v1227
      %1295 = vmatpush.msra.mxu0 %v1223
      %1296 = vmatpush.msra.mxu0 %v1219
      %1297 = vmatpush.msra.mxu0 %v1215
      %1298 = vmatpush.msra.mxu0 %v1211
      %1299 = vmatpush.msra.mxu0 %v1207
      %1300 = vmatpush.msra.mxu0 %v1203
      %1301 = vmatpush.msra.mxu0 %v1199
      %1302 = vmatpush.msra.mxu0 %v1195
      %1303 = vmatpush.msra.mxu0 %v1191
      %1304 = vmatpush.msra.mxu0 %v1187
      %1305 = vmatmul.f32.gmra.mxu0 %v1176
      %v1306 = vpop.f32.mrf.mxu0
      %v1307 = vadd.f32 0.0, %v1306
      %1308 = vdwg.mxu0
      %1309 = vmatpush.msra.mxu0 %v1248
      %1310 = vmatpush.msra.mxu0 %v1244
      %1311 = vmatpush.msra.mxu0 %v1240
      %1312 = vmatpush.msra.mxu0 %v1236
      %1313 = vmatpush.msra.mxu0 %v1232
      %1314 = vmatpush.msra.mxu0 %v1228
      %1315 = vmatpush.msra.mxu0 %v1224
      %1316 = vmatpush.msra.mxu0 %v1220
      %1317 = vmatpush.msra.mxu0 %v1216
      %1318 = vmatpush.msra.mxu0 %v1212
      %1319 = vmatpush.msra.mxu0 %v1208
      %1320 = vmatpush.msra.mxu0 %v1204
      %1321 = vmatpush.msra.mxu0 %v1200
      %1322 = vmatpush.msra.mxu0 %v1196
      %1323 = vmatpush.msra.mxu0 %v1192
      %1324 = vmatpush.msra.mxu0 %v1188
      %1325 = vmatmul.f32.gmra.mxu0 %v1176
      %v1326 = vpop.f32.mrf.mxu0
      %v1327 = vadd.f32 0.0, %v1326
      %1328 = vdwg.mxu0
      %v1329 = vadd.f32 %v1181, %v1267
      %v1330 = vadd.f32 %v1182, %v1287
      %v1331 = vadd.f32 %v1183, %v1307
      %v1332 = vadd.f32 %v1184, %v1327
      %v1333 = vxor.u32 %v1329, 2147483648
      %v1334 = vmul.f32 %v1333, 1.442695
      %v1335 = vpow.pop %v1334
      %v1336 = vadd.f32 %v1335, 1.0
      %v1337 = vrcp.pop %v1336
      %v1338 = vmul.f32 %v1336, %v1337
      %v1339 = vsub.f32 1.0, %v1338
      %v1340 = vmul.f32 %v1337, %v1339
      %v1341 = vadd.f32 %v1337, %v1340
      %vm1342 = vweird.f32 %v1336
      %vm1343 = vweird.f32 %v1337
      %vm1344 = vmor %vm1342, %vm1343
      %v1345 = vsel %vm1344, %v1337, %v1341
      %v1346 = vand.u32 2147483647, %v1336
      %vm1347 = vcmp.eq.f32.partialorder %v1346, 8.507059e+37
      %v1348 = vand.u32 %v1336, 2147483648
      %v1349 = vor.u32 1.1754944e-38, %v1348
      %v1350 = vsel %vm1347, %v1349, %v1345
      %v1351 = vmul.f32 1.0, %v1350
      %v1352 = vxor.u32 %v1330, 2147483648
      %v1353 = vmul.f32 %v1352, 1.442695
      %v1354 = vpow.pop %v1353
      %v1355 = vadd.f32 %v1354, 1.0
      %v1356 = vrcp.pop %v1355
      %v1357 = vmul.f32 %v1355, %v1356
      %v1358 = vsub.f32 1.0, %v1357
      %v1359 = vmul.f32 %v1356, %v1358
      %v1360 = vadd.f32 %v1356, %v1359
      %vm1361 = vweird.f32 %v1355
      %vm1362 = vweird.f32 %v1356
      %vm1363 = vmor %vm1361, %vm1362
      %v1364 = vsel %vm1363, %v1356, %v1360
      %v1365 = vand.u32 2147483647, %v1355
      %vm1366 = vcmp.eq.f32.partialorder %v1365, 8.507059e+37
      %v1367 = vand.u32 %v1355, 2147483648
      %v1368 = vor.u32 1.1754944e-38, %v1367
      %v1369 = vsel %vm1366, %v1368, %v1364
      %v1370 = vmul.f32 1.0, %v1369
      %v1371 = vtanh.pop %v1331
      %v1372 = vxor.u32 %v1332, 2147483648
      %v1373 = vmul.f32 %v1372, 1.442695
      %v1374 = vpow.pop %v1373
      %v1375 = vadd.f32 %v1374, 1.0
      %v1376 = vrcp.pop %v1375
      %v1377 = vmul.f32 %v1375, %v1376
      %v1378 = vsub.f32 1.0, %v1377
      %v1379 = vmul.f32 %v1376, %v1378
      %v1380 = vadd.f32 %v1376, %v1379
      %vm1381 = vweird.f32 %v1375
      %vm1382 = vweird.f32 %v1376
      %vm1383 = vmor %vm1381, %vm1382
      %v1384 = vsel %vm1383, %v1376, %v1380
      %v1385 = vand.u32 2147483647, %v1375
      %vm1386 = vcmp.eq.f32.partialorder %v1385, 8.507059e+37
      %v1387 = vand.u32 %v1375, 2147483648
      %v1388 = vor.u32 1.1754944e-38, %v1387
      %v1389 = vsel %vm1386, %v1388, %v1384
      %v1390 = vmul.f32 1.0, %v1389
      %v1391 = vmul.f32 %v1370, %v1177
      %v1392 = vmul.f32 %v1351, %v1371
      %v1393 = vadd.f32 %v1391, %v1392
      %v1394 = vtanh.pop %v1393
      %v1395 = vmul.f32 %v1390, %v1394
      %s1396 = scalar_lea.vmem %s302, 16
      %1397 = vst [vmem:[%s1396] sm:$0xff] %v1395
      %s1398 = sadd.s32 %s944, 2
      %p1399 = scmp.lt.s32.totalorder %s1398, 37
      %s1400 = scalar_select %p1399, 1, 0
      %v1401 = vstv %s1400
      %vm1402 = vcmp.eq.s32.totalorder %v1401, 1
      %v1403 = vsel %vm1402, %v1395, %v1176
      %v1404 = vsel %vm1402, %v1393, %v1177
      %s1405 = smul.u32 3, 4
      %s1406 = smul.addr %s1405, 8
      %s1407 = scalar_lea.vmem [#allocation2], %s1406
      %v1408 = vld [vmem:[%s1407] sm:$0xff]
      %v1409 = vld [vmem:[%s1407 + $0x8] sm:$0xff]
      %v1410 = vld [vmem:[%s1407 + $0x10] sm:$0xff]
      %v1411 = vld [vmem:[%s1407 + $0x18] sm:$0xff]
      %v1412 = vld [vmem:[%s4] sm:$0xff]
      %v1413 = vld [vmem:[%s4 + $0x8] sm:$0xff]
      %v1414 = vld [vmem:[%s4 + $0x10] sm:$0xff]
      %v1415 = vld [vmem:[%s4 + $0x18] sm:$0xff]
      %v1416 = vld [vmem:[%s4 + $0x20] sm:$0xff]
      %v1417 = vld [vmem:[%s4 + $0x28] sm:$0xff]
      %v1418 = vld [vmem:[%s4 + $0x30] sm:$0xff]
      %v1419 = vld [vmem:[%s4 + $0x38] sm:$0xff]
      %v1420 = vld [vmem:[%s4 + $0x40] sm:$0xff]
      %v1421 = vld [vmem:[%s4 + $0x48] sm:$0xff]
      %v1422 = vld [vmem:[%s4 + $0x50] sm:$0xff]
      %v1423 = vld [vmem:[%s4 + $0x58] sm:$0xff]
      %v1424 = vld [vmem:[%s4 + $0x60] sm:$0xff]
      %v1425 = vld [vmem:[%s4 + $0x68] sm:$0xff]
      %v1426 = vld [vmem:[%s4 + $0x70] sm:$0xff]
      %v1427 = vld [vmem:[%s4 + $0x78] sm:$0xff]
      %v1428 = vld [vmem:[%s4 + $0x80] sm:$0xff]
      %v1429 = vld [vmem:[%s4 + $0x88] sm:$0xff]
      %v1430 = vld [vmem:[%s4 + $0x90] sm:$0xff]
      %v1431 = vld [vmem:[%s4 + $0x98] sm:$0xff]
      %v1432 = vld [vmem:[%s4 + $0xa0] sm:$0xff]
      %v1433 = vld [vmem:[%s4 + $0xa8] sm:$0xff]
      %v1434 = vld [vmem:[%s4 + $0xb0] sm:$0xff]
      %v1435 = vld [vmem:[%s4 + $0xb8] sm:$0xff]
      %v1436 = vld [vmem:[%s4 + $0xc0] sm:$0xff]
      %v1437 = vld [vmem:[%s4 + $0xc8] sm:$0xff]
      %v1438 = vld [vmem:[%s4 + $0xd0] sm:$0xff]
      %v1439 = vld [vmem:[%s4 + $0xd8] sm:$0xff]
      %v1440 = vld [vmem:[%s4 + $0xe0] sm:$0xff]
      %v1441 = vld [vmem:[%s4 + $0xe8] sm:$0xff]
      %v1442 = vld [vmem:[%s4 + $0xf0] sm:$0xff]
      %v1443 = vld [vmem:[%s4 + $0xf8] sm:$0xff]
      %v1444 = vld [vmem:[%s4 + $0x100] sm:$0xff]
      %v1445 = vld [vmem:[%s4 + $0x108] sm:$0xff]
      %v1446 = vld [vmem:[%s4 + $0x110] sm:$0xff]
      %v1447 = vld [vmem:[%s4 + $0x118] sm:$0xff]
      %v1448 = vld [vmem:[%s4 + $0x120] sm:$0xff]
      %v1449 = vld [vmem:[%s4 + $0x128] sm:$0xff]
      %v1450 = vld [vmem:[%s4 + $0x130] sm:$0xff]
      %v1451 = vld [vmem:[%s4 + $0x138] sm:$0xff]
      %v1452 = vld [vmem:[%s4 + $0x140] sm:$0xff]
      %v1453 = vld [vmem:[%s4 + $0x148] sm:$0xff]
      %v1454 = vld [vmem:[%s4 + $0x150] sm:$0xff]
      %v1455 = vld [vmem:[%s4 + $0x158] sm:$0xff]
      %v1456 = vld [vmem:[%s4 + $0x160] sm:$0xff]
      %v1457 = vld [vmem:[%s4 + $0x168] sm:$0xff]
      %v1458 = vld [vmem:[%s4 + $0x170] sm:$0xff]
      %v1459 = vld [vmem:[%s4 + $0x178] sm:$0xff]
      %v1460 = vld [vmem:[%s4 + $0x180] sm:$0xff]
      %v1461 = vld [vmem:[%s4 + $0x188] sm:$0xff]
      %v1462 = vld [vmem:[%s4 + $0x190] sm:$0xff]
      %v1463 = vld [vmem:[%s4 + $0x198] sm:$0xff]
      %v1464 = vld [vmem:[%s4 + $0x1a0] sm:$0xff]
      %v1465 = vld [vmem:[%s4 + $0x1a8] sm:$0xff]
      %v1466 = vld [vmem:[%s4 + $0x1b0] sm:$0xff]
      %v1467 = vld [vmem:[%s4 + $0x1b8] sm:$0xff]
      %v1468 = vld [vmem:[%s4 + $0x1c0] sm:$0xff]
      %v1469 = vld [vmem:[%s4 + $0x1c8] sm:$0xff]
      %v1470 = vld [vmem:[%s4 + $0x1d0] sm:$0xff]
      %v1471 = vld [vmem:[%s4 + $0x1d8] sm:$0xff]
      %v1472 = vld [vmem:[%s4 + $0x1e0] sm:$0xff]
      %v1473 = vld [vmem:[%s4 + $0x1e8] sm:$0xff]
      %v1474 = vld [vmem:[%s4 + $0x1f0] sm:$0xff]
      %v1475 = vld [vmem:[%s4 + $0x1f8] sm:$0xff]
      %1476 = vmatpush.msra.mxu0 %v1472
      %1477 = vmatpush.msra.mxu0 %v1468
      %1478 = vmatpush.msra.mxu0 %v1464
      %1479 = vmatpush.msra.mxu0 %v1460
      %1480 = vmatpush.msra.mxu0 %v1456
      %1481 = vmatpush.msra.mxu0 %v1452
      %1482 = vmatpush.msra.mxu0 %v1448
      %1483 = vmatpush.msra.mxu0 %v1444
      %1484 = vmatpush.msra.mxu0 %v1440
      %1485 = vmatpush.msra.mxu0 %v1436
      %1486 = vmatpush.msra.mxu0 %v1432
      %1487 = vmatpush.msra.mxu0 %v1428
      %1488 = vmatpush.msra.mxu0 %v1424
      %1489 = vmatpush.msra.mxu0 %v1420
      %1490 = vmatpush.msra.mxu0 %v1416
      %1491 = vmatpush.msra.mxu0 %v1412
      %1492 = vmatmul.f32.gmra.mxu0 %v1403
      %v1493 = vpop.f32.mrf.mxu0
      %v1494 = vadd.f32 0.0, %v1493
      %1495 = vdwg.mxu0
      %1496 = vmatpush.msra.mxu0 %v1473
      %1497 = vmatpush.msra.mxu0 %v1469
      %1498 = vmatpush.msra.mxu0 %v1465
      %1499 = vmatpush.msra.mxu0 %v1461
      %1500 = vmatpush.msra.mxu0 %v1457
      %1501 = vmatpush.msra.mxu0 %v1453
      %1502 = vmatpush.msra.mxu0 %v1449
      %1503 = vmatpush.msra.mxu0 %v1445
      %1504 = vmatpush.msra.mxu0 %v1441
      %1505 = vmatpush.msra.mxu0 %v1437
      %1506 = vmatpush.msra.mxu0 %v1433
      %1507 = vmatpush.msra.mxu0 %v1429
      %1508 = vmatpush.msra.mxu0 %v1425
      %1509 = vmatpush.msra.mxu0 %v1421
      %1510 = vmatpush.msra.mxu0 %v1417
      %1511 = vmatpush.msra.mxu0 %v1413
      %1512 = vmatmul.f32.gmra.mxu0 %v1403
      %v1513 = vpop.f32.mrf.mxu0
      %v1514 = vadd.f32 0.0, %v1513
      %1515 = vdwg.mxu0
      %1516 = vmatpush.msra.mxu0 %v1474
      %1517 = vmatpush.msra.mxu0 %v1470
      %1518 = vmatpush.msra.mxu0 %v1466
      %1519 = vmatpush.msra.mxu0 %v1462
      %1520 = vmatpush.msra.mxu0 %v1458
      %1521 = vmatpush.msra.mxu0 %v1454
      %1522 = vmatpush.msra.mxu0 %v1450
      %1523 = vmatpush.msra.mxu0 %v1446
      %1524 = vmatpush.msra.mxu0 %v1442
      %1525 = vmatpush.msra.mxu0 %v1438
      %1526 = vmatpush.msra.mxu0 %v1434
      %1527 = vmatpush.msra.mxu0 %v1430
      %1528 = vmatpush.msra.mxu0 %v1426
      %1529 = vmatpush.msra.mxu0 %v1422
      %1530 = vmatpush.msra.mxu0 %v1418
      %1531 = vmatpush.msra.mxu0 %v1414
      %1532 = vmatmul.f32.gmra.mxu0 %v1403
      %v1533 = vpop.f32.mrf.mxu0
      %v1534 = vadd.f32 0.0, %v1533
      %1535 = vdwg.mxu0
      %1536 = vmatpush.msra.mxu0 %v1475
      %1537 = vmatpush.msra.mxu0 %v1471
      %1538 = vmatpush.msra.mxu0 %v1467
      %1539 = vmatpush.msra.mxu0 %v1463
      %1540 = vmatpush.msra.mxu0 %v1459
      %1541 = vmatpush.msra.mxu0 %v1455
      %1542 = vmatpush.msra.mxu0 %v1451
      %1543 = vmatpush.msra.mxu0 %v1447
      %1544 = vmatpush.msra.mxu0 %v1443
      %1545 = vmatpush.msra.mxu0 %v1439
      %1546 = vmatpush.msra.mxu0 %v1435
      %1547 = vmatpush.msra.mxu0 %v1431
      %1548 = vmatpush.msra.mxu0 %v1427
      %1549 = vmatpush.msra.mxu0 %v1423
      %1550 = vmatpush.msra.mxu0 %v1419
      %1551 = vmatpush.msra.mxu0 %v1415
      %1552 = vmatmul.f32.gmra.mxu0 %v1403
      %v1553 = vpop.f32.mrf.mxu0
      %v1554 = vadd.f32 0.0, %v1553
      %1555 = vdwg.mxu0
      %v1556 = vadd.f32 %v1408, %v1494
      %v1557 = vadd.f32 %v1409, %v1514
      %v1558 = vadd.f32 %v1410, %v1534
      %v1559 = vadd.f32 %v1411, %v1554
      %v1560 = vxor.u32 %v1556, 2147483648
      %v1561 = vmul.f32 %v1560, 1.442695
      %v1562 = vpow.pop %v1561
      %v1563 = vadd.f32 %v1562, 1.0
      %v1564 = vrcp.pop %v1563
      %v1565 = vmul.f32 %v1563, %v1564
      %v1566 = vsub.f32 1.0, %v1565
      %v1567 = vmul.f32 %v1564, %v1566
      %v1568 = vadd.f32 %v1564, %v1567
      %vm1569 = vweird.f32 %v1563
      %vm1570 = vweird.f32 %v1564
      %vm1571 = vmor %vm1569, %vm1570
      %v1572 = vsel %vm1571, %v1564, %v1568
      %v1573 = vand.u32 2147483647, %v1563
      %vm1574 = vcmp.eq.f32.partialorder %v1573, 8.507059e+37
      %v1575 = vand.u32 %v1563, 2147483648
      %v1576 = vor.u32 1.1754944e-38, %v1575
      %v1577 = vsel %vm1574, %v1576, %v1572
      %v1578 = vmul.f32 1.0, %v1577
      %v1579 = vxor.u32 %v1557, 2147483648
      %v1580 = vmul.f32 %v1579, 1.442695
      %v1581 = vpow.pop %v1580
      %v1582 = vadd.f32 %v1581, 1.0
      %v1583 = vrcp.pop %v1582
      %v1584 = vmul.f32 %v1582, %v1583
      %v1585 = vsub.f32 1.0, %v1584
      %v1586 = vmul.f32 %v1583, %v1585
      %v1587 = vadd.f32 %v1583, %v1586
      %vm1588 = vweird.f32 %v1582
      %vm1589 = vweird.f32 %v1583
      %vm1590 = vmor %vm1588, %vm1589
      %v1591 = vsel %vm1590, %v1583, %v1587
      %v1592 = vand.u32 2147483647, %v1582
      %vm1593 = vcmp.eq.f32.partialorder %v1592, 8.507059e+37
      %v1594 = vand.u32 %v1582, 2147483648
      %v1595 = vor.u32 1.1754944e-38, %v1594
      %v1596 = vsel %vm1593, %v1595, %v1591
      %v1597 = vmul.f32 1.0, %v1596
      %v1598 = vtanh.pop %v1558
      %v1599 = vxor.u32 %v1559, 2147483648
      %v1600 = vmul.f32 %v1599, 1.442695
      %v1601 = vpow.pop %v1600
      %v1602 = vadd.f32 %v1601, 1.0
      %v1603 = vrcp.pop %v1602
      %v1604 = vmul.f32 %v1602, %v1603
      %v1605 = vsub.f32 1.0, %v1604
      %v1606 = vmul.f32 %v1603, %v1605
      %v1607 = vadd.f32 %v1603, %v1606
      %vm1608 = vweird.f32 %v1602
      %vm1609 = vweird.f32 %v1603
      %vm1610 = vmor %vm1608, %vm1609
      %v1611 = vsel %vm1610, %v1603, %v1607
      %v1612 = vand.u32 2147483647, %v1602
      %vm1613 = vcmp.eq.f32.partialorder %v1612, 8.507059e+37
      %v1614 = vand.u32 %v1602, 2147483648
      %v1615 = vor.u32 1.1754944e-38, %v1614
      %v1616 = vsel %vm1613, %v1615, %v1611
      %v1617 = vmul.f32 1.0, %v1616
      %v1618 = vmul.f32 %v1597, %v1404
      %v1619 = vmul.f32 %v1578, %v1598
      %v1620 = vadd.f32 %v1618, %v1619
      %v1621 = vtanh.pop %v1620
      %v1622 = vmul.f32 %v1617, %v1621
      %s1623 = scalar_lea.vmem %s302, 24
      %1624 = vst [vmem:[%s1623] sm:$0xff] %v1622
      %s1625 = sadd.s32 %s944, 3
      %p1626 = scmp.lt.s32.totalorder %s1625, 37
      %s1627 = scalar_select %p1626, 1, 0
      %v1628 = vstv %s1627
      %vm1629 = vcmp.eq.s32.totalorder %v1628, 1
      %v1630 = vsel %vm1629, %v1622, %v1403
      %v1631 = vsel %vm1629, %v1620, %v1404
      %s1632 = smul.u32 4, 4
      %s1633 = smul.addr %s1632, 8
      %s1634 = scalar_lea.vmem [#allocation2], %s1633
      %v1635 = vld [vmem:[%s1634] sm:$0xff]
      %v1636 = vld [vmem:[%s1634 + $0x8] sm:$0xff]
      %v1637 = vld [vmem:[%s1634 + $0x10] sm:$0xff]
      %v1638 = vld [vmem:[%s1634 + $0x18] sm:$0xff]
      %v1639 = vld [vmem:[%s4] sm:$0xff]
      %v1640 = vld [vmem:[%s4 + $0x8] sm:$0xff]
      %v1641 = vld [vmem:[%s4 + $0x10] sm:$0xff]
      %v1642 = vld [vmem:[%s4 + $0x18] sm:$0xff]
      %v1643 = vld [vmem:[%s4 + $0x20] sm:$0xff]
      %v1644 = vld [vmem:[%s4 + $0x28] sm:$0xff]
      %v1645 = vld [vmem:[%s4 + $0x30] sm:$0xff]
      %v1646 = vld [vmem:[%s4 + $0x38] sm:$0xff]
      %v1647 = vld [vmem:[%s4 + $0x40] sm:$0xff]
      %v1648 = vld [vmem:[%s4 + $0x48] sm:$0xff]
      %v1649 = vld [vmem:[%s4 + $0x50] sm:$0xff]
      %v1650 = vld [vmem:[%s4 + $0x58] sm:$0xff]
      %v1651 = vld [vmem:[%s4 + $0x60] sm:$0xff]
      %v1652 = vld [vmem:[%s4 + $0x68] sm:$0xff]
      %v1653 = vld [vmem:[%s4 + $0x70] sm:$0xff]
      %v1654 = vld [vmem:[%s4 + $0x78] sm:$0xff]
      %v1655 = vld [vmem:[%s4 + $0x80] sm:$0xff]
      %v1656 = vld [vmem:[%s4 + $0x88] sm:$0xff]
      %v1657 = vld [vmem:[%s4 + $0x90] sm:$0xff]
      %v1658 = vld [vmem:[%s4 + $0x98] sm:$0xff]
      %v1659 = vld [vmem:[%s4 + $0xa0] sm:$0xff]
      %v1660 = vld [vmem:[%s4 + $0xa8] sm:$0xff]
      %v1661 = vld [vmem:[%s4 + $0xb0] sm:$0xff]
      %v1662 = vld [vmem:[%s4 + $0xb8] sm:$0xff]
      %v1663 = vld [vmem:[%s4 + $0xc0] sm:$0xff]
      %v1664 = vld [vmem:[%s4 + $0xc8] sm:$0xff]
      %v1665 = vld [vmem:[%s4 + $0xd0] sm:$0xff]
      %v1666 = vld [vmem:[%s4 + $0xd8] sm:$0xff]
      %v1667 = vld [vmem:[%s4 + $0xe0] sm:$0xff]
      %v1668 = vld [vmem:[%s4 + $0xe8] sm:$0xff]
      %v1669 = vld [vmem:[%s4 + $0xf0] sm:$0xff]
      %v1670 = vld [vmem:[%s4 + $0xf8] sm:$0xff]
      %v1671 = vld [vmem:[%s4 + $0x100] sm:$0xff]
      %v1672 = vld [vmem:[%s4 + $0x108] sm:$0xff]
      %v1673 = vld [vmem:[%s4 + $0x110] sm:$0xff]
      %v1674 = vld [vmem:[%s4 + $0x118] sm:$0xff]
      %v1675 = vld [vmem:[%s4 + $0x120] sm:$0xff]
      %v1676 = vld [vmem:[%s4 + $0x128] sm:$0xff]
      %v1677 = vld [vmem:[%s4 + $0x130] sm:$0xff]
      %v1678 = vld [vmem:[%s4 + $0x138] sm:$0xff]
      %v1679 = vld [vmem:[%s4 + $0x140] sm:$0xff]
      %v1680 = vld [vmem:[%s4 + $0x148] sm:$0xff]
      %v1681 = vld [vmem:[%s4 + $0x150] sm:$0xff]
      %v1682 = vld [vmem:[%s4 + $0x158] sm:$0xff]
      %v1683 = vld [vmem:[%s4 + $0x160] sm:$0xff]
      %v1684 = vld [vmem:[%s4 + $0x168] sm:$0xff]
      %v1685 = vld [vmem:[%s4 + $0x170] sm:$0xff]
      %v1686 = vld [vmem:[%s4 + $0x178] sm:$0xff]
      %v1687 = vld [vmem:[%s4 + $0x180] sm:$0xff]
      %v1688 = vld [vmem:[%s4 + $0x188] sm:$0xff]
      %v1689 = vld [vmem:[%s4 + $0x190] sm:$0xff]
      %v1690 = vld [vmem:[%s4 + $0x198] sm:$0xff]
      %v1691 = vld [vmem:[%s4 + $0x1a0] sm:$0xff]
      %v1692 = vld [vmem:[%s4 + $0x1a8] sm:$0xff]
      %v1693 = vld [vmem:[%s4 + $0x1b0] sm:$0xff]
      %v1694 = vld [vmem:[%s4 + $0x1b8] sm:$0xff]
      %v1695 = vld [vmem:[%s4 + $0x1c0] sm:$0xff]
      %v1696 = vld [vmem:[%s4 + $0x1c8] sm:$0xff]
      %v1697 = vld [vmem:[%s4 + $0x1d0] sm:$0xff]
      %v1698 = vld [vmem:[%s4 + $0x1d8] sm:$0xff]
      %v1699 = vld [vmem:[%s4 + $0x1e0] sm:$0xff]
      %v1700 = vld [vmem:[%s4 + $0x1e8] sm:$0xff]
      %v1701 = vld [vmem:[%s4 + $0x1f0] sm:$0xff]
      %v1702 = vld [vmem:[%s4 + $0x1f8] sm:$0xff]
      %1703 = vmatpush.msra.mxu0 %v1699
      %1704 = vmatpush.msra.mxu0 %v1695
      %1705 = vmatpush.msra.mxu0 %v1691
      %1706 = vmatpush.msra.mxu0 %v1687
      %1707 = vmatpush.msra.mxu0 %v1683
      %1708 = vmatpush.msra.mxu0 %v1679
      %1709 = vmatpush.msra.mxu0 %v1675
      %1710 = vmatpush.msra.mxu0 %v1671
      %1711 = vmatpush.msra.mxu0 %v1667
      %1712 = vmatpush.msra.mxu0 %v1663
      %1713 = vmatpush.msra.mxu0 %v1659
      %1714 = vmatpush.msra.mxu0 %v1655
      %1715 = vmatpush.msra.mxu0 %v1651
      %1716 = vmatpush.msra.mxu0 %v1647
      %1717 = vmatpush.msra.mxu0 %v1643
      %1718 = vmatpush.msra.mxu0 %v1639
      %1719 = vmatmul.f32.gmra.mxu0 %v1630
      %v1720 = vpop.f32.mrf.mxu0
      %v1721 = vadd.f32 0.0, %v1720
      %1722 = vdwg.mxu0
      %1723 = vmatpush.msra.mxu0 %v1700
      %1724 = vmatpush.msra.mxu0 %v1696
      %1725 = vmatpush.msra.mxu0 %v1692
      %1726 = vmatpush.msra.mxu0 %v1688
      %1727 = vmatpush.msra.mxu0 %v1684
      %1728 = vmatpush.msra.mxu0 %v1680
      %1729 = vmatpush.msra.mxu0 %v1676
      %1730 = vmatpush.msra.mxu0 %v1672
      %1731 = vmatpush.msra.mxu0 %v1668
      %1732 = vmatpush.msra.mxu0 %v1664
      %1733 = vmatpush.msra.mxu0 %v1660
      %1734 = vmatpush.msra.mxu0 %v1656
      %1735 = vmatpush.msra.mxu0 %v1652
      %1736 = vmatpush.msra.mxu0 %v1648
      %1737 = vmatpush.msra.mxu0 %v1644
      %1738 = vmatpush.msra.mxu0 %v1640
      %1739 = vmatmul.f32.gmra.mxu0 %v1630
      %v1740 = vpop.f32.mrf.mxu0
      %v1741 = vadd.f32 0.0, %v1740
      %1742 = vdwg.mxu0
      %1743 = vmatpush.msra.mxu0 %v1701
      %1744 = vmatpush.msra.mxu0 %v1697
      %1745 = vmatpush.msra.mxu0 %v1693
      %1746 = vmatpush.msra.mxu0 %v1689
      %1747 = vmatpush.msra.mxu0 %v1685
      %1748 = vmatpush.msra.mxu0 %v1681
      %1749 = vmatpush.msra.mxu0 %v1677
      %1750 = vmatpush.msra.mxu0 %v1673
      %1751 = vmatpush.msra.mxu0 %v1669
      %1752 = vmatpush.msra.mxu0 %v1665
      %1753 = vmatpush.msra.mxu0 %v1661
      %1754 = vmatpush.msra.mxu0 %v1657
      %1755 = vmatpush.msra.mxu0 %v1653
      %1756 = vmatpush.msra.mxu0 %v1649
      %1757 = vmatpush.msra.mxu0 %v1645
      %1758 = vmatpush.msra.mxu0 %v1641
      %1759 = vmatmul.f32.gmra.mxu0 %v1630
      %v1760 = vpop.f32.mrf.mxu0
      %v1761 = vadd.f32 0.0, %v1760
      %1762 = vdwg.mxu0
      %1763 = vmatpush.msra.mxu0 %v1702
      %1764 = vmatpush.msra.mxu0 %v1698
      %1765 = vmatpush.msra.mxu0 %v1694
      %1766 = vmatpush.msra.mxu0 %v1690
      %1767 = vmatpush.msra.mxu0 %v1686
      %1768 = vmatpush.msra.mxu0 %v1682
      %1769 = vmatpush.msra.mxu0 %v1678
      %1770 = vmatpush.msra.mxu0 %v1674
      %1771 = vmatpush.msra.mxu0 %v1670
      %1772 = vmatpush.msra.mxu0 %v1666
      %1773 = vmatpush.msra.mxu0 %v1662
      %1774 = vmatpush.msra.mxu0 %v1658
      %1775 = vmatpush.msra.mxu0 %v1654
      %1776 = vmatpush.msra.mxu0 %v1650
      %1777 = vmatpush.msra.mxu0 %v1646
      %1778 = vmatpush.msra.mxu0 %v1642
      %1779 = vmatmul.f32.gmra.mxu0 %v1630
      %v1780 = vpop.f32.mrf.mxu0
      %v1781 = vadd.f32 0.0, %v1780
      %1782 = vdwg.mxu0
      %v1783 = vadd.f32 %v1635, %v1721
      %v1784 = vadd.f32 %v1636, %v1741
      %v1785 = vadd.f32 %v1637, %v1761
      %v1786 = vadd.f32 %v1638, %v1781
      %v1787 = vxor.u32 %v1783, 2147483648
      %v1788 = vmul.f32 %v1787, 1.442695
      %v1789 = vpow.pop %v1788
      %v1790 = vadd.f32 %v1789, 1.0
      %v1791 = vrcp.pop %v1790
      %v1792 = vmul.f32 %v1790, %v1791
      %v1793 = vsub.f32 1.0, %v1792
      %v1794 = vmul.f32 %v1791, %v1793
      %v1795 = vadd.f32 %v1791, %v1794
      %vm1796 = vweird.f32 %v1790
      %vm1797 = vweird.f32 %v1791
      %vm1798 = vmor %vm1796, %vm1797
      %v1799 = vsel %vm1798, %v1791, %v1795
      %v1800 = vand.u32 2147483647, %v1790
      %vm1801 = vcmp.eq.f32.partialorder %v1800, 8.507059e+37
      %v1802 = vand.u32 %v1790, 2147483648
      %v1803 = vor.u32 1.1754944e-38, %v1802
      %v1804 = vsel %vm1801, %v1803, %v1799
      %v1805 = vmul.f32 1.0, %v1804
      %v1806 = vxor.u32 %v1784, 2147483648
      %v1807 = vmul.f32 %v1806, 1.442695
      %v1808 = vpow.pop %v1807
      %v1809 = vadd.f32 %v1808, 1.0
      %v1810 = vrcp.pop %v1809
      %v1811 = vmul.f32 %v1809, %v1810
      %v1812 = vsub.f32 1.0, %v1811
      %v1813 = vmul.f32 %v1810, %v1812
      %v1814 = vadd.f32 %v1810, %v1813
      %vm1815 = vweird.f32 %v1809
      %vm1816 = vweird.f32 %v1810
      %vm1817 = vmor %vm1815, %vm1816
      %v1818 = vsel %vm1817, %v1810, %v1814
      %v1819 = vand.u32 2147483647, %v1809
      %vm1820 = vcmp.eq.f32.partialorder %v1819, 8.507059e+37
      %v1821 = vand.u32 %v1809, 2147483648
      %v1822 = vor.u32 1.1754944e-38, %v1821
      %v1823 = vsel %vm1820, %v1822, %v1818
      %v1824 = vmul.f32 1.0, %v1823
      %v1825 = vtanh.pop %v1785
      %v1826 = vxor.u32 %v1786, 2147483648
      %v1827 = vmul.f32 %v1826, 1.442695
      %v1828 = vpow.pop %v1827
      %v1829 = vadd.f32 %v1828, 1.0
      %v1830 = vrcp.pop %v1829
      %v1831 = vmul.f32 %v1829, %v1830
      %v1832 = vsub.f32 1.0, %v1831
      %v1833 = vmul.f32 %v1830, %v1832
      %v1834 = vadd.f32 %v1830, %v1833
      %vm1835 = vweird.f32 %v1829
      %vm1836 = vweird.f32 %v1830
      %vm1837 = vmor %vm1835, %vm1836
      %v1838 = vsel %vm1837, %v1830, %v1834
      %v1839 = vand.u32 2147483647, %v1829
      %vm1840 = vcmp.eq.f32.partialorder %v1839, 8.507059e+37
      %v1841 = vand.u32 %v1829, 2147483648
      %v1842 = vor.u32 1.1754944e-38, %v1841
      %v1843 = vsel %vm1840, %v1842, %v1838
      %v1844 = vmul.f32 1.0, %v1843
      %v1845 = vmul.f32 %v1824, %v1631
      %v1846 = vmul.f32 %v1805, %v1825
      %v1847 = vadd.f32 %v1845, %v1846
      %v1848 = vtanh.pop %v1847
      %v1849 = vmul.f32 %v1844, %v1848
      %s1850 = scalar_lea.vmem %s302, 32
      %1851 = vst [vmem:[%s1850] sm:$0xff] %v1849
      %s1852 = sadd.s32 %s944, 4
      %p1853 = scmp.lt.s32.totalorder %s1852, 37
      %s1854 = scalar_select %p1853, 1, 0
      %v1855 = vstv %s1854
      %vm1856 = vcmp.eq.s32.totalorder %v1855, 1
      %v1857 = vsel %vm1856, %v1849, %v1630
      %v1858 = vsel %vm1856, %v1847, %v1631
      %s1859 = smul.u32 5, 4
      %s1860 = smul.addr %s1859, 8
      %s1861 = scalar_lea.vmem [#allocation2], %s1860
      %v1862 = vld [vmem:[%s1861] sm:$0xff]
      %v1863 = vld [vmem:[%s1861 + $0x8] sm:$0xff]
      %v1864 = vld [vmem:[%s1861 + $0x10] sm:$0xff]
      %v1865 = vld [vmem:[%s1861 + $0x18] sm:$0xff]
      %v1866 = vld [vmem:[%s4] sm:$0xff]
      %v1867 = vld [vmem:[%s4 + $0x8] sm:$0xff]
      %v1868 = vld [vmem:[%s4 + $0x10] sm:$0xff]
      %v1869 = vld [vmem:[%s4 + $0x18] sm:$0xff]
      %v1870 = vld [vmem:[%s4 + $0x20] sm:$0xff]
      %v1871 = vld [vmem:[%s4 + $0x28] sm:$0xff]
      %v1872 = vld [vmem:[%s4 + $0x30] sm:$0xff]
      %v1873 = vld [vmem:[%s4 + $0x38] sm:$0xff]
      %v1874 = vld [vmem:[%s4 + $0x40] sm:$0xff]
      %v1875 = vld [vmem:[%s4 + $0x48] sm:$0xff]
      %v1876 = vld [vmem:[%s4 + $0x50] sm:$0xff]
      %v1877 = vld [vmem:[%s4 + $0x58] sm:$0xff]
      %v1878 = vld [vmem:[%s4 + $0x60] sm:$0xff]
      %v1879 = vld [vmem:[%s4 + $0x68] sm:$0xff]
      %v1880 = vld [vmem:[%s4 + $0x70] sm:$0xff]
      %v1881 = vld [vmem:[%s4 + $0x78] sm:$0xff]
      %v1882 = vld [vmem:[%s4 + $0x80] sm:$0xff]
      %v1883 = vld [vmem:[%s4 + $0x88] sm:$0xff]
      %v1884 = vld [vmem:[%s4 + $0x90] sm:$0xff]
      %v1885 = vld [vmem:[%s4 + $0x98] sm:$0xff]
      %v1886 = vld [vmem:[%s4 + $0xa0] sm:$0xff]
      %v1887 = vld [vmem:[%s4 + $0xa8] sm:$0xff]
      %v1888 = vld [vmem:[%s4 + $0xb0] sm:$0xff]
      %v1889 = vld [vmem:[%s4 + $0xb8] sm:$0xff]
      %v1890 = vld [vmem:[%s4 + $0xc0] sm:$0xff]
      %v1891 = vld [vmem:[%s4 + $0xc8] sm:$0xff]
      %v1892 = vld [vmem:[%s4 + $0xd0] sm:$0xff]
      %v1893 = vld [vmem:[%s4 + $0xd8] sm:$0xff]
      %v1894 = vld [vmem:[%s4 + $0xe0] sm:$0xff]
      %v1895 = vld [vmem:[%s4 + $0xe8] sm:$0xff]
      %v1896 = vld [vmem:[%s4 + $0xf0] sm:$0xff]
      %v1897 = vld [vmem:[%s4 + $0xf8] sm:$0xff]
      %v1898 = vld [vmem:[%s4 + $0x100] sm:$0xff]
      %v1899 = vld [vmem:[%s4 + $0x108] sm:$0xff]
      %v1900 = vld [vmem:[%s4 + $0x110] sm:$0xff]
      %v1901 = vld [vmem:[%s4 + $0x118] sm:$0xff]
      %v1902 = vld [vmem:[%s4 + $0x120] sm:$0xff]
      %v1903 = vld [vmem:[%s4 + $0x128] sm:$0xff]
      %v1904 = vld [vmem:[%s4 + $0x130] sm:$0xff]
      %v1905 = vld [vmem:[%s4 + $0x138] sm:$0xff]
      %v1906 = vld [vmem:[%s4 + $0x140] sm:$0xff]
      %v1907 = vld [vmem:[%s4 + $0x148] sm:$0xff]
      %v1908 = vld [vmem:[%s4 + $0x150] sm:$0xff]
      %v1909 = vld [vmem:[%s4 + $0x158] sm:$0xff]
      %v1910 = vld [vmem:[%s4 + $0x160] sm:$0xff]
      %v1911 = vld [vmem:[%s4 + $0x168] sm:$0xff]
      %v1912 = vld [vmem:[%s4 + $0x170] sm:$0xff]
      %v1913 = vld [vmem:[%s4 + $0x178] sm:$0xff]
      %v1914 = vld [vmem:[%s4 + $0x180] sm:$0xff]
      %v1915 = vld [vmem:[%s4 + $0x188] sm:$0xff]
      %v1916 = vld [vmem:[%s4 + $0x190] sm:$0xff]
      %v1917 = vld [vmem:[%s4 + $0x198] sm:$0xff]
      %v1918 = vld [vmem:[%s4 + $0x1a0] sm:$0xff]
      %v1919 = vld [vmem:[%s4 + $0x1a8] sm:$0xff]
      %v1920 = vld [vmem:[%s4 + $0x1b0] sm:$0xff]
      %v1921 = vld [vmem:[%s4 + $0x1b8] sm:$0xff]
      %v1922 = vld [vmem:[%s4 + $0x1c0] sm:$0xff]
      %v1923 = vld [vmem:[%s4 + $0x1c8] sm:$0xff]
      %v1924 = vld [vmem:[%s4 + $0x1d0] sm:$0xff]
      %v1925 = vld [vmem:[%s4 + $0x1d8] sm:$0xff]
      %v1926 = vld [vmem:[%s4 + $0x1e0] sm:$0xff]
      %v1927 = vld [vmem:[%s4 + $0x1e8] sm:$0xff]
      %v1928 = vld [vmem:[%s4 + $0x1f0] sm:$0xff]
      %v1929 = vld [vmem:[%s4 + $0x1f8] sm:$0xff]
      %1930 = vmatpush.msra.mxu0 %v1926
      %1931 = vmatpush.msra.mxu0 %v1922
      %1932 = vmatpush.msra.mxu0 %v1918
      %1933 = vmatpush.msra.mxu0 %v1914
      %1934 = vmatpush.msra.mxu0 %v1910
      %1935 = vmatpush.msra.mxu0 %v1906
      %1936 = vmatpush.msra.mxu0 %v1902
      %1937 = vmatpush.msra.mxu0 %v1898
      %1938 = vmatpush.msra.mxu0 %v1894
      %1939 = vmatpush.msra.mxu0 %v1890
      %1940 = vmatpush.msra.mxu0 %v1886
      %1941 = vmatpush.msra.mxu0 %v1882
      %1942 = vmatpush.msra.mxu0 %v1878
      %1943 = vmatpush.msra.mxu0 %v1874
      %1944 = vmatpush.msra.mxu0 %v1870
      %1945 = vmatpush.msra.mxu0 %v1866
      %1946 = vmatmul.f32.gmra.mxu0 %v1857
      %v1947 = vpop.f32.mrf.mxu0
      %v1948 = vadd.f32 0.0, %v1947
      %1949 = vdwg.mxu0
      %1950 = vmatpush.msra.mxu0 %v1927
      %1951 = vmatpush.msra.mxu0 %v1923
      %1952 = vmatpush.msra.mxu0 %v1919
      %1953 = vmatpush.msra.mxu0 %v1915
      %1954 = vmatpush.msra.mxu0 %v1911
      %1955 = vmatpush.msra.mxu0 %v1907
      %1956 = vmatpush.msra.mxu0 %v1903
      %1957 = vmatpush.msra.mxu0 %v1899
      %1958 = vmatpush.msra.mxu0 %v1895
      %1959 = vmatpush.msra.mxu0 %v1891
      %1960 = vmatpush.msra.mxu0 %v1887
      %1961 = vmatpush.msra.mxu0 %v1883
      %1962 = vmatpush.msra.mxu0 %v1879
      %1963 = vmatpush.msra.mxu0 %v1875
      %1964 = vmatpush.msra.mxu0 %v1871
      %1965 = vmatpush.msra.mxu0 %v1867
      %1966 = vmatmul.f32.gmra.mxu0 %v1857
      %v1967 = vpop.f32.mrf.mxu0
      %v1968 = vadd.f32 0.0, %v1967
      %1969 = vdwg.mxu0
      %1970 = vmatpush.msra.mxu0 %v1928
      %1971 = vmatpush.msra.mxu0 %v1924
      %1972 = vmatpush.msra.mxu0 %v1920
      %1973 = vmatpush.msra.mxu0 %v1916
      %1974 = vmatpush.msra.mxu0 %v1912
      %1975 = vmatpush.msra.mxu0 %v1908
      %1976 = vmatpush.msra.mxu0 %v1904
      %1977 = vmatpush.msra.mxu0 %v1900
      %1978 = vmatpush.msra.mxu0 %v1896
      %1979 = vmatpush.msra.mxu0 %v1892
      %1980 = vmatpush.msra.mxu0 %v1888
      %1981 = vmatpush.msra.mxu0 %v1884
      %1982 = vmatpush.msra.mxu0 %v1880
      %1983 = vmatpush.msra.mxu0 %v1876
      %1984 = vmatpush.msra.mxu0 %v1872
      %1985 = vmatpush.msra.mxu0 %v1868
      %1986 = vmatmul.f32.gmra.mxu0 %v1857
      %v1987 = vpop.f32.mrf.mxu0
      %v1988 = vadd.f32 0.0, %v1987
      %1989 = vdwg.mxu0
      %1990 = vmatpush.msra.mxu0 %v1929
      %1991 = vmatpush.msra.mxu0 %v1925
      %1992 = vmatpush.msra.mxu0 %v1921
      %1993 = vmatpush.msra.mxu0 %v1917
      %1994 = vmatpush.msra.mxu0 %v1913
      %1995 = vmatpush.msra.mxu0 %v1909
      %1996 = vmatpush.msra.mxu0 %v1905
      %1997 = vmatpush.msra.mxu0 %v1901
      %1998 = vmatpush.msra.mxu0 %v1897
      %1999 = vmatpush.msra.mxu0 %v1893
      %2000 = vmatpush.msra.mxu0 %v1889
      %2001 = vmatpush.msra.mxu0 %v1885
      %2002 = vmatpush.msra.mxu0 %v1881
      %2003 = vmatpush.msra.mxu0 %v1877
      %2004 = vmatpush.msra.mxu0 %v1873
      %2005 = vmatpush.msra.mxu0 %v1869
      %2006 = vmatmul.f32.gmra.mxu0 %v1857
      %v2007 = vpop.f32.mrf.mxu0
      %v2008 = vadd.f32 0.0, %v2007
      %2009 = vdwg.mxu0
      %v2010 = vadd.f32 %v1862, %v1948
      %v2011 = vadd.f32 %v1863, %v1968
      %v2012 = vadd.f32 %v1864, %v1988
      %v2013 = vadd.f32 %v1865, %v2008
      %v2014 = vxor.u32 %v2010, 2147483648
      %v2015 = vmul.f32 %v2014, 1.442695
      %v2016 = vpow.pop %v2015
      %v2017 = vadd.f32 %v2016, 1.0
      %v2018 = vrcp.pop %v2017
      %v2019 = vmul.f32 %v2017, %v2018
      %v2020 = vsub.f32 1.0, %v2019
      %v2021 = vmul.f32 %v2018, %v2020
      %v2022 = vadd.f32 %v2018, %v2021
      %vm2023 = vweird.f32 %v2017
      %vm2024 = vweird.f32 %v2018
      %vm2025 = vmor %vm2023, %vm2024
      %v2026 = vsel %vm2025, %v2018, %v2022
      %v2027 = vand.u32 2147483647, %v2017
      %vm2028 = vcmp.eq.f32.partialorder %v2027, 8.507059e+37
      %v2029 = vand.u32 %v2017, 2147483648
      %v2030 = vor.u32 1.1754944e-38, %v2029
      %v2031 = vsel %vm2028, %v2030, %v2026
      %v2032 = vmul.f32 1.0, %v2031
      %v2033 = vxor.u32 %v2011, 2147483648
      %v2034 = vmul.f32 %v2033, 1.442695
      %v2035 = vpow.pop %v2034
      %v2036 = vadd.f32 %v2035, 1.0
      %v2037 = vrcp.pop %v2036
      %v2038 = vmul.f32 %v2036, %v2037
      %v2039 = vsub.f32 1.0, %v2038
      %v2040 = vmul.f32 %v2037, %v2039
      %v2041 = vadd.f32 %v2037, %v2040
      %vm2042 = vweird.f32 %v2036
      %vm2043 = vweird.f32 %v2037
      %vm2044 = vmor %vm2042, %vm2043
      %v2045 = vsel %vm2044, %v2037, %v2041
      %v2046 = vand.u32 2147483647, %v2036
      %vm2047 = vcmp.eq.f32.partialorder %v2046, 8.507059e+37
      %v2048 = vand.u32 %v2036, 2147483648
      %v2049 = vor.u32 1.1754944e-38, %v2048
      %v2050 = vsel %vm2047, %v2049, %v2045
      %v2051 = vmul.f32 1.0, %v2050
      %v2052 = vtanh.pop %v2012
      %v2053 = vxor.u32 %v2013, 2147483648
      %v2054 = vmul.f32 %v2053, 1.442695
      %v2055 = vpow.pop %v2054
      %v2056 = vadd.f32 %v2055, 1.0
      %v2057 = vrcp.pop %v2056
      %v2058 = vmul.f32 %v2056, %v2057
      %v2059 = vsub.f32 1.0, %v2058
      %v2060 = vmul.f32 %v2057, %v2059
      %v2061 = vadd.f32 %v2057, %v2060
      %vm2062 = vweird.f32 %v2056
      %vm2063 = vweird.f32 %v2057
      %vm2064 = vmor %vm2062, %vm2063
      %v2065 = vsel %vm2064, %v2057, %v2061
      %v2066 = vand.u32 2147483647, %v2056
      %vm2067 = vcmp.eq.f32.partialorder %v2066, 8.507059e+37
      %v2068 = vand.u32 %v2056, 2147483648
      %v2069 = vor.u32 1.1754944e-38, %v2068
      %v2070 = vsel %vm2067, %v2069, %v2065
      %v2071 = vmul.f32 1.0, %v2070
      %v2072 = vmul.f32 %v2051, %v1858
      %v2073 = vmul.f32 %v2032, %v2052
      %v2074 = vadd.f32 %v2072, %v2073
      %v2075 = vtanh.pop %v2074
      %v2076 = vmul.f32 %v2071, %v2075
      %s2077 = scalar_lea.vmem %s302, 40
      %2078 = vst [vmem:[%s2077] sm:$0xff] %v2076
      %s2079 = sadd.s32 %s944, 5
      %p2080 = scmp.lt.s32.totalorder %s2079, 37
      %s2081 = scalar_select %p2080, 1, 0
      %v2082 = vstv %s2081
      %vm2083 = vcmp.eq.s32.totalorder %v2082, 1
      %v2084 = vsel %vm2083, %v2076, %v1857
      %v2085 = vsel %vm2083, %v2074, %v1858
      %s2086 = smul.u32 6, 4
      %s2087 = smul.addr %s2086, 8
      %s2088 = scalar_lea.vmem [#allocation2], %s2087
      %v2089 = vld [vmem:[%s2088] sm:$0xff]
      %v2090 = vld [vmem:[%s2088 + $0x8] sm:$0xff]
      %v2091 = vld [vmem:[%s2088 + $0x10] sm:$0xff]
      %v2092 = vld [vmem:[%s2088 + $0x18] sm:$0xff]
      %v2093 = vld [vmem:[%s4] sm:$0xff]
      %v2094 = vld [vmem:[%s4 + $0x8] sm:$0xff]
      %v2095 = vld [vmem:[%s4 + $0x10] sm:$0xff]
      %v2096 = vld [vmem:[%s4 + $0x18] sm:$0xff]
      %v2097 = vld [vmem:[%s4 + $0x20] sm:$0xff]
      %v2098 = vld [vmem:[%s4 + $0x28] sm:$0xff]
      %v2099 = vld [vmem:[%s4 + $0x30] sm:$0xff]
      %v2100 = vld [vmem:[%s4 + $0x38] sm:$0xff]
      %v2101 = vld [vmem:[%s4 + $0x40] sm:$0xff]
      %v2102 = vld [vmem:[%s4 + $0x48] sm:$0xff]
      %v2103 = vld [vmem:[%s4 + $0x50] sm:$0xff]
      %v2104 = vld [vmem:[%s4 + $0x58] sm:$0xff]
      %v2105 = vld [vmem:[%s4 + $0x60] sm:$0xff]
      %v2106 = vld [vmem:[%s4 + $0x68] sm:$0xff]
      %v2107 = vld [vmem:[%s4 + $0x70] sm:$0xff]
      %v2108 = vld [vmem:[%s4 + $0x78] sm:$0xff]
      %v2109 = vld [vmem:[%s4 + $0x80] sm:$0xff]
      %v2110 = vld [vmem:[%s4 + $0x88] sm:$0xff]
      %v2111 = vld [vmem:[%s4 + $0x90] sm:$0xff]
      %v2112 = vld [vmem:[%s4 + $0x98] sm:$0xff]
      %v2113 = vld [vmem:[%s4 + $0xa0] sm:$0xff]
      %v2114 = vld [vmem:[%s4 + $0xa8] sm:$0xff]
      %v2115 = vld [vmem:[%s4 + $0xb0] sm:$0xff]
      %v2116 = vld [vmem:[%s4 + $0xb8] sm:$0xff]
      %v2117 = vld [vmem:[%s4 + $0xc0] sm:$0xff]
      %v2118 = vld [vmem:[%s4 + $0xc8] sm:$0xff]
      %v2119 = vld [vmem:[%s4 + $0xd0] sm:$0xff]
      %v2120 = vld [vmem:[%s4 + $0xd8] sm:$0xff]
      %v2121 = vld [vmem:[%s4 + $0xe0] sm:$0xff]
      %v2122 = vld [vmem:[%s4 + $0xe8] sm:$0xff]
      %v2123 = vld [vmem:[%s4 + $0xf0] sm:$0xff]
      %v2124 = vld [vmem:[%s4 + $0xf8] sm:$0xff]
      %v2125 = vld [vmem:[%s4 + $0x100] sm:$0xff]
      %v2126 = vld [vmem:[%s4 + $0x108] sm:$0xff]
      %v2127 = vld [vmem:[%s4 + $0x110] sm:$0xff]
      %v2128 = vld [vmem:[%s4 + $0x118] sm:$0xff]
      %v2129 = vld [vmem:[%s4 + $0x120] sm:$0xff]
      %v2130 = vld [vmem:[%s4 + $0x128] sm:$0xff]
      %v2131 = vld [vmem:[%s4 + $0x130] sm:$0xff]
      %v2132 = vld [vmem:[%s4 + $0x138] sm:$0xff]
      %v2133 = vld [vmem:[%s4 + $0x140] sm:$0xff]
      %v2134 = vld [vmem:[%s4 + $0x148] sm:$0xff]
      %v2135 = vld [vmem:[%s4 + $0x150] sm:$0xff]
      %v2136 = vld [vmem:[%s4 + $0x158] sm:$0xff]
      %v2137 = vld [vmem:[%s4 + $0x160] sm:$0xff]
      %v2138 = vld [vmem:[%s4 + $0x168] sm:$0xff]
      %v2139 = vld [vmem:[%s4 + $0x170] sm:$0xff]
      %v2140 = vld [vmem:[%s4 + $0x178] sm:$0xff]
      %v2141 = vld [vmem:[%s4 + $0x180] sm:$0xff]
      %v2142 = vld [vmem:[%s4 + $0x188] sm:$0xff]
      %v2143 = vld [vmem:[%s4 + $0x190] sm:$0xff]
      %v2144 = vld [vmem:[%s4 + $0x198] sm:$0xff]
      %v2145 = vld [vmem:[%s4 + $0x1a0] sm:$0xff]
      %v2146 = vld [vmem:[%s4 + $0x1a8] sm:$0xff]
      %v2147 = vld [vmem:[%s4 + $0x1b0] sm:$0xff]
      %v2148 = vld [vmem:[%s4 + $0x1b8] sm:$0xff]
      %v2149 = vld [vmem:[%s4 + $0x1c0] sm:$0xff]
      %v2150 = vld [vmem:[%s4 + $0x1c8] sm:$0xff]
      %v2151 = vld [vmem:[%s4 + $0x1d0] sm:$0xff]
      %v2152 = vld [vmem:[%s4 + $0x1d8] sm:$0xff]
      %v2153 = vld [vmem:[%s4 + $0x1e0] sm:$0xff]
      %v2154 = vld [vmem:[%s4 + $0x1e8] sm:$0xff]
      %v2155 = vld [vmem:[%s4 + $0x1f0] sm:$0xff]
      %v2156 = vld [vmem:[%s4 + $0x1f8] sm:$0xff]
      %2157 = vmatpush.msra.mxu0 %v2153
      %2158 = vmatpush.msra.mxu0 %v2149
      %2159 = vmatpush.msra.mxu0 %v2145
      %2160 = vmatpush.msra.mxu0 %v2141
      %2161 = vmatpush.msra.mxu0 %v2137
      %2162 = vmatpush.msra.mxu0 %v2133
      %2163 = vmatpush.msra.mxu0 %v2129
      %2164 = vmatpush.msra.mxu0 %v2125
      %2165 = vmatpush.msra.mxu0 %v2121
      %2166 = vmatpush.msra.mxu0 %v2117
      %2167 = vmatpush.msra.mxu0 %v2113
      %2168 = vmatpush.msra.mxu0 %v2109
      %2169 = vmatpush.msra.mxu0 %v2105
      %2170 = vmatpush.msra.mxu0 %v2101
      %2171 = vmatpush.msra.mxu0 %v2097
      %2172 = vmatpush.msra.mxu0 %v2093
      %2173 = vmatmul.f32.gmra.mxu0 %v2084
      %v2174 = vpop.f32.mrf.mxu0
      %v2175 = vadd.f32 0.0, %v2174
      %2176 = vdwg.mxu0
      %2177 = vmatpush.msra.mxu0 %v2154
      %2178 = vmatpush.msra.mxu0 %v2150
      %2179 = vmatpush.msra.mxu0 %v2146
      %2180 = vmatpush.msra.mxu0 %v2142
      %2181 = vmatpush.msra.mxu0 %v2138
      %2182 = vmatpush.msra.mxu0 %v2134
      %2183 = vmatpush.msra.mxu0 %v2130
      %2184 = vmatpush.msra.mxu0 %v2126
      %2185 = vmatpush.msra.mxu0 %v2122
      %2186 = vmatpush.msra.mxu0 %v2118
      %2187 = vmatpush.msra.mxu0 %v2114
      %2188 = vmatpush.msra.mxu0 %v2110
      %2189 = vmatpush.msra.mxu0 %v2106
      %2190 = vmatpush.msra.mxu0 %v2102
      %2191 = vmatpush.msra.mxu0 %v2098
      %2192 = vmatpush.msra.mxu0 %v2094
      %2193 = vmatmul.f32.gmra.mxu0 %v2084
      %v2194 = vpop.f32.mrf.mxu0
      %v2195 = vadd.f32 0.0, %v2194
      %2196 = vdwg.mxu0
      %2197 = vmatpush.msra.mxu0 %v2155
      %2198 = vmatpush.msra.mxu0 %v2151
      %2199 = vmatpush.msra.mxu0 %v2147
      %2200 = vmatpush.msra.mxu0 %v2143
      %2201 = vmatpush.msra.mxu0 %v2139
      %2202 = vmatpush.msra.mxu0 %v2135
      %2203 = vmatpush.msra.mxu0 %v2131
      %2204 = vmatpush.msra.mxu0 %v2127
      %2205 = vmatpush.msra.mxu0 %v2123
      %2206 = vmatpush.msra.mxu0 %v2119
      %2207 = vmatpush.msra.mxu0 %v2115
      %2208 = vmatpush.msra.mxu0 %v2111
      %2209 = vmatpush.msra.mxu0 %v2107
      %2210 = vmatpush.msra.mxu0 %v2103
      %2211 = vmatpush.msra.mxu0 %v2099
      %2212 = vmatpush.msra.mxu0 %v2095
      %2213 = vmatmul.f32.gmra.mxu0 %v2084
      %v2214 = vpop.f32.mrf.mxu0
      %v2215 = vadd.f32 0.0, %v2214
      %2216 = vdwg.mxu0
      %2217 = vmatpush.msra.mxu0 %v2156
      %2218 = vmatpush.msra.mxu0 %v2152
      %2219 = vmatpush.msra.mxu0 %v2148
      %2220 = vmatpush.msra.mxu0 %v2144
      %2221 = vmatpush.msra.mxu0 %v2140
      %2222 = vmatpush.msra.mxu0 %v2136
      %2223 = vmatpush.msra.mxu0 %v2132
      %2224 = vmatpush.msra.mxu0 %v2128
      %2225 = vmatpush.msra.mxu0 %v2124
      %2226 = vmatpush.msra.mxu0 %v2120
      %2227 = vmatpush.msra.mxu0 %v2116
      %2228 = vmatpush.msra.mxu0 %v2112
      %2229 = vmatpush.msra.mxu0 %v2108
      %2230 = vmatpush.msra.mxu0 %v2104
      %2231 = vmatpush.msra.mxu0 %v2100
      %2232 = vmatpush.msra.mxu0 %v2096
      %2233 = vmatmul.f32.gmra.mxu0 %v2084
      %v2234 = vpop.f32.mrf.mxu0
      %v2235 = vadd.f32 0.0, %v2234
      %2236 = vdwg.mxu0
      %v2237 = vadd.f32 %v2089, %v2175
      %v2238 = vadd.f32 %v2090, %v2195
      %v2239 = vadd.f32 %v2091, %v2215
      %v2240 = vadd.f32 %v2092, %v2235
      %v2241 = vxor.u32 %v2237, 2147483648
      %v2242 = vmul.f32 %v2241, 1.442695
      %v2243 = vpow.pop %v2242
      %v2244 = vadd.f32 %v2243, 1.0
      %v2245 = vrcp.pop %v2244
      %v2246 = vmul.f32 %v2244, %v2245
      %v2247 = vsub.f32 1.0, %v2246
      %v2248 = vmul.f32 %v2245, %v2247
      %v2249 = vadd.f32 %v2245, %v2248
      %vm2250 = vweird.f32 %v2244
      %vm2251 = vweird.f32 %v2245
      %vm2252 = vmor %vm2250, %vm2251
      %v2253 = vsel %vm2252, %v2245, %v2249
      %v2254 = vand.u32 2147483647, %v2244
      %vm2255 = vcmp.eq.f32.partialorder %v2254, 8.507059e+37
      %v2256 = vand.u32 %v2244, 2147483648
      %v2257 = vor.u32 1.1754944e-38, %v2256
      %v2258 = vsel %vm2255, %v2257, %v2253
      %v2259 = vmul.f32 1.0, %v2258
      %v2260 = vxor.u32 %v2238, 2147483648
      %v2261 = vmul.f32 %v2260, 1.442695
      %v2262 = vpow.pop %v2261
      %v2263 = vadd.f32 %v2262, 1.0
      %v2264 = vrcp.pop %v2263
      %v2265 = vmul.f32 %v2263, %v2264
      %v2266 = vsub.f32 1.0, %v2265
      %v2267 = vmul.f32 %v2264, %v2266
      %v2268 = vadd.f32 %v2264, %v2267
      %vm2269 = vweird.f32 %v2263
      %vm2270 = vweird.f32 %v2264
      %vm2271 = vmor %vm2269, %vm2270
      %v2272 = vsel %vm2271, %v2264, %v2268
      %v2273 = vand.u32 2147483647, %v2263
      %vm2274 = vcmp.eq.f32.partialorder %v2273, 8.507059e+37
      %v2275 = vand.u32 %v2263, 2147483648
      %v2276 = vor.u32 1.1754944e-38, %v2275
      %v2277 = vsel %vm2274, %v2276, %v2272
      %v2278 = vmul.f32 1.0, %v2277
      %v2279 = vtanh.pop %v2239
      %v2280 = vxor.u32 %v2240, 2147483648
      %v2281 = vmul.f32 %v2280, 1.442695
      %v2282 = vpow.pop %v2281
      %v2283 = vadd.f32 %v2282, 1.0
      %v2284 = vrcp.pop %v2283
      %v2285 = vmul.f32 %v2283, %v2284
      %v2286 = vsub.f32 1.0, %v2285
      %v2287 = vmul.f32 %v2284, %v2286
      %v2288 = vadd.f32 %v2284, %v2287
      %vm2289 = vweird.f32 %v2283
      %vm2290 = vweird.f32 %v2284
      %vm2291 = vmor %vm2289, %vm2290
      %v2292 = vsel %vm2291, %v2284, %v2288
      %v2293 = vand.u32 2147483647, %v2283
      %vm2294 = vcmp.eq.f32.partialorder %v2293, 8.507059e+37
      %v2295 = vand.u32 %v2283, 2147483648
      %v2296 = vor.u32 1.1754944e-38, %v2295
      %v2297 = vsel %vm2294, %v2296, %v2292
      %v2298 = vmul.f32 1.0, %v2297
      %v2299 = vmul.f32 %v2278, %v2085
      %v2300 = vmul.f32 %v2259, %v2279
      %v2301 = vadd.f32 %v2299, %v2300
      %v2302 = vtanh.pop %v2301
      %v2303 = vmul.f32 %v2298, %v2302
      %s2304 = scalar_lea.vmem %s302, 48
      %2305 = vst [vmem:[%s2304] sm:$0xff] %v2303
      %s2306 = sadd.s32 %s944, 6
      %p2307 = scmp.lt.s32.totalorder %s2306, 37
      %s2308 = scalar_select %p2307, 1, 0
      %v2309 = vstv %s2308
      %vm2310 = vcmp.eq.s32.totalorder %v2309, 1
      %v2311 = vsel %vm2310, %v2303, %v2084
      %v2312 = vsel %vm2310, %v2301, %v2085
      %s2313 = smul.u32 7, 4
      %s2314 = smul.addr %s2313, 8
      %s2315 = scalar_lea.vmem [#allocation2], %s2314
      %v2316 = vld [vmem:[%s2315] sm:$0xff]
      %v2317 = vld [vmem:[%s2315 + $0x8] sm:$0xff]
      %v2318 = vld [vmem:[%s2315 + $0x10] sm:$0xff]
      %v2319 = vld [vmem:[%s2315 + $0x18] sm:$0xff]
      %v2320 = vld [vmem:[%s4] sm:$0xff]
      %v2321 = vld [vmem:[%s4 + $0x8] sm:$0xff]
      %v2322 = vld [vmem:[%s4 + $0x10] sm:$0xff]
      %v2323 = vld [vmem:[%s4 + $0x18] sm:$0xff]
      %v2324 = vld [vmem:[%s4 + $0x20] sm:$0xff]
      %v2325 = vld [vmem:[%s4 + $0x28] sm:$0xff]
      %v2326 = vld [vmem:[%s4 + $0x30] sm:$0xff]
      %v2327 = vld [vmem:[%s4 + $0x38] sm:$0xff]
      %v2328 = vld [vmem:[%s4 + $0x40] sm:$0xff]
      %v2329 = vld [vmem:[%s4 + $0x48] sm:$0xff]
      %v2330 = vld [vmem:[%s4 + $0x50] sm:$0xff]
      %v2331 = vld [vmem:[%s4 + $0x58] sm:$0xff]
      %v2332 = vld [vmem:[%s4 + $0x60] sm:$0xff]
      %v2333 = vld [vmem:[%s4 + $0x68] sm:$0xff]
      %v2334 = vld [vmem:[%s4 + $0x70] sm:$0xff]
      %v2335 = vld [vmem:[%s4 + $0x78] sm:$0xff]
      %v2336 = vld [vmem:[%s4 + $0x80] sm:$0xff]
      %v2337 = vld [vmem:[%s4 + $0x88] sm:$0xff]
      %v2338 = vld [vmem:[%s4 + $0x90] sm:$0xff]
      %v2339 = vld [vmem:[%s4 + $0x98] sm:$0xff]
      %v2340 = vld [vmem:[%s4 + $0xa0] sm:$0xff]
      %v2341 = vld [vmem:[%s4 + $0xa8] sm:$0xff]
      %v2342 = vld [vmem:[%s4 + $0xb0] sm:$0xff]
      %v2343 = vld [vmem:[%s4 + $0xb8] sm:$0xff]
      %v2344 = vld [vmem:[%s4 + $0xc0] sm:$0xff]
      %v2345 = vld [vmem:[%s4 + $0xc8] sm:$0xff]
      %v2346 = vld [vmem:[%s4 + $0xd0] sm:$0xff]
      %v2347 = vld [vmem:[%s4 + $0xd8] sm:$0xff]
      %v2348 = vld [vmem:[%s4 + $0xe0] sm:$0xff]
      %v2349 = vld [vmem:[%s4 + $0xe8] sm:$0xff]
      %v2350 = vld [vmem:[%s4 + $0xf0] sm:$0xff]
      %v2351 = vld [vmem:[%s4 + $0xf8] sm:$0xff]
      %v2352 = vld [vmem:[%s4 + $0x100] sm:$0xff]
      %v2353 = vld [vmem:[%s4 + $0x108] sm:$0xff]
      %v2354 = vld [vmem:[%s4 + $0x110] sm:$0xff]
      %v2355 = vld [vmem:[%s4 + $0x118] sm:$0xff]
      %v2356 = vld [vmem:[%s4 + $0x120] sm:$0xff]
      %v2357 = vld [vmem:[%s4 + $0x128] sm:$0xff]
      %v2358 = vld [vmem:[%s4 + $0x130] sm:$0xff]
      %v2359 = vld [vmem:[%s4 + $0x138] sm:$0xff]
      %v2360 = vld [vmem:[%s4 + $0x140] sm:$0xff]
      %v2361 = vld [vmem:[%s4 + $0x148] sm:$0xff]
      %v2362 = vld [vmem:[%s4 + $0x150] sm:$0xff]
      %v2363 = vld [vmem:[%s4 + $0x158] sm:$0xff]
      %v2364 = vld [vmem:[%s4 + $0x160] sm:$0xff]
      %v2365 = vld [vmem:[%s4 + $0x168] sm:$0xff]
      %v2366 = vld [vmem:[%s4 + $0x170] sm:$0xff]
      %v2367 = vld [vmem:[%s4 + $0x178] sm:$0xff]
      %v2368 = vld [vmem:[%s4 + $0x180] sm:$0xff]
      %v2369 = vld [vmem:[%s4 + $0x188] sm:$0xff]
      %v2370 = vld [vmem:[%s4 + $0x190] sm:$0xff]
      %v2371 = vld [vmem:[%s4 + $0x198] sm:$0xff]
      %v2372 = vld [vmem:[%s4 + $0x1a0] sm:$0xff]
      %v2373 = vld [vmem:[%s4 + $0x1a8] sm:$0xff]
      %v2374 = vld [vmem:[%s4 + $0x1b0] sm:$0xff]
      %v2375 = vld [vmem:[%s4 + $0x1b8] sm:$0xff]
      %v2376 = vld [vmem:[%s4 + $0x1c0] sm:$0xff]
      %v2377 = vld [vmem:[%s4 + $0x1c8] sm:$0xff]
      %v2378 = vld [vmem:[%s4 + $0x1d0] sm:$0xff]
      %v2379 = vld [vmem:[%s4 + $0x1d8] sm:$0xff]
      %v2380 = vld [vmem:[%s4 + $0x1e0] sm:$0xff]
      %v2381 = vld [vmem:[%s4 + $0x1e8] sm:$0xff]
      %v2382 = vld [vmem:[%s4 + $0x1f0] sm:$0xff]
      %v2383 = vld [vmem:[%s4 + $0x1f8] sm:$0xff]
      %2384 = vmatpush.msra.mxu0 %v2380
      %2385 = vmatpush.msra.mxu0 %v2376
      %2386 = vmatpush.msra.mxu0 %v2372
      %2387 = vmatpush.msra.mxu0 %v2368
      %2388 = vmatpush.msra.mxu0 %v2364
      %2389 = vmatpush.msra.mxu0 %v2360
      %2390 = vmatpush.msra.mxu0 %v2356
      %2391 = vmatpush.msra.mxu0 %v2352
      %2392 = vmatpush.msra.mxu0 %v2348
      %2393 = vmatpush.msra.mxu0 %v2344
      %2394 = vmatpush.msra.mxu0 %v2340
      %2395 = vmatpush.msra.mxu0 %v2336
      %2396 = vmatpush.msra.mxu0 %v2332
      %2397 = vmatpush.msra.mxu0 %v2328
      %2398 = vmatpush.msra.mxu0 %v2324
      %2399 = vmatpush.msra.mxu0 %v2320
      %2400 = vmatmul.f32.gmra.mxu0 %v2311
      %v2401 = vpop.f32.mrf.mxu0
      %v2402 = vadd.f32 0.0, %v2401
      %2403 = vdwg.mxu0
      %2404 = vmatpush.msra.mxu0 %v2381
      %2405 = vmatpush.msra.mxu0 %v2377
      %2406 = vmatpush.msra.mxu0 %v2373
      %2407 = vmatpush.msra.mxu0 %v2369
      %2408 = vmatpush.msra.mxu0 %v2365
      %2409 = vmatpush.msra.mxu0 %v2361
      %2410 = vmatpush.msra.mxu0 %v2357
      %2411 = vmatpush.msra.mxu0 %v2353
      %2412 = vmatpush.msra.mxu0 %v2349
      %2413 = vmatpush.msra.mxu0 %v2345
      %2414 = vmatpush.msra.mxu0 %v2341
      %2415 = vmatpush.msra.mxu0 %v2337
      %2416 = vmatpush.msra.mxu0 %v2333
      %2417 = vmatpush.msra.mxu0 %v2329
      %2418 = vmatpush.msra.mxu0 %v2325
      %2419 = vmatpush.msra.mxu0 %v2321
      %2420 = vmatmul.f32.gmra.mxu0 %v2311
      %v2421 = vpop.f32.mrf.mxu0
      %v2422 = vadd.f32 0.0, %v2421
      %2423 = vdwg.mxu0
      %2424 = vmatpush.msra.mxu0 %v2382
      %2425 = vmatpush.msra.mxu0 %v2378
      %2426 = vmatpush.msra.mxu0 %v2374
      %2427 = vmatpush.msra.mxu0 %v2370
      %2428 = vmatpush.msra.mxu0 %v2366
      %2429 = vmatpush.msra.mxu0 %v2362
      %2430 = vmatpush.msra.mxu0 %v2358
      %2431 = vmatpush.msra.mxu0 %v2354
      %2432 = vmatpush.msra.mxu0 %v2350
      %2433 = vmatpush.msra.mxu0 %v2346
      %2434 = vmatpush.msra.mxu0 %v2342
      %2435 = vmatpush.msra.mxu0 %v2338
      %2436 = vmatpush.msra.mxu0 %v2334
      %2437 = vmatpush.msra.mxu0 %v2330
      %2438 = vmatpush.msra.mxu0 %v2326
      %2439 = vmatpush.msra.mxu0 %v2322
      %2440 = vmatmul.f32.gmra.mxu0 %v2311
      %v2441 = vpop.f32.mrf.mxu0
      %v2442 = vadd.f32 0.0, %v2441
      %2443 = vdwg.mxu0
      %2444 = vmatpush.msra.mxu0 %v2383
      %2445 = vmatpush.msra.mxu0 %v2379
      %2446 = vmatpush.msra.mxu0 %v2375
      %2447 = vmatpush.msra.mxu0 %v2371
      %2448 = vmatpush.msra.mxu0 %v2367
      %2449 = vmatpush.msra.mxu0 %v2363
      %2450 = vmatpush.msra.mxu0 %v2359
      %2451 = vmatpush.msra.mxu0 %v2355
      %2452 = vmatpush.msra.mxu0 %v2351
      %2453 = vmatpush.msra.mxu0 %v2347
      %2454 = vmatpush.msra.mxu0 %v2343
      %2455 = vmatpush.msra.mxu0 %v2339
      %2456 = vmatpush.msra.mxu0 %v2335
      %2457 = vmatpush.msra.mxu0 %v2331
      %2458 = vmatpush.msra.mxu0 %v2327
      %2459 = vmatpush.msra.mxu0 %v2323
      %2460 = vmatmul.f32.gmra.mxu0 %v2311
      %v2461 = vpop.f32.mrf.mxu0
      %v2462 = vadd.f32 0.0, %v2461
      %2463 = vdwg.mxu0
      %v2464 = vadd.f32 %v2316, %v2402
      %v2465 = vadd.f32 %v2317, %v2422
      %v2466 = vadd.f32 %v2318, %v2442
      %v2467 = vadd.f32 %v2319, %v2462
      %v2468 = vxor.u32 %v2464, 2147483648
      %v2469 = vmul.f32 %v2468, 1.442695
      %v2470 = vpow.pop %v2469
      %v2471 = vadd.f32 %v2470, 1.0
      %v2472 = vrcp.pop %v2471
      %v2473 = vmul.f32 %v2471, %v2472
      %v2474 = vsub.f32 1.0, %v2473
      %v2475 = vmul.f32 %v2472, %v2474
      %v2476 = vadd.f32 %v2472, %v2475
      %vm2477 = vweird.f32 %v2471
      %vm2478 = vweird.f32 %v2472
      %vm2479 = vmor %vm2477, %vm2478
      %v2480 = vsel %vm2479, %v2472, %v2476
      %v2481 = vand.u32 2147483647, %v2471
      %vm2482 = vcmp.eq.f32.partialorder %v2481, 8.507059e+37
      %v2483 = vand.u32 %v2471, 2147483648
      %v2484 = vor.u32 1.1754944e-38, %v2483
      %v2485 = vsel %vm2482, %v2484, %v2480
      %v2486 = vmul.f32 1.0, %v2485
      %v2487 = vxor.u32 %v2465, 2147483648
      %v2488 = vmul.f32 %v2487, 1.442695
      %v2489 = vpow.pop %v2488
      %v2490 = vadd.f32 %v2489, 1.0
      %v2491 = vrcp.pop %v2490
      %v2492 = vmul.f32 %v2490, %v2491
      %v2493 = vsub.f32 1.0, %v2492
      %v2494 = vmul.f32 %v2491, %v2493
      %v2495 = vadd.f32 %v2491, %v2494
      %vm2496 = vweird.f32 %v2490
      %vm2497 = vweird.f32 %v2491
      %vm2498 = vmor %vm2496, %vm2497
      %v2499 = vsel %vm2498, %v2491, %v2495
      %v2500 = vand.u32 2147483647, %v2490
      %vm2501 = vcmp.eq.f32.partialorder %v2500, 8.507059e+37
      %v2502 = vand.u32 %v2490, 2147483648
      %v2503 = vor.u32 1.1754944e-38, %v2502
      %v2504 = vsel %vm2501, %v2503, %v2499
      %v2505 = vmul.f32 1.0, %v2504
      %v2506 = vtanh.pop %v2466
      %v2507 = vxor.u32 %v2467, 2147483648
      %v2508 = vmul.f32 %v2507, 1.442695
      %v2509 = vpow.pop %v2508
      %v2510 = vadd.f32 %v2509, 1.0
      %v2511 = vrcp.pop %v2510
      %v2512 = vmul.f32 %v2510, %v2511
      %v2513 = vsub.f32 1.0, %v2512
      %v2514 = vmul.f32 %v2511, %v2513
      %v2515 = vadd.f32 %v2511, %v2514
      %vm2516 = vweird.f32 %v2510
      %vm2517 = vweird.f32 %v2511
      %vm2518 = vmor %vm2516, %vm2517
      %v2519 = vsel %vm2518, %v2511, %v2515
      %v2520 = vand.u32 2147483647, %v2510
      %vm2521 = vcmp.eq.f32.partialorder %v2520, 8.507059e+37
      %v2522 = vand.u32 %v2510, 2147483648
      %v2523 = vor.u32 1.1754944e-38, %v2522
      %v2524 = vsel %vm2521, %v2523, %v2519
      %v2525 = vmul.f32 1.0, %v2524
      %v2526 = vmul.f32 %v2505, %v2312
      %v2527 = vmul.f32 %v2486, %v2506
      %v2528 = vadd.f32 %v2526, %v2527
      %v2529 = vtanh.pop %v2528
      %v2530 = vmul.f32 %v2525, %v2529
      %s2531 = scalar_lea.vmem %s302, 56
      %2532 = vst [vmem:[%s2531] sm:$0xff] %v2530
      %s2533 = sadd.s32 %s944, 7
      %p2534 = scmp.lt.s32.totalorder %s2533, 37
      %s2535 = scalar_select %p2534, 1, 0
      %v2536 = vstv %s2535
      %vm2537 = vcmp.eq.s32.totalorder %v2536, 1
      %v2538 = vsel %vm2537, %v2530, %v2311
      %v2539 = vsel %vm2537, %v2528, %v2312
      %s2540 = smul.u32 8, 4
      %s2541 = smul.addr %s2540, 8
      %s2542 = scalar_lea.vmem [#allocation2], %s2541
      %v2543 = vld [vmem:[%s2542] sm:$0xff]
      %v2544 = vld [vmem:[%s2542 + $0x8] sm:$0xff]
      %v2545 = vld [vmem:[%s2542 + $0x10] sm:$0xff]
      %v2546 = vld [vmem:[%s2542 + $0x18] sm:$0xff]
      %v2547 = vld [vmem:[%s4] sm:$0xff]
      %v2548 = vld [vmem:[%s4 + $0x8] sm:$0xff]
      %v2549 = vld [vmem:[%s4 + $0x10] sm:$0xff]
      %v2550 = vld [vmem:[%s4 + $0x18] sm:$0xff]
      %v2551 = vld [vmem:[%s4 + $0x20] sm:$0xff]
      %v2552 = vld [vmem:[%s4 + $0x28] sm:$0xff]
      %v2553 = vld [vmem:[%s4 + $0x30] sm:$0xff]
      %v2554 = vld [vmem:[%s4 + $0x38] sm:$0xff]
      %v2555 = vld [vmem:[%s4 + $0x40] sm:$0xff]
      %v2556 = vld [vmem:[%s4 + $0x48] sm:$0xff]
      %v2557 = vld [vmem:[%s4 + $0x50] sm:$0xff]
      %v2558 = vld [vmem:[%s4 + $0x58] sm:$0xff]
      %v2559 = vld [vmem:[%s4 + $0x60] sm:$0xff]
      %v2560 = vld [vmem:[%s4 + $0x68] sm:$0xff]
      %v2561 = vld [vmem:[%s4 + $0x70] sm:$0xff]
      %v2562 = vld [vmem:[%s4 + $0x78] sm:$0xff]
      %v2563 = vld [vmem:[%s4 + $0x80] sm:$0xff]
      %v2564 = vld [vmem:[%s4 + $0x88] sm:$0xff]
      %v2565 = vld [vmem:[%s4 + $0x90] sm:$0xff]
      %v2566 = vld [vmem:[%s4 + $0x98] sm:$0xff]
      %v2567 = vld [vmem:[%s4 + $0xa0] sm:$0xff]
      %v2568 = vld [vmem:[%s4 + $0xa8] sm:$0xff]
      %v2569 = vld [vmem:[%s4 + $0xb0] sm:$0xff]
      %v2570 = vld [vmem:[%s4 + $0xb8] sm:$0xff]
      %v2571 = vld [vmem:[%s4 + $0xc0] sm:$0xff]
      %v2572 = vld [vmem:[%s4 + $0xc8] sm:$0xff]
      %v2573 = vld [vmem:[%s4 + $0xd0] sm:$0xff]
      %v2574 = vld [vmem:[%s4 + $0xd8] sm:$0xff]
      %v2575 = vld [vmem:[%s4 + $0xe0] sm:$0xff]
      %v2576 = vld [vmem:[%s4 + $0xe8] sm:$0xff]
      %v2577 = vld [vmem:[%s4 + $0xf0] sm:$0xff]
      %v2578 = vld [vmem:[%s4 + $0xf8] sm:$0xff]
      %v2579 = vld [vmem:[%s4 + $0x100] sm:$0xff]
      %v2580 = vld [vmem:[%s4 + $0x108] sm:$0xff]
      %v2581 = vld [vmem:[%s4 + $0x110] sm:$0xff]
      %v2582 = vld [vmem:[%s4 + $0x118] sm:$0xff]
      %v2583 = vld [vmem:[%s4 + $0x120] sm:$0xff]
      %v2584 = vld [vmem:[%s4 + $0x128] sm:$0xff]
      %v2585 = vld [vmem:[%s4 + $0x130] sm:$0xff]
      %v2586 = vld [vmem:[%s4 + $0x138] sm:$0xff]
      %v2587 = vld [vmem:[%s4 + $0x140] sm:$0xff]
      %v2588 = vld [vmem:[%s4 + $0x148] sm:$0xff]
      %v2589 = vld [vmem:[%s4 + $0x150] sm:$0xff]
      %v2590 = vld [vmem:[%s4 + $0x158] sm:$0xff]
      %v2591 = vld [vmem:[%s4 + $0x160] sm:$0xff]
      %v2592 = vld [vmem:[%s4 + $0x168] sm:$0xff]
      %v2593 = vld [vmem:[%s4 + $0x170] sm:$0xff]
      %v2594 = vld [vmem:[%s4 + $0x178] sm:$0xff]
      %v2595 = vld [vmem:[%s4 + $0x180] sm:$0xff]
      %v2596 = vld [vmem:[%s4 + $0x188] sm:$0xff]
      %v2597 = vld [vmem:[%s4 + $0x190] sm:$0xff]
      %v2598 = vld [vmem:[%s4 + $0x198] sm:$0xff]
      %v2599 = vld [vmem:[%s4 + $0x1a0] sm:$0xff]
      %v2600 = vld [vmem:[%s4 + $0x1a8] sm:$0xff]
      %v2601 = vld [vmem:[%s4 + $0x1b0] sm:$0xff]
      %v2602 = vld [vmem:[%s4 + $0x1b8] sm:$0xff]
      %v2603 = vld [vmem:[%s4 + $0x1c0] sm:$0xff]
      %v2604 = vld [vmem:[%s4 + $0x1c8] sm:$0xff]
      %v2605 = vld [vmem:[%s4 + $0x1d0] sm:$0xff]
      %v2606 = vld [vmem:[%s4 + $0x1d8] sm:$0xff]
      %v2607 = vld [vmem:[%s4 + $0x1e0] sm:$0xff]
      %v2608 = vld [vmem:[%s4 + $0x1e8] sm:$0xff]
      %v2609 = vld [vmem:[%s4 + $0x1f0] sm:$0xff]
      %v2610 = vld [vmem:[%s4 + $0x1f8] sm:$0xff]
      %2611 = vmatpush.msra.mxu0 %v2607
      %2612 = vmatpush.msra.mxu0 %v2603
      %2613 = vmatpush.msra.mxu0 %v2599
      %2614 = vmatpush.msra.mxu0 %v2595
      %2615 = vmatpush.msra.mxu0 %v2591
      %2616 = vmatpush.msra.mxu0 %v2587
      %2617 = vmatpush.msra.mxu0 %v2583
      %2618 = vmatpush.msra.mxu0 %v2579
      %2619 = vmatpush.msra.mxu0 %v2575
      %2620 = vmatpush.msra.mxu0 %v2571
      %2621 = vmatpush.msra.mxu0 %v2567
      %2622 = vmatpush.msra.mxu0 %v2563
      %2623 = vmatpush.msra.mxu0 %v2559
      %2624 = vmatpush.msra.mxu0 %v2555
      %2625 = vmatpush.msra.mxu0 %v2551
      %2626 = vmatpush.msra.mxu0 %v2547
      %2627 = vmatmul.f32.gmra.mxu0 %v2538
      %v2628 = vpop.f32.mrf.mxu0
      %v2629 = vadd.f32 0.0, %v2628
      %2630 = vdwg.mxu0
      %2631 = vmatpush.msra.mxu0 %v2608
      %2632 = vmatpush.msra.mxu0 %v2604
      %2633 = vmatpush.msra.mxu0 %v2600
      %2634 = vmatpush.msra.mxu0 %v2596
      %2635 = vmatpush.msra.mxu0 %v2592
      %2636 = vmatpush.msra.mxu0 %v2588
      %2637 = vmatpush.msra.mxu0 %v2584
      %2638 = vmatpush.msra.mxu0 %v2580
      %2639 = vmatpush.msra.mxu0 %v2576
      %2640 = vmatpush.msra.mxu0 %v2572
      %2641 = vmatpush.msra.mxu0 %v2568
      %2642 = vmatpush.msra.mxu0 %v2564
      %2643 = vmatpush.msra.mxu0 %v2560
      %2644 = vmatpush.msra.mxu0 %v2556
      %2645 = vmatpush.msra.mxu0 %v2552
      %2646 = vmatpush.msra.mxu0 %v2548
      %2647 = vmatmul.f32.gmra.mxu0 %v2538
      %v2648 = vpop.f32.mrf.mxu0
      %v2649 = vadd.f32 0.0, %v2648
      %2650 = vdwg.mxu0
      %2651 = vmatpush.msra.mxu0 %v2609
      %2652 = vmatpush.msra.mxu0 %v2605
      %2653 = vmatpush.msra.mxu0 %v2601
      %2654 = vmatpush.msra.mxu0 %v2597
      %2655 = vmatpush.msra.mxu0 %v2593
      %2656 = vmatpush.msra.mxu0 %v2589
      %2657 = vmatpush.msra.mxu0 %v2585
      %2658 = vmatpush.msra.mxu0 %v2581
      %2659 = vmatpush.msra.mxu0 %v2577
      %2660 = vmatpush.msra.mxu0 %v2573
      %2661 = vmatpush.msra.mxu0 %v2569
      %2662 = vmatpush.msra.mxu0 %v2565
      %2663 = vmatpush.msra.mxu0 %v2561
      %2664 = vmatpush.msra.mxu0 %v2557
      %2665 = vmatpush.msra.mxu0 %v2553
      %2666 = vmatpush.msra.mxu0 %v2549
      %2667 = vmatmul.f32.gmra.mxu0 %v2538
      %v2668 = vpop.f32.mrf.mxu0
      %v2669 = vadd.f32 0.0, %v2668
      %2670 = vdwg.mxu0
      %2671 = vmatpush.msra.mxu0 %v2610
      %2672 = vmatpush.msra.mxu0 %v2606
      %2673 = vmatpush.msra.mxu0 %v2602
      %2674 = vmatpush.msra.mxu0 %v2598
      %2675 = vmatpush.msra.mxu0 %v2594
      %2676 = vmatpush.msra.mxu0 %v2590
      %2677 = vmatpush.msra.mxu0 %v2586
      %2678 = vmatpush.msra.mxu0 %v2582
      %2679 = vmatpush.msra.mxu0 %v2578
      %2680 = vmatpush.msra.mxu0 %v2574
      %2681 = vmatpush.msra.mxu0 %v2570
      %2682 = vmatpush.msra.mxu0 %v2566
      %2683 = vmatpush.msra.mxu0 %v2562
      %2684 = vmatpush.msra.mxu0 %v2558
      %2685 = vmatpush.msra.mxu0 %v2554
      %2686 = vmatpush.msra.mxu0 %v2550
      %2687 = vmatmul.f32.gmra.mxu0 %v2538
      %v2688 = vpop.f32.mrf.mxu0
      %v2689 = vadd.f32 0.0, %v2688
      %2690 = vdwg.mxu0
      %v2691 = vadd.f32 %v2543, %v2629
      %v2692 = vadd.f32 %v2544, %v2649
      %v2693 = vadd.f32 %v2545, %v2669
      %v2694 = vadd.f32 %v2546, %v2689
      %v2695 = vxor.u32 %v2691, 2147483648
      %v2696 = vmul.f32 %v2695, 1.442695
      %v2697 = vpow.pop %v2696
      %v2698 = vadd.f32 %v2697, 1.0
      %v2699 = vrcp.pop %v2698
      %v2700 = vmul.f32 %v2698, %v2699
      %v2701 = vsub.f32 1.0, %v2700
      %v2702 = vmul.f32 %v2699, %v2701
      %v2703 = vadd.f32 %v2699, %v2702
      %vm2704 = vweird.f32 %v2698
      %vm2705 = vweird.f32 %v2699
      %vm2706 = vmor %vm2704, %vm2705
      %v2707 = vsel %vm2706, %v2699, %v2703
      %v2708 = vand.u32 2147483647, %v2698
      %vm2709 = vcmp.eq.f32.partialorder %v2708, 8.507059e+37
      %v2710 = vand.u32 %v2698, 2147483648
      %v2711 = vor.u32 1.1754944e-38, %v2710
      %v2712 = vsel %vm2709, %v2711, %v2707
      %v2713 = vmul.f32 1.0, %v2712
      %v2714 = vxor.u32 %v2692, 2147483648
      %v2715 = vmul.f32 %v2714, 1.442695
      %v2716 = vpow.pop %v2715
      %v2717 = vadd.f32 %v2716, 1.0
      %v2718 = vrcp.pop %v2717
      %v2719 = vmul.f32 %v2717, %v2718
      %v2720 = vsub.f32 1.0, %v2719
      %v2721 = vmul.f32 %v2718, %v2720
      %v2722 = vadd.f32 %v2718, %v2721
      %vm2723 = vweird.f32 %v2717
      %vm2724 = vweird.f32 %v2718
      %vm2725 = vmor %vm2723, %vm2724
      %v2726 = vsel %vm2725, %v2718, %v2722
      %v2727 = vand.u32 2147483647, %v2717
      %vm2728 = vcmp.eq.f32.partialorder %v2727, 8.507059e+37
      %v2729 = vand.u32 %v2717, 2147483648
      %v2730 = vor.u32 1.1754944e-38, %v2729
      %v2731 = vsel %vm2728, %v2730, %v2726
      %v2732 = vmul.f32 1.0, %v2731
      %v2733 = vtanh.pop %v2693
      %v2734 = vxor.u32 %v2694, 2147483648
      %v2735 = vmul.f32 %v2734, 1.442695
      %v2736 = vpow.pop %v2735
      %v2737 = vadd.f32 %v2736, 1.0
      %v2738 = vrcp.pop %v2737
      %v2739 = vmul.f32 %v2737, %v2738
      %v2740 = vsub.f32 1.0, %v2739
      %v2741 = vmul.f32 %v2738, %v2740
      %v2742 = vadd.f32 %v2738, %v2741
      %vm2743 = vweird.f32 %v2737
      %vm2744 = vweird.f32 %v2738
      %vm2745 = vmor %vm2743, %vm2744
      %v2746 = vsel %vm2745, %v2738, %v2742
      %v2747 = vand.u32 2147483647, %v2737
      %vm2748 = vcmp.eq.f32.partialorder %v2747, 8.507059e+37
      %v2749 = vand.u32 %v2737, 2147483648
      %v2750 = vor.u32 1.1754944e-38, %v2749
      %v2751 = vsel %vm2748, %v2750, %v2746
      %v2752 = vmul.f32 1.0, %v2751
      %v2753 = vmul.f32 %v2732, %v2539
      %v2754 = vmul.f32 %v2713, %v2733
      %v2755 = vadd.f32 %v2753, %v2754
      %v2756 = vtanh.pop %v2755
      %v2757 = vmul.f32 %v2752, %v2756
      %s2758 = scalar_lea.vmem %s302, 64
      %2759 = vst [vmem:[%s2758] sm:$0xff] %v2757
      %s2760 = sadd.s32 %s944, 8
      %p2761 = scmp.lt.s32.totalorder %s2760, 37
      %s2762 = scalar_select %p2761, 1, 0
      %v2763 = vstv %s2762
      %vm2764 = vcmp.eq.s32.totalorder %v2763, 1
      %v2765 = vsel %vm2764, %v2757, %v2538
      %v2766 = vsel %vm2764, %v2755, %v2539
      %s2767 = smul.u32 9, 4
      %s2768 = smul.addr %s2767, 8
      %s2769 = scalar_lea.vmem [#allocation2], %s2768
      %v2770 = vld [vmem:[%s2769] sm:$0xff]
      %v2771 = vld [vmem:[%s2769 + $0x8] sm:$0xff]
      %v2772 = vld [vmem:[%s2769 + $0x10] sm:$0xff]
      %v2773 = vld [vmem:[%s2769 + $0x18] sm:$0xff]
      %v2774 = vld [vmem:[%s4] sm:$0xff]
      %v2775 = vld [vmem:[%s4 + $0x8] sm:$0xff]
      %v2776 = vld [vmem:[%s4 + $0x10] sm:$0xff]
      %v2777 = vld [vmem:[%s4 + $0x18] sm:$0xff]
      %v2778 = vld [vmem:[%s4 + $0x20] sm:$0xff]
      %v2779 = vld [vmem:[%s4 + $0x28] sm:$0xff]
      %v2780 = vld [vmem:[%s4 + $0x30] sm:$0xff]
      %v2781 = vld [vmem:[%s4 + $0x38] sm:$0xff]
      %v2782 = vld [vmem:[%s4 + $0x40] sm:$0xff]
      %v2783 = vld [vmem:[%s4 + $0x48] sm:$0xff]
      %v2784 = vld [vmem:[%s4 + $0x50] sm:$0xff]
      %v2785 = vld [vmem:[%s4 + $0x58] sm:$0xff]
      %v2786 = vld [vmem:[%s4 + $0x60] sm:$0xff]
      %v2787 = vld [vmem:[%s4 + $0x68] sm:$0xff]
      %v2788 = vld [vmem:[%s4 + $0x70] sm:$0xff]
      %v2789 = vld [vmem:[%s4 + $0x78] sm:$0xff]
      %v2790 = vld [vmem:[%s4 + $0x80] sm:$0xff]
      %v2791 = vld [vmem:[%s4 + $0x88] sm:$0xff]
      %v2792 = vld [vmem:[%s4 + $0x90] sm:$0xff]
      %v2793 = vld [vmem:[%s4 + $0x98] sm:$0xff]
      %v2794 = vld [vmem:[%s4 + $0xa0] sm:$0xff]
      %v2795 = vld [vmem:[%s4 + $0xa8] sm:$0xff]
      %v2796 = vld [vmem:[%s4 + $0xb0] sm:$0xff]
      %v2797 = vld [vmem:[%s4 + $0xb8] sm:$0xff]
      %v2798 = vld [vmem:[%s4 + $0xc0] sm:$0xff]
      %v2799 = vld [vmem:[%s4 + $0xc8] sm:$0xff]
      %v2800 = vld [vmem:[%s4 + $0xd0] sm:$0xff]
      %v2801 = vld [vmem:[%s4 + $0xd8] sm:$0xff]
      %v2802 = vld [vmem:[%s4 + $0xe0] sm:$0xff]
      %v2803 = vld [vmem:[%s4 + $0xe8] sm:$0xff]
      %v2804 = vld [vmem:[%s4 + $0xf0] sm:$0xff]
      %v2805 = vld [vmem:[%s4 + $0xf8] sm:$0xff]
      %v2806 = vld [vmem:[%s4 + $0x100] sm:$0xff]
      %v2807 = vld [vmem:[%s4 + $0x108] sm:$0xff]
      %v2808 = vld [vmem:[%s4 + $0x110] sm:$0xff]
      %v2809 = vld [vmem:[%s4 + $0x118] sm:$0xff]
      %v2810 = vld [vmem:[%s4 + $0x120] sm:$0xff]
      %v2811 = vld [vmem:[%s4 + $0x128] sm:$0xff]
      %v2812 = vld [vmem:[%s4 + $0x130] sm:$0xff]
      %v2813 = vld [vmem:[%s4 + $0x138] sm:$0xff]
      %v2814 = vld [vmem:[%s4 + $0x140] sm:$0xff]
      %v2815 = vld [vmem:[%s4 + $0x148] sm:$0xff]
      %v2816 = vld [vmem:[%s4 + $0x150] sm:$0xff]
      %v2817 = vld [vmem:[%s4 + $0x158] sm:$0xff]
      %v2818 = vld [vmem:[%s4 + $0x160] sm:$0xff]
      %v2819 = vld [vmem:[%s4 + $0x168] sm:$0xff]
      %v2820 = vld [vmem:[%s4 + $0x170] sm:$0xff]
      %v2821 = vld [vmem:[%s4 + $0x178] sm:$0xff]
      %v2822 = vld [vmem:[%s4 + $0x180] sm:$0xff]
      %v2823 = vld [vmem:[%s4 + $0x188] sm:$0xff]
      %v2824 = vld [vmem:[%s4 + $0x190] sm:$0xff]
      %v2825 = vld [vmem:[%s4 + $0x198] sm:$0xff]
      %v2826 = vld [vmem:[%s4 + $0x1a0] sm:$0xff]
      %v2827 = vld [vmem:[%s4 + $0x1a8] sm:$0xff]
      %v2828 = vld [vmem:[%s4 + $0x1b0] sm:$0xff]
      %v2829 = vld [vmem:[%s4 + $0x1b8] sm:$0xff]
      %v2830 = vld [vmem:[%s4 + $0x1c0] sm:$0xff]
      %v2831 = vld [vmem:[%s4 + $0x1c8] sm:$0xff]
      %v2832 = vld [vmem:[%s4 + $0x1d0] sm:$0xff]
      %v2833 = vld [vmem:[%s4 + $0x1d8] sm:$0xff]
      %v2834 = vld [vmem:[%s4 + $0x1e0] sm:$0xff]
      %v2835 = vld [vmem:[%s4 + $0x1e8] sm:$0xff]
      %v2836 = vld [vmem:[%s4 + $0x1f0] sm:$0xff]
      %v2837 = vld [vmem:[%s4 + $0x1f8] sm:$0xff]
      %2838 = vmatpush.msra.mxu0 %v2834
      %2839 = vmatpush.msra.mxu0 %v2830
      %2840 = vmatpush.msra.mxu0 %v2826
      %2841 = vmatpush.msra.mxu0 %v2822
      %2842 = vmatpush.msra.mxu0 %v2818
      %2843 = vmatpush.msra.mxu0 %v2814
      %2844 = vmatpush.msra.mxu0 %v2810
      %2845 = vmatpush.msra.mxu0 %v2806
      %2846 = vmatpush.msra.mxu0 %v2802
      %2847 = vmatpush.msra.mxu0 %v2798
      %2848 = vmatpush.msra.mxu0 %v2794
      %2849 = vmatpush.msra.mxu0 %v2790
      %2850 = vmatpush.msra.mxu0 %v2786
      %2851 = vmatpush.msra.mxu0 %v2782
      %2852 = vmatpush.msra.mxu0 %v2778
      %2853 = vmatpush.msra.mxu0 %v2774
      %2854 = vmatmul.f32.gmra.mxu0 %v2765
      %v2855 = vpop.f32.mrf.mxu0
      %v2856 = vadd.f32 0.0, %v2855
      %2857 = vdwg.mxu0
      %2858 = vmatpush.msra.mxu0 %v2835
      %2859 = vmatpush.msra.mxu0 %v2831
      %2860 = vmatpush.msra.mxu0 %v2827
      %2861 = vmatpush.msra.mxu0 %v2823
      %2862 = vmatpush.msra.mxu0 %v2819
      %2863 = vmatpush.msra.mxu0 %v2815
      %2864 = vmatpush.msra.mxu0 %v2811
      %2865 = vmatpush.msra.mxu0 %v2807
      %2866 = vmatpush.msra.mxu0 %v2803
      %2867 = vmatpush.msra.mxu0 %v2799
      %2868 = vmatpush.msra.mxu0 %v2795
      %2869 = vmatpush.msra.mxu0 %v2791
      %2870 = vmatpush.msra.mxu0 %v2787
      %2871 = vmatpush.msra.mxu0 %v2783
      %2872 = vmatpush.msra.mxu0 %v2779
      %2873 = vmatpush.msra.mxu0 %v2775
      %2874 = vmatmul.f32.gmra.mxu0 %v2765
      %v2875 = vpop.f32.mrf.mxu0
      %v2876 = vadd.f32 0.0, %v2875
      %2877 = vdwg.mxu0
      %2878 = vmatpush.msra.mxu0 %v2836
      %2879 = vmatpush.msra.mxu0 %v2832
      %2880 = vmatpush.msra.mxu0 %v2828
      %2881 = vmatpush.msra.mxu0 %v2824
      %2882 = vmatpush.msra.mxu0 %v2820
      %2883 = vmatpush.msra.mxu0 %v2816
      %2884 = vmatpush.msra.mxu0 %v2812
      %2885 = vmatpush.msra.mxu0 %v2808
      %2886 = vmatpush.msra.mxu0 %v2804
      %2887 = vmatpush.msra.mxu0 %v2800
      %2888 = vmatpush.msra.mxu0 %v2796
      %2889 = vmatpush.msra.mxu0 %v2792
      %2890 = vmatpush.msra.mxu0 %v2788
      %2891 = vmatpush.msra.mxu0 %v2784
      %2892 = vmatpush.msra.mxu0 %v2780
      %2893 = vmatpush.msra.mxu0 %v2776
      %2894 = vmatmul.f32.gmra.mxu0 %v2765
      %v2895 = vpop.f32.mrf.mxu0
      %v2896 = vadd.f32 0.0, %v2895
      %2897 = vdwg.mxu0
      %2898 = vmatpush.msra.mxu0 %v2837
      %2899 = vmatpush.msra.mxu0 %v2833
      %2900 = vmatpush.msra.mxu0 %v2829
      %2901 = vmatpush.msra.mxu0 %v2825
      %2902 = vmatpush.msra.mxu0 %v2821
      %2903 = vmatpush.msra.mxu0 %v2817
      %2904 = vmatpush.msra.mxu0 %v2813
      %2905 = vmatpush.msra.mxu0 %v2809
      %2906 = vmatpush.msra.mxu0 %v2805
      %2907 = vmatpush.msra.mxu0 %v2801
      %2908 = vmatpush.msra.mxu0 %v2797
      %2909 = vmatpush.msra.mxu0 %v2793
      %2910 = vmatpush.msra.mxu0 %v2789
      %2911 = vmatpush.msra.mxu0 %v2785
      %2912 = vmatpush.msra.mxu0 %v2781
      %2913 = vmatpush.msra.mxu0 %v2777
      %2914 = vmatmul.f32.gmra.mxu0 %v2765
      %v2915 = vpop.f32.mrf.mxu0
      %v2916 = vadd.f32 0.0, %v2915
      %2917 = vdwg.mxu0
      %v2918 = vadd.f32 %v2770, %v2856
      %v2919 = vadd.f32 %v2771, %v2876
      %v2920 = vadd.f32 %v2772, %v2896
      %v2921 = vadd.f32 %v2773, %v2916
      %v2922 = vxor.u32 %v2918, 2147483648
      %v2923 = vmul.f32 %v2922, 1.442695
      %v2924 = vpow.pop %v2923
      %v2925 = vadd.f32 %v2924, 1.0
      %v2926 = vrcp.pop %v2925
      %v2927 = vmul.f32 %v2925, %v2926
      %v2928 = vsub.f32 1.0, %v2927
      %v2929 = vmul.f32 %v2926, %v2928
      %v2930 = vadd.f32 %v2926, %v2929
      %vm2931 = vweird.f32 %v2925
      %vm2932 = vweird.f32 %v2926
      %vm2933 = vmor %vm2931, %vm2932
      %v2934 = vsel %vm2933, %v2926, %v2930
      %v2935 = vand.u32 2147483647, %v2925
      %vm2936 = vcmp.eq.f32.partialorder %v2935, 8.507059e+37
      %v2937 = vand.u32 %v2925, 2147483648
      %v2938 = vor.u32 1.1754944e-38, %v2937
      %v2939 = vsel %vm2936, %v2938, %v2934
      %v2940 = vmul.f32 1.0, %v2939
      %v2941 = vxor.u32 %v2919, 2147483648
      %v2942 = vmul.f32 %v2941, 1.442695
      %v2943 = vpow.pop %v2942
      %v2944 = vadd.f32 %v2943, 1.0
      %v2945 = vrcp.pop %v2944
      %v2946 = vmul.f32 %v2944, %v2945
      %v2947 = vsub.f32 1.0, %v2946
      %v2948 = vmul.f32 %v2945, %v2947
      %v2949 = vadd.f32 %v2945, %v2948
      %vm2950 = vweird.f32 %v2944
      %vm2951 = vweird.f32 %v2945
      %vm2952 = vmor %vm2950, %vm2951
      %v2953 = vsel %vm2952, %v2945, %v2949
      %v2954 = vand.u32 2147483647, %v2944
      %vm2955 = vcmp.eq.f32.partialorder %v2954, 8.507059e+37
      %v2956 = vand.u32 %v2944, 2147483648
      %v2957 = vor.u32 1.1754944e-38, %v2956
      %v2958 = vsel %vm2955, %v2957, %v2953
      %v2959 = vmul.f32 1.0, %v2958
      %v2960 = vtanh.pop %v2920
      %v2961 = vxor.u32 %v2921, 2147483648
      %v2962 = vmul.f32 %v2961, 1.442695
      %v2963 = vpow.pop %v2962
      %v2964 = vadd.f32 %v2963, 1.0
      %v2965 = vrcp.pop %v2964
      %v2966 = vmul.f32 %v2964, %v2965
      %v2967 = vsub.f32 1.0, %v2966
      %v2968 = vmul.f32 %v2965, %v2967
      %v2969 = vadd.f32 %v2965, %v2968
      %vm2970 = vweird.f32 %v2964
      %vm2971 = vweird.f32 %v2965
      %vm2972 = vmor %vm2970, %vm2971
      %v2973 = vsel %vm2972, %v2965, %v2969
      %v2974 = vand.u32 2147483647, %v2964
      %vm2975 = vcmp.eq.f32.partialorder %v2974, 8.507059e+37
      %v2976 = vand.u32 %v2964, 2147483648
      %v2977 = vor.u32 1.1754944e-38, %v2976
      %v2978 = vsel %vm2975, %v2977, %v2973
      %v2979 = vmul.f32 1.0, %v2978
      %v2980 = vmul.f32 %v2959, %v2766
      %v2981 = vmul.f32 %v2940, %v2960
      %v2982 = vadd.f32 %v2980, %v2981
      %v2983 = vtanh.pop %v2982
      %v2984 = vmul.f32 %v2979, %v2983
      %s2985 = scalar_lea.vmem %s302, 72
      %2986 = vst [vmem:[%s2985] sm:$0xff] %v2984
      %s2987 = sadd.s32 %s944, 9
      %p2988 = scmp.lt.s32.totalorder %s2987, 37
      %s2989 = scalar_select %p2988, 1, 0
      %v2990 = vstv %s2989
      %vm2991 = vcmp.eq.s32.totalorder %v2990, 1
      %v2992 = vsel %vm2991, %v2984, %v2765
      %v2993 = vsel %vm2991, %v2982, %v2766
      %s2994 = smul.u32 10, 4
      %s2995 = smul.addr %s2994, 8
      %s2996 = scalar_lea.vmem [#allocation2], %s2995
      %v2997 = vld [vmem:[%s2996] sm:$0xff]
      %v2998 = vld [vmem:[%s2996 + $0x8] sm:$0xff]
      %v2999 = vld [vmem:[%s2996 + $0x10] sm:$0xff]
      %v3000 = vld [vmem:[%s2996 + $0x18] sm:$0xff]
      %v3001 = vld [vmem:[%s4] sm:$0xff]
      %v3002 = vld [vmem:[%s4 + $0x8] sm:$0xff]
      %v3003 = vld [vmem:[%s4 + $0x10] sm:$0xff]
      %v3004 = vld [vmem:[%s4 + $0x18] sm:$0xff]
      %v3005 = vld [vmem:[%s4 + $0x20] sm:$0xff]
      %v3006 = vld [vmem:[%s4 + $0x28] sm:$0xff]
      %v3007 = vld [vmem:[%s4 + $0x30] sm:$0xff]
      %v3008 = vld [vmem:[%s4 + $0x38] sm:$0xff]
      %v3009 = vld [vmem:[%s4 + $0x40] sm:$0xff]
      %v3010 = vld [vmem:[%s4 + $0x48] sm:$0xff]
      %v3011 = vld [vmem:[%s4 + $0x50] sm:$0xff]
      %v3012 = vld [vmem:[%s4 + $0x58] sm:$0xff]
      %v3013 = vld [vmem:[%s4 + $0x60] sm:$0xff]
      %v3014 = vld [vmem:[%s4 + $0x68] sm:$0xff]
      %v3015 = vld [vmem:[%s4 + $0x70] sm:$0xff]
      %v3016 = vld [vmem:[%s4 + $0x78] sm:$0xff]
      %v3017 = vld [vmem:[%s4 + $0x80] sm:$0xff]
      %v3018 = vld [vmem:[%s4 + $0x88] sm:$0xff]
      %v3019 = vld [vmem:[%s4 + $0x90] sm:$0xff]
      %v3020 = vld [vmem:[%s4 + $0x98] sm:$0xff]
      %v3021 = vld [vmem:[%s4 + $0xa0] sm:$0xff]
      %v3022 = vld [vmem:[%s4 + $0xa8] sm:$0xff]
      %v3023 = vld [vmem:[%s4 + $0xb0] sm:$0xff]
      %v3024 = vld [vmem:[%s4 + $0xb8] sm:$0xff]
      %v3025 = vld [vmem:[%s4 + $0xc0] sm:$0xff]
      %v3026 = vld [vmem:[%s4 + $0xc8] sm:$0xff]
      %v3027 = vld [vmem:[%s4 + $0xd0] sm:$0xff]
      %v3028 = vld [vmem:[%s4 + $0xd8] sm:$0xff]
      %v3029 = vld [vmem:[%s4 + $0xe0] sm:$0xff]
      %v3030 = vld [vmem:[%s4 + $0xe8] sm:$0xff]
      %v3031 = vld [vmem:[%s4 + $0xf0] sm:$0xff]
      %v3032 = vld [vmem:[%s4 + $0xf8] sm:$0xff]
      %v3033 = vld [vmem:[%s4 + $0x100] sm:$0xff]
      %v3034 = vld [vmem:[%s4 + $0x108] sm:$0xff]
      %v3035 = vld [vmem:[%s4 + $0x110] sm:$0xff]
      %v3036 = vld [vmem:[%s4 + $0x118] sm:$0xff]
      %v3037 = vld [vmem:[%s4 + $0x120] sm:$0xff]
      %v3038 = vld [vmem:[%s4 + $0x128] sm:$0xff]
      %v3039 = vld [vmem:[%s4 + $0x130] sm:$0xff]
      %v3040 = vld [vmem:[%s4 + $0x138] sm:$0xff]
      %v3041 = vld [vmem:[%s4 + $0x140] sm:$0xff]
      %v3042 = vld [vmem:[%s4 + $0x148] sm:$0xff]
      %v3043 = vld [vmem:[%s4 + $0x150] sm:$0xff]
      %v3044 = vld [vmem:[%s4 + $0x158] sm:$0xff]
      %v3045 = vld [vmem:[%s4 + $0x160] sm:$0xff]
      %v3046 = vld [vmem:[%s4 + $0x168] sm:$0xff]
      %v3047 = vld [vmem:[%s4 + $0x170] sm:$0xff]
      %v3048 = vld [vmem:[%s4 + $0x178] sm:$0xff]
      %v3049 = vld [vmem:[%s4 + $0x180] sm:$0xff]
      %v3050 = vld [vmem:[%s4 + $0x188] sm:$0xff]
      %v3051 = vld [vmem:[%s4 + $0x190] sm:$0xff]
      %v3052 = vld [vmem:[%s4 + $0x198] sm:$0xff]
      %v3053 = vld [vmem:[%s4 + $0x1a0] sm:$0xff]
      %v3054 = vld [vmem:[%s4 + $0x1a8] sm:$0xff]
      %v3055 = vld [vmem:[%s4 + $0x1b0] sm:$0xff]
      %v3056 = vld [vmem:[%s4 + $0x1b8] sm:$0xff]
      %v3057 = vld [vmem:[%s4 + $0x1c0] sm:$0xff]
      %v3058 = vld [vmem:[%s4 + $0x1c8] sm:$0xff]
      %v3059 = vld [vmem:[%s4 + $0x1d0] sm:$0xff]
      %v3060 = vld [vmem:[%s4 + $0x1d8] sm:$0xff]
      %v3061 = vld [vmem:[%s4 + $0x1e0] sm:$0xff]
      %v3062 = vld [vmem:[%s4 + $0x1e8] sm:$0xff]
      %v3063 = vld [vmem:[%s4 + $0x1f0] sm:$0xff]
      %v3064 = vld [vmem:[%s4 + $0x1f8] sm:$0xff]
      %3065 = vmatpush.msra.mxu0 %v3061
      %3066 = vmatpush.msra.mxu0 %v3057
      %3067 = vmatpush.msra.mxu0 %v3053
      %3068 = vmatpush.msra.mxu0 %v3049
      %3069 = vmatpush.msra.mxu0 %v3045
      %3070 = vmatpush.msra.mxu0 %v3041
      %3071 = vmatpush.msra.mxu0 %v3037
      %3072 = vmatpush.msra.mxu0 %v3033
      %3073 = vmatpush.msra.mxu0 %v3029
      %3074 = vmatpush.msra.mxu0 %v3025
      %3075 = vmatpush.msra.mxu0 %v3021
      %3076 = vmatpush.msra.mxu0 %v3017
      %3077 = vmatpush.msra.mxu0 %v3013
      %3078 = vmatpush.msra.mxu0 %v3009
      %3079 = vmatpush.msra.mxu0 %v3005
      %3080 = vmatpush.msra.mxu0 %v3001
      %3081 = vmatmul.f32.gmra.mxu0 %v2992
      %v3082 = vpop.f32.mrf.mxu0
      %v3083 = vadd.f32 0.0, %v3082
      %3084 = vdwg.mxu0
      %3085 = vmatpush.msra.mxu0 %v3062
      %3086 = vmatpush.msra.mxu0 %v3058
      %3087 = vmatpush.msra.mxu0 %v3054
      %3088 = vmatpush.msra.mxu0 %v3050
      %3089 = vmatpush.msra.mxu0 %v3046
      %3090 = vmatpush.msra.mxu0 %v3042
      %3091 = vmatpush.msra.mxu0 %v3038
      %3092 = vmatpush.msra.mxu0 %v3034
      %3093 = vmatpush.msra.mxu0 %v3030
      %3094 = vmatpush.msra.mxu0 %v3026
      %3095 = vmatpush.msra.mxu0 %v3022
      %3096 = vmatpush.msra.mxu0 %v3018
      %3097 = vmatpush.msra.mxu0 %v3014
      %3098 = vmatpush.msra.mxu0 %v3010
      %3099 = vmatpush.msra.mxu0 %v3006
      %3100 = vmatpush.msra.mxu0 %v3002
      %3101 = vmatmul.f32.gmra.mxu0 %v2992
      %v3102 = vpop.f32.mrf.mxu0
      %v3103 = vadd.f32 0.0, %v3102
      %3104 = vdwg.mxu0
      %3105 = vmatpush.msra.mxu0 %v3063
      %3106 = vmatpush.msra.mxu0 %v3059
      %3107 = vmatpush.msra.mxu0 %v3055
      %3108 = vmatpush.msra.mxu0 %v3051
      %3109 = vmatpush.msra.mxu0 %v3047
      %3110 = vmatpush.msra.mxu0 %v3043
      %3111 = vmatpush.msra.mxu0 %v3039
      %3112 = vmatpush.msra.mxu0 %v3035
      %3113 = vmatpush.msra.mxu0 %v3031
      %3114 = vmatpush.msra.mxu0 %v3027
      %3115 = vmatpush.msra.mxu0 %v3023
      %3116 = vmatpush.msra.mxu0 %v3019
      %3117 = vmatpush.msra.mxu0 %v3015
      %3118 = vmatpush.msra.mxu0 %v3011
      %3119 = vmatpush.msra.mxu0 %v3007
      %3120 = vmatpush.msra.mxu0 %v3003
      %3121 = vmatmul.f32.gmra.mxu0 %v2992
      %v3122 = vpop.f32.mrf.mxu0
      %v3123 = vadd.f32 0.0, %v3122
      %3124 = vdwg.mxu0
      %3125 = vmatpush.msra.mxu0 %v3064
      %3126 = vmatpush.msra.mxu0 %v3060
      %3127 = vmatpush.msra.mxu0 %v3056
      %3128 = vmatpush.msra.mxu0 %v3052
      %3129 = vmatpush.msra.mxu0 %v3048
      %3130 = vmatpush.msra.mxu0 %v3044
      %3131 = vmatpush.msra.mxu0 %v3040
      %3132 = vmatpush.msra.mxu0 %v3036
      %3133 = vmatpush.msra.mxu0 %v3032
      %3134 = vmatpush.msra.mxu0 %v3028
      %3135 = vmatpush.msra.mxu0 %v3024
      %3136 = vmatpush.msra.mxu0 %v3020
      %3137 = vmatpush.msra.mxu0 %v3016
      %3138 = vmatpush.msra.mxu0 %v3012
      %3139 = vmatpush.msra.mxu0 %v3008
      %3140 = vmatpush.msra.mxu0 %v3004
      %3141 = vmatmul.f32.gmra.mxu0 %v2992
      %v3142 = vpop.f32.mrf.mxu0
      %v3143 = vadd.f32 0.0, %v3142
      %3144 = vdwg.mxu0
      %v3145 = vadd.f32 %v2997, %v3083
      %v3146 = vadd.f32 %v2998, %v3103
      %v3147 = vadd.f32 %v2999, %v3123
      %v3148 = vadd.f32 %v3000, %v3143
      %v3149 = vxor.u32 %v3145, 2147483648
      %v3150 = vmul.f32 %v3149, 1.442695
      %v3151 = vpow.pop %v3150
      %v3152 = vadd.f32 %v3151, 1.0
      %v3153 = vrcp.pop %v3152
      %v3154 = vmul.f32 %v3152, %v3153
      %v3155 = vsub.f32 1.0, %v3154
      %v3156 = vmul.f32 %v3153, %v3155
      %v3157 = vadd.f32 %v3153, %v3156
      %vm3158 = vweird.f32 %v3152
      %vm3159 = vweird.f32 %v3153
      %vm3160 = vmor %vm3158, %vm3159
      %v3161 = vsel %vm3160, %v3153, %v3157
      %v3162 = vand.u32 2147483647, %v3152
      %vm3163 = vcmp.eq.f32.partialorder %v3162, 8.507059e+37
      %v3164 = vand.u32 %v3152, 2147483648
      %v3165 = vor.u32 1.1754944e-38, %v3164
      %v3166 = vsel %vm3163, %v3165, %v3161
      %v3167 = vmul.f32 1.0, %v3166
      %v3168 = vxor.u32 %v3146, 2147483648
      %v3169 = vmul.f32 %v3168, 1.442695
      %v3170 = vpow.pop %v3169
      %v3171 = vadd.f32 %v3170, 1.0
      %v3172 = vrcp.pop %v3171
      %v3173 = vmul.f32 %v3171, %v3172
      %v3174 = vsub.f32 1.0, %v3173
      %v3175 = vmul.f32 %v3172, %v3174
      %v3176 = vadd.f32 %v3172, %v3175
      %vm3177 = vweird.f32 %v3171
      %vm3178 = vweird.f32 %v3172
      %vm3179 = vmor %vm3177, %vm3178
      %v3180 = vsel %vm3179, %v3172, %v3176
      %v3181 = vand.u32 2147483647, %v3171
      %vm3182 = vcmp.eq.f32.partialorder %v3181, 8.507059e+37
      %v3183 = vand.u32 %v3171, 2147483648
      %v3184 = vor.u32 1.1754944e-38, %v3183
      %v3185 = vsel %vm3182, %v3184, %v3180
      %v3186 = vmul.f32 1.0, %v3185
      %v3187 = vtanh.pop %v3147
      %v3188 = vxor.u32 %v3148, 2147483648
      %v3189 = vmul.f32 %v3188, 1.442695
      %v3190 = vpow.pop %v3189
      %v3191 = vadd.f32 %v3190, 1.0
      %v3192 = vrcp.pop %v3191
      %v3193 = vmul.f32 %v3191, %v3192
      %v3194 = vsub.f32 1.0, %v3193
      %v3195 = vmul.f32 %v3192, %v3194
      %v3196 = vadd.f32 %v3192, %v3195
      %vm3197 = vweird.f32 %v3191
      %vm3198 = vweird.f32 %v3192
      %vm3199 = vmor %vm3197, %vm3198
      %v3200 = vsel %vm3199, %v3192, %v3196
      %v3201 = vand.u32 2147483647, %v3191
      %vm3202 = vcmp.eq.f32.partialorder %v3201, 8.507059e+37
      %v3203 = vand.u32 %v3191, 2147483648
      %v3204 = vor.u32 1.1754944e-38, %v3203
      %v3205 = vsel %vm3202, %v3204, %v3200
      %v3206 = vmul.f32 1.0, %v3205
      %v3207 = vmul.f32 %v3186, %v2993
      %v3208 = vmul.f32 %v3167, %v3187
      %v3209 = vadd.f32 %v3207, %v3208
      %v3210 = vtanh.pop %v3209
      %v3211 = vmul.f32 %v3206, %v3210
      %s3212 = scalar_lea.vmem %s302, 80
      %3213 = vst [vmem:[%s3212] sm:$0xff] %v3211
      %s3214 = sadd.s32 %s944, 10
      %p3215 = scmp.lt.s32.totalorder %s3214, 37
      %s3216 = scalar_select %p3215, 1, 0
      %v3217 = vstv %s3216
      %vm3218 = vcmp.eq.s32.totalorder %v3217, 1
      %v3219 = vsel %vm3218, %v3211, %v2992
      %v3220 = vsel %vm3218, %v3209, %v2993
      %s3221 = smul.u32 11, 4
      %s3222 = smul.addr %s3221, 8
      %s3223 = scalar_lea.vmem [#allocation2], %s3222
      %v3224 = vld [vmem:[%s3223] sm:$0xff]
      %v3225 = vld [vmem:[%s3223 + $0x8] sm:$0xff]
      %v3226 = vld [vmem:[%s3223 + $0x10] sm:$0xff]
      %v3227 = vld [vmem:[%s3223 + $0x18] sm:$0xff]
      %v3228 = vld [vmem:[%s4] sm:$0xff]
      %v3229 = vld [vmem:[%s4 + $0x8] sm:$0xff]
      %v3230 = vld [vmem:[%s4 + $0x10] sm:$0xff]
      %v3231 = vld [vmem:[%s4 + $0x18] sm:$0xff]
      %v3232 = vld [vmem:[%s4 + $0x20] sm:$0xff]
      %v3233 = vld [vmem:[%s4 + $0x28] sm:$0xff]
      %v3234 = vld [vmem:[%s4 + $0x30] sm:$0xff]
      %v3235 = vld [vmem:[%s4 + $0x38] sm:$0xff]
      %v3236 = vld [vmem:[%s4 + $0x40] sm:$0xff]
      %v3237 = vld [vmem:[%s4 + $0x48] sm:$0xff]
      %v3238 = vld [vmem:[%s4 + $0x50] sm:$0xff]
      %v3239 = vld [vmem:[%s4 + $0x58] sm:$0xff]
      %v3240 = vld [vmem:[%s4 + $0x60] sm:$0xff]
      %v3241 = vld [vmem:[%s4 + $0x68] sm:$0xff]
      %v3242 = vld [vmem:[%s4 + $0x70] sm:$0xff]
      %v3243 = vld [vmem:[%s4 + $0x78] sm:$0xff]
      %v3244 = vld [vmem:[%s4 + $0x80] sm:$0xff]
      %v3245 = vld [vmem:[%s4 + $0x88] sm:$0xff]
      %v3246 = vld [vmem:[%s4 + $0x90] sm:$0xff]
      %v3247 = vld [vmem:[%s4 + $0x98] sm:$0xff]
      %v3248 = vld [vmem:[%s4 + $0xa0] sm:$0xff]
      %v3249 = vld [vmem:[%s4 + $0xa8] sm:$0xff]
      %v3250 = vld [vmem:[%s4 + $0xb0] sm:$0xff]
      %v3251 = vld [vmem:[%s4 + $0xb8] sm:$0xff]
      %v3252 = vld [vmem:[%s4 + $0xc0] sm:$0xff]
      %v3253 = vld [vmem:[%s4 + $0xc8] sm:$0xff]
      %v3254 = vld [vmem:[%s4 + $0xd0] sm:$0xff]
      %v3255 = vld [vmem:[%s4 + $0xd8] sm:$0xff]
      %v3256 = vld [vmem:[%s4 + $0xe0] sm:$0xff]
      %v3257 = vld [vmem:[%s4 + $0xe8] sm:$0xff]
      %v3258 = vld [vmem:[%s4 + $0xf0] sm:$0xff]
      %v3259 = vld [vmem:[%s4 + $0xf8] sm:$0xff]
      %v3260 = vld [vmem:[%s4 + $0x100] sm:$0xff]
      %v3261 = vld [vmem:[%s4 + $0x108] sm:$0xff]
      %v3262 = vld [vmem:[%s4 + $0x110] sm:$0xff]
      %v3263 = vld [vmem:[%s4 + $0x118] sm:$0xff]
      %v3264 = vld [vmem:[%s4 + $0x120] sm:$0xff]
      %v3265 = vld [vmem:[%s4 + $0x128] sm:$0xff]
      %v3266 = vld [vmem:[%s4 + $0x130] sm:$0xff]
      %v3267 = vld [vmem:[%s4 + $0x138] sm:$0xff]
      %v3268 = vld [vmem:[%s4 + $0x140] sm:$0xff]
      %v3269 = vld [vmem:[%s4 + $0x148] sm:$0xff]
      %v3270 = vld [vmem:[%s4 + $0x150] sm:$0xff]
      %v3271 = vld [vmem:[%s4 + $0x158] sm:$0xff]
      %v3272 = vld [vmem:[%s4 + $0x160] sm:$0xff]
      %v3273 = vld [vmem:[%s4 + $0x168] sm:$0xff]
      %v3274 = vld [vmem:[%s4 + $0x170] sm:$0xff]
      %v3275 = vld [vmem:[%s4 + $0x178] sm:$0xff]
      %v3276 = vld [vmem:[%s4 + $0x180] sm:$0xff]
      %v3277 = vld [vmem:[%s4 + $0x188] sm:$0xff]
      %v3278 = vld [vmem:[%s4 + $0x190] sm:$0xff]
      %v3279 = vld [vmem:[%s4 + $0x198] sm:$0xff]
      %v3280 = vld [vmem:[%s4 + $0x1a0] sm:$0xff]
      %v3281 = vld [vmem:[%s4 + $0x1a8] sm:$0xff]
      %v3282 = vld [vmem:[%s4 + $0x1b0] sm:$0xff]
      %v3283 = vld [vmem:[%s4 + $0x1b8] sm:$0xff]
      %v3284 = vld [vmem:[%s4 + $0x1c0] sm:$0xff]
      %v3285 = vld [vmem:[%s4 + $0x1c8] sm:$0xff]
      %v3286 = vld [vmem:[%s4 + $0x1d0] sm:$0xff]
      %v3287 = vld [vmem:[%s4 + $0x1d8] sm:$0xff]
      %v3288 = vld [vmem:[%s4 + $0x1e0] sm:$0xff]
      %v3289 = vld [vmem:[%s4 + $0x1e8] sm:$0xff]
      %v3290 = vld [vmem:[%s4 + $0x1f0] sm:$0xff]
      %v3291 = vld [vmem:[%s4 + $0x1f8] sm:$0xff]
      %3292 = vmatpush.msra.mxu0 %v3288
      %3293 = vmatpush.msra.mxu0 %v3284
      %3294 = vmatpush.msra.mxu0 %v3280
      %3295 = vmatpush.msra.mxu0 %v3276
      %3296 = vmatpush.msra.mxu0 %v3272
      %3297 = vmatpush.msra.mxu0 %v3268
      %3298 = vmatpush.msra.mxu0 %v3264
      %3299 = vmatpush.msra.mxu0 %v3260
      %3300 = vmatpush.msra.mxu0 %v3256
      %3301 = vmatpush.msra.mxu0 %v3252
      %3302 = vmatpush.msra.mxu0 %v3248
      %3303 = vmatpush.msra.mxu0 %v3244
      %3304 = vmatpush.msra.mxu0 %v3240
      %3305 = vmatpush.msra.mxu0 %v3236
      %3306 = vmatpush.msra.mxu0 %v3232
      %3307 = vmatpush.msra.mxu0 %v3228
      %3308 = vmatmul.f32.gmra.mxu0 %v3219
      %v3309 = vpop.f32.mrf.mxu0
      %v3310 = vadd.f32 0.0, %v3309
      %3311 = vdwg.mxu0
      %3312 = vmatpush.msra.mxu0 %v3289
      %3313 = vmatpush.msra.mxu0 %v3285
      %3314 = vmatpush.msra.mxu0 %v3281
      %3315 = vmatpush.msra.mxu0 %v3277
      %3316 = vmatpush.msra.mxu0 %v3273
      %3317 = vmatpush.msra.mxu0 %v3269
      %3318 = vmatpush.msra.mxu0 %v3265
      %3319 = vmatpush.msra.mxu0 %v3261
      %3320 = vmatpush.msra.mxu0 %v3257
      %3321 = vmatpush.msra.mxu0 %v3253
      %3322 = vmatpush.msra.mxu0 %v3249
      %3323 = vmatpush.msra.mxu0 %v3245
      %3324 = vmatpush.msra.mxu0 %v3241
      %3325 = vmatpush.msra.mxu0 %v3237
      %3326 = vmatpush.msra.mxu0 %v3233
      %3327 = vmatpush.msra.mxu0 %v3229
      %3328 = vmatmul.f32.gmra.mxu0 %v3219
      %v3329 = vpop.f32.mrf.mxu0
      %v3330 = vadd.f32 0.0, %v3329
      %3331 = vdwg.mxu0
      %3332 = vmatpush.msra.mxu0 %v3290
      %3333 = vmatpush.msra.mxu0 %v3286
      %3334 = vmatpush.msra.mxu0 %v3282
      %3335 = vmatpush.msra.mxu0 %v3278
      %3336 = vmatpush.msra.mxu0 %v3274
      %3337 = vmatpush.msra.mxu0 %v3270
      %3338 = vmatpush.msra.mxu0 %v3266
      %3339 = vmatpush.msra.mxu0 %v3262
      %3340 = vmatpush.msra.mxu0 %v3258
      %3341 = vmatpush.msra.mxu0 %v3254
      %3342 = vmatpush.msra.mxu0 %v3250
      %3343 = vmatpush.msra.mxu0 %v3246
      %3344 = vmatpush.msra.mxu0 %v3242
      %3345 = vmatpush.msra.mxu0 %v3238
      %3346 = vmatpush.msra.mxu0 %v3234
      %3347 = vmatpush.msra.mxu0 %v3230
      %3348 = vmatmul.f32.gmra.mxu0 %v3219
      %v3349 = vpop.f32.mrf.mxu0
      %v3350 = vadd.f32 0.0, %v3349
      %3351 = vdwg.mxu0
      %3352 = vmatpush.msra.mxu0 %v3291
      %3353 = vmatpush.msra.mxu0 %v3287
      %3354 = vmatpush.msra.mxu0 %v3283
      %3355 = vmatpush.msra.mxu0 %v3279
      %3356 = vmatpush.msra.mxu0 %v3275
      %3357 = vmatpush.msra.mxu0 %v3271
      %3358 = vmatpush.msra.mxu0 %v3267
      %3359 = vmatpush.msra.mxu0 %v3263
      %3360 = vmatpush.msra.mxu0 %v3259
      %3361 = vmatpush.msra.mxu0 %v3255
      %3362 = vmatpush.msra.mxu0 %v3251
      %3363 = vmatpush.msra.mxu0 %v3247
      %3364 = vmatpush.msra.mxu0 %v3243
      %3365 = vmatpush.msra.mxu0 %v3239
      %3366 = vmatpush.msra.mxu0 %v3235
      %3367 = vmatpush.msra.mxu0 %v3231
      %3368 = vmatmul.f32.gmra.mxu0 %v3219
      %v3369 = vpop.f32.mrf.mxu0
      %v3370 = vadd.f32 0.0, %v3369
      %3371 = vdwg.mxu0
      %v3372 = vadd.f32 %v3224, %v3310
      %v3373 = vadd.f32 %v3225, %v3330
      %v3374 = vadd.f32 %v3226, %v3350
      %v3375 = vadd.f32 %v3227, %v3370
      %v3376 = vxor.u32 %v3372, 2147483648
      %v3377 = vmul.f32 %v3376, 1.442695
      %v3378 = vpow.pop %v3377
      %v3379 = vadd.f32 %v3378, 1.0
      %v3380 = vrcp.pop %v3379
      %v3381 = vmul.f32 %v3379, %v3380
      %v3382 = vsub.f32 1.0, %v3381
      %v3383 = vmul.f32 %v3380, %v3382
      %v3384 = vadd.f32 %v3380, %v3383
      %vm3385 = vweird.f32 %v3379
      %vm3386 = vweird.f32 %v3380
      %vm3387 = vmor %vm3385, %vm3386
      %v3388 = vsel %vm3387, %v3380, %v3384
      %v3389 = vand.u32 2147483647, %v3379
      %vm3390 = vcmp.eq.f32.partialorder %v3389, 8.507059e+37
      %v3391 = vand.u32 %v3379, 2147483648
      %v3392 = vor.u32 1.1754944e-38, %v3391
      %v3393 = vsel %vm3390, %v3392, %v3388
      %v3394 = vmul.f32 1.0, %v3393
      %v3395 = vxor.u32 %v3373, 2147483648
      %v3396 = vmul.f32 %v3395, 1.442695
      %v3397 = vpow.pop %v3396
      %v3398 = vadd.f32 %v3397, 1.0
      %v3399 = vrcp.pop %v3398
      %v3400 = vmul.f32 %v3398, %v3399
      %v3401 = vsub.f32 1.0, %v3400
      %v3402 = vmul.f32 %v3399, %v3401
      %v3403 = vadd.f32 %v3399, %v3402
      %vm3404 = vweird.f32 %v3398
      %vm3405 = vweird.f32 %v3399
      %vm3406 = vmor %vm3404, %vm3405
      %v3407 = vsel %vm3406, %v3399, %v3403
      %v3408 = vand.u32 2147483647, %v3398
      %vm3409 = vcmp.eq.f32.partialorder %v3408, 8.507059e+37
      %v3410 = vand.u32 %v3398, 2147483648
      %v3411 = vor.u32 1.1754944e-38, %v3410
      %v3412 = vsel %vm3409, %v3411, %v3407
      %v3413 = vmul.f32 1.0, %v3412
      %v3414 = vtanh.pop %v3374
      %v3415 = vxor.u32 %v3375, 2147483648
      %v3416 = vmul.f32 %v3415, 1.442695
      %v3417 = vpow.pop %v3416
      %v3418 = vadd.f32 %v3417, 1.0
      %v3419 = vrcp.pop %v3418
      %v3420 = vmul.f32 %v3418, %v3419
      %v3421 = vsub.f32 1.0, %v3420
      %v3422 = vmul.f32 %v3419, %v3421
      %v3423 = vadd.f32 %v3419, %v3422
      %vm3424 = vweird.f32 %v3418
      %vm3425 = vweird.f32 %v3419
      %vm3426 = vmor %vm3424, %vm3425
      %v3427 = vsel %vm3426, %v3419, %v3423
      %v3428 = vand.u32 2147483647, %v3418
      %vm3429 = vcmp.eq.f32.partialorder %v3428, 8.507059e+37
      %v3430 = vand.u32 %v3418, 2147483648
      %v3431 = vor.u32 1.1754944e-38, %v3430
      %v3432 = vsel %vm3429, %v3431, %v3427
      %v3433 = vmul.f32 1.0, %v3432
      %v3434 = vmul.f32 %v3413, %v3220
      %v3435 = vmul.f32 %v3394, %v3414
      %v3436 = vadd.f32 %v3434, %v3435
      %v3437 = vtanh.pop %v3436
      %v3438 = vmul.f32 %v3433, %v3437
      %s3439 = scalar_lea.vmem %s302, 88
      %3440 = vst [vmem:[%s3439] sm:$0xff] %v3438
      %s3441 = sadd.s32 %s944, 11
      %p3442 = scmp.lt.s32.totalorder %s3441, 37
      %s3443 = scalar_select %p3442, 1, 0
      %v3444 = vstv %s3443
      %vm3445 = vcmp.eq.s32.totalorder %v3444, 1
      %v3446 = vsel %vm3445, %v3438, %v3219
      %v3447 = vsel %vm3445, %v3436, %v3220
      %s3448 = smul.u32 12, 4
      %s3449 = smul.addr %s3448, 8
      %s3450 = scalar_lea.vmem [#allocation2], %s3449
      %v3451 = vld [vmem:[%s3450] sm:$0xff]
      %v3452 = vld [vmem:[%s3450 + $0x8] sm:$0xff]
      %v3453 = vld [vmem:[%s3450 + $0x10] sm:$0xff]
      %v3454 = vld [vmem:[%s3450 + $0x18] sm:$0xff]
      %v3455 = vld [vmem:[%s4] sm:$0xff]
      %v3456 = vld [vmem:[%s4 + $0x8] sm:$0xff]
      %v3457 = vld [vmem:[%s4 + $0x10] sm:$0xff]
      %v3458 = vld [vmem:[%s4 + $0x18] sm:$0xff]
      %v3459 = vld [vmem:[%s4 + $0x20] sm:$0xff]
      %v3460 = vld [vmem:[%s4 + $0x28] sm:$0xff]
      %v3461 = vld [vmem:[%s4 + $0x30] sm:$0xff]
      %v3462 = vld [vmem:[%s4 + $0x38] sm:$0xff]
      %v3463 = vld [vmem:[%s4 + $0x40] sm:$0xff]
      %v3464 = vld [vmem:[%s4 + $0x48] sm:$0xff]
      %v3465 = vld [vmem:[%s4 + $0x50] sm:$0xff]
      %v3466 = vld [vmem:[%s4 + $0x58] sm:$0xff]
      %v3467 = vld [vmem:[%s4 + $0x60] sm:$0xff]
      %v3468 = vld [vmem:[%s4 + $0x68] sm:$0xff]
      %v3469 = vld [vmem:[%s4 + $0x70] sm:$0xff]
      %v3470 = vld [vmem:[%s4 + $0x78] sm:$0xff]
      %v3471 = vld [vmem:[%s4 + $0x80] sm:$0xff]
      %v3472 = vld [vmem:[%s4 + $0x88] sm:$0xff]
      %v3473 = vld [vmem:[%s4 + $0x90] sm:$0xff]
      %v3474 = vld [vmem:[%s4 + $0x98] sm:$0xff]
      %v3475 = vld [vmem:[%s4 + $0xa0] sm:$0xff]
      %v3476 = vld [vmem:[%s4 + $0xa8] sm:$0xff]
      %v3477 = vld [vmem:[%s4 + $0xb0] sm:$0xff]
      %v3478 = vld [vmem:[%s4 + $0xb8] sm:$0xff]
      %v3479 = vld [vmem:[%s4 + $0xc0] sm:$0xff]
      %v3480 = vld [vmem:[%s4 + $0xc8] sm:$0xff]
      %v3481 = vld [vmem:[%s4 + $0xd0] sm:$0xff]
      %v3482 = vld [vmem:[%s4 + $0xd8] sm:$0xff]
      %v3483 = vld [vmem:[%s4 + $0xe0] sm:$0xff]
      %v3484 = vld [vmem:[%s4 + $0xe8] sm:$0xff]
      %v3485 = vld [vmem:[%s4 + $0xf0] sm:$0xff]
      %v3486 = vld [vmem:[%s4 + $0xf8] sm:$0xff]
      %v3487 = vld [vmem:[%s4 + $0x100] sm:$0xff]
      %v3488 = vld [vmem:[%s4 + $0x108] sm:$0xff]
      %v3489 = vld [vmem:[%s4 + $0x110] sm:$0xff]
      %v3490 = vld [vmem:[%s4 + $0x118] sm:$0xff]
      %v3491 = vld [vmem:[%s4 + $0x120] sm:$0xff]
      %v3492 = vld [vmem:[%s4 + $0x128] sm:$0xff]
      %v3493 = vld [vmem:[%s4 + $0x130] sm:$0xff]
      %v3494 = vld [vmem:[%s4 + $0x138] sm:$0xff]
      %v3495 = vld [vmem:[%s4 + $0x140] sm:$0xff]
      %v3496 = vld [vmem:[%s4 + $0x148] sm:$0xff]
      %v3497 = vld [vmem:[%s4 + $0x150] sm:$0xff]
      %v3498 = vld [vmem:[%s4 + $0x158] sm:$0xff]
      %v3499 = vld [vmem:[%s4 + $0x160] sm:$0xff]
      %v3500 = vld [vmem:[%s4 + $0x168] sm:$0xff]
      %v3501 = vld [vmem:[%s4 + $0x170] sm:$0xff]
      %v3502 = vld [vmem:[%s4 + $0x178] sm:$0xff]
      %v3503 = vld [vmem:[%s4 + $0x180] sm:$0xff]
      %v3504 = vld [vmem:[%s4 + $0x188] sm:$0xff]
      %v3505 = vld [vmem:[%s4 + $0x190] sm:$0xff]
      %v3506 = vld [vmem:[%s4 + $0x198] sm:$0xff]
      %v3507 = vld [vmem:[%s4 + $0x1a0] sm:$0xff]
      %v3508 = vld [vmem:[%s4 + $0x1a8] sm:$0xff]
      %v3509 = vld [vmem:[%s4 + $0x1b0] sm:$0xff]
      %v3510 = vld [vmem:[%s4 + $0x1b8] sm:$0xff]
      %v3511 = vld [vmem:[%s4 + $0x1c0] sm:$0xff]
      %v3512 = vld [vmem:[%s4 + $0x1c8] sm:$0xff]
      %v3513 = vld [vmem:[%s4 + $0x1d0] sm:$0xff]
      %v3514 = vld [vmem:[%s4 + $0x1d8] sm:$0xff]
      %v3515 = vld [vmem:[%s4 + $0x1e0] sm:$0xff]
      %v3516 = vld [vmem:[%s4 + $0x1e8] sm:$0xff]
      %v3517 = vld [vmem:[%s4 + $0x1f0] sm:$0xff]
      %v3518 = vld [vmem:[%s4 + $0x1f8] sm:$0xff]
      %3519 = vmatpush.msra.mxu0 %v3515
      %3520 = vmatpush.msra.mxu0 %v3511
      %3521 = vmatpush.msra.mxu0 %v3507
      %3522 = vmatpush.msra.mxu0 %v3503
      %3523 = vmatpush.msra.mxu0 %v3499
      %3524 = vmatpush.msra.mxu0 %v3495
      %3525 = vmatpush.msra.mxu0 %v3491
      %3526 = vmatpush.msra.mxu0 %v3487
      %3527 = vmatpush.msra.mxu0 %v3483
      %3528 = vmatpush.msra.mxu0 %v3479
      %3529 = vmatpush.msra.mxu0 %v3475
      %3530 = vmatpush.msra.mxu0 %v3471
      %3531 = vmatpush.msra.mxu0 %v3467
      %3532 = vmatpush.msra.mxu0 %v3463
      %3533 = vmatpush.msra.mxu0 %v3459
      %3534 = vmatpush.msra.mxu0 %v3455
      %3535 = vmatmul.f32.gmra.mxu0 %v3446
      %v3536 = vpop.f32.mrf.mxu0
      %v3537 = vadd.f32 0.0, %v3536
      %3538 = vdwg.mxu0
      %3539 = vmatpush.msra.mxu0 %v3516
      %3540 = vmatpush.msra.mxu0 %v3512
      %3541 = vmatpush.msra.mxu0 %v3508
      %3542 = vmatpush.msra.mxu0 %v3504
      %3543 = vmatpush.msra.mxu0 %v3500
      %3544 = vmatpush.msra.mxu0 %v3496
      %3545 = vmatpush.msra.mxu0 %v3492
      %3546 = vmatpush.msra.mxu0 %v3488
      %3547 = vmatpush.msra.mxu0 %v3484
      %3548 = vmatpush.msra.mxu0 %v3480
      %3549 = vmatpush.msra.mxu0 %v3476
      %3550 = vmatpush.msra.mxu0 %v3472
      %3551 = vmatpush.msra.mxu0 %v3468
      %3552 = vmatpush.msra.mxu0 %v3464
      %3553 = vmatpush.msra.mxu0 %v3460
      %3554 = vmatpush.msra.mxu0 %v3456
      %3555 = vmatmul.f32.gmra.mxu0 %v3446
      %v3556 = vpop.f32.mrf.mxu0
      %v3557 = vadd.f32 0.0, %v3556
      %3558 = vdwg.mxu0
      %3559 = vmatpush.msra.mxu0 %v3517
      %3560 = vmatpush.msra.mxu0 %v3513
      %3561 = vmatpush.msra.mxu0 %v3509
      %3562 = vmatpush.msra.mxu0 %v3505
      %3563 = vmatpush.msra.mxu0 %v3501
      %3564 = vmatpush.msra.mxu0 %v3497
      %3565 = vmatpush.msra.mxu0 %v3493
      %3566 = vmatpush.msra.mxu0 %v3489
      %3567 = vmatpush.msra.mxu0 %v3485
      %3568 = vmatpush.msra.mxu0 %v3481
      %3569 = vmatpush.msra.mxu0 %v3477
      %3570 = vmatpush.msra.mxu0 %v3473
      %3571 = vmatpush.msra.mxu0 %v3469
      %3572 = vmatpush.msra.mxu0 %v3465
      %3573 = vmatpush.msra.mxu0 %v3461
      %3574 = vmatpush.msra.mxu0 %v3457
      %3575 = vmatmul.f32.gmra.mxu0 %v3446
      %v3576 = vpop.f32.mrf.mxu0
      %v3577 = vadd.f32 0.0, %v3576
      %3578 = vdwg.mxu0
      %3579 = vmatpush.msra.mxu0 %v3518
      %3580 = vmatpush.msra.mxu0 %v3514
      %3581 = vmatpush.msra.mxu0 %v3510
      %3582 = vmatpush.msra.mxu0 %v3506
      %3583 = vmatpush.msra.mxu0 %v3502
      %3584 = vmatpush.msra.mxu0 %v3498
      %3585 = vmatpush.msra.mxu0 %v3494
      %3586 = vmatpush.msra.mxu0 %v3490
      %3587 = vmatpush.msra.mxu0 %v3486
      %3588 = vmatpush.msra.mxu0 %v3482
      %3589 = vmatpush.msra.mxu0 %v3478
      %3590 = vmatpush.msra.mxu0 %v3474
      %3591 = vmatpush.msra.mxu0 %v3470
      %3592 = vmatpush.msra.mxu0 %v3466
      %3593 = vmatpush.msra.mxu0 %v3462
      %3594 = vmatpush.msra.mxu0 %v3458
      %3595 = vmatmul.f32.gmra.mxu0 %v3446
      %v3596 = vpop.f32.mrf.mxu0
      %v3597 = vadd.f32 0.0, %v3596
      %3598 = vdwg.mxu0
      %v3599 = vadd.f32 %v3451, %v3537
      %v3600 = vadd.f32 %v3452, %v3557
      %v3601 = vadd.f32 %v3453, %v3577
      %v3602 = vadd.f32 %v3454, %v3597
      %v3603 = vxor.u32 %v3599, 2147483648
      %v3604 = vmul.f32 %v3603, 1.442695
      %v3605 = vpow.pop %v3604
      %v3606 = vadd.f32 %v3605, 1.0
      %v3607 = vrcp.pop %v3606
      %v3608 = vmul.f32 %v3606, %v3607
      %v3609 = vsub.f32 1.0, %v3608
      %v3610 = vmul.f32 %v3607, %v3609
      %v3611 = vadd.f32 %v3607, %v3610
      %vm3612 = vweird.f32 %v3606
      %vm3613 = vweird.f32 %v3607
      %vm3614 = vmor %vm3612, %vm3613
      %v3615 = vsel %vm3614, %v3607, %v3611
      %v3616 = vand.u32 2147483647, %v3606
      %vm3617 = vcmp.eq.f32.partialorder %v3616, 8.507059e+37
      %v3618 = vand.u32 %v3606, 2147483648
      %v3619 = vor.u32 1.1754944e-38, %v3618
      %v3620 = vsel %vm3617, %v3619, %v3615
      %v3621 = vmul.f32 1.0, %v3620
      %v3622 = vxor.u32 %v3600, 2147483648
      %v3623 = vmul.f32 %v3622, 1.442695
      %v3624 = vpow.pop %v3623
      %v3625 = vadd.f32 %v3624, 1.0
      %v3626 = vrcp.pop %v3625
      %v3627 = vmul.f32 %v3625, %v3626
      %v3628 = vsub.f32 1.0, %v3627
      %v3629 = vmul.f32 %v3626, %v3628
      %v3630 = vadd.f32 %v3626, %v3629
      %vm3631 = vweird.f32 %v3625
      %vm3632 = vweird.f32 %v3626
      %vm3633 = vmor %vm3631, %vm3632
      %v3634 = vsel %vm3633, %v3626, %v3630
      %v3635 = vand.u32 2147483647, %v3625
      %vm3636 = vcmp.eq.f32.partialorder %v3635, 8.507059e+37
      %v3637 = vand.u32 %v3625, 2147483648
      %v3638 = vor.u32 1.1754944e-38, %v3637
      %v3639 = vsel %vm3636, %v3638, %v3634
      %v3640 = vmul.f32 1.0, %v3639
      %v3641 = vtanh.pop %v3601
      %v3642 = vxor.u32 %v3602, 2147483648
      %v3643 = vmul.f32 %v3642, 1.442695
      %v3644 = vpow.pop %v3643
      %v3645 = vadd.f32 %v3644, 1.0
      %v3646 = vrcp.pop %v3645
      %v3647 = vmul.f32 %v3645, %v3646
      %v3648 = vsub.f32 1.0, %v3647
      %v3649 = vmul.f32 %v3646, %v3648
      %v3650 = vadd.f32 %v3646, %v3649
      %vm3651 = vweird.f32 %v3645
      %vm3652 = vweird.f32 %v3646
      %vm3653 = vmor %vm3651, %vm3652
      %v3654 = vsel %vm3653, %v3646, %v3650
      %v3655 = vand.u32 2147483647, %v3645
      %vm3656 = vcmp.eq.f32.partialorder %v3655, 8.507059e+37
      %v3657 = vand.u32 %v3645, 2147483648
      %v3658 = vor.u32 1.1754944e-38, %v3657
      %v3659 = vsel %vm3656, %v3658, %v3654
      %v3660 = vmul.f32 1.0, %v3659
      %v3661 = vmul.f32 %v3640, %v3447
      %v3662 = vmul.f32 %v3621, %v3641
      %v3663 = vadd.f32 %v3661, %v3662
      %v3664 = vtanh.pop %v3663
      %v3665 = vmul.f32 %v3660, %v3664
      %s3666 = scalar_lea.vmem %s302, 96
      %3667 = vst [vmem:[%s3666] sm:$0xff] %v3665
      %s3668 = sadd.s32 %s944, 12
      %p3669 = scmp.lt.s32.totalorder %s3668, 37
      %s3670 = scalar_select %p3669, 1, 0
      %v3671 = vstv %s3670
      %vm3672 = vcmp.eq.s32.totalorder %v3671, 1
      %v3673 = vsel %vm3672, %v3665, %v3446
      %v3674 = vsel %vm3672, %v3663, %v3447
      %s3675 = smul.u32 13, 4
      %s3676 = smul.addr %s3675, 8
      %s3677 = scalar_lea.vmem [#allocation2], %s3676
      %v3678 = vld [vmem:[%s3677] sm:$0xff]
      %v3679 = vld [vmem:[%s3677 + $0x8] sm:$0xff]
      %v3680 = vld [vmem:[%s3677 + $0x10] sm:$0xff]
      %v3681 = vld [vmem:[%s3677 + $0x18] sm:$0xff]
      %v3682 = vld [vmem:[%s4] sm:$0xff]
      %v3683 = vld [vmem:[%s4 + $0x8] sm:$0xff]
      %v3684 = vld [vmem:[%s4 + $0x10] sm:$0xff]
      %v3685 = vld [vmem:[%s4 + $0x18] sm:$0xff]
      %v3686 = vld [vmem:[%s4 + $0x20] sm:$0xff]
      %v3687 = vld [vmem:[%s4 + $0x28] sm:$0xff]
      %v3688 = vld [vmem:[%s4 + $0x30] sm:$0xff]
      %v3689 = vld [vmem:[%s4 + $0x38] sm:$0xff]
      %v3690 = vld [vmem:[%s4 + $0x40] sm:$0xff]
      %v3691 = vld [vmem:[%s4 + $0x48] sm:$0xff]
      %v3692 = vld [vmem:[%s4 + $0x50] sm:$0xff]
      %v3693 = vld [vmem:[%s4 + $0x58] sm:$0xff]
      %v3694 = vld [vmem:[%s4 + $0x60] sm:$0xff]
      %v3695 = vld [vmem:[%s4 + $0x68] sm:$0xff]
      %v3696 = vld [vmem:[%s4 + $0x70] sm:$0xff]
      %v3697 = vld [vmem:[%s4 + $0x78] sm:$0xff]
      %v3698 = vld [vmem:[%s4 + $0x80] sm:$0xff]
      %v3699 = vld [vmem:[%s4 + $0x88] sm:$0xff]
      %v3700 = vld [vmem:[%s4 + $0x90] sm:$0xff]
      %v3701 = vld [vmem:[%s4 + $0x98] sm:$0xff]
      %v3702 = vld [vmem:[%s4 + $0xa0] sm:$0xff]
      %v3703 = vld [vmem:[%s4 + $0xa8] sm:$0xff]
      %v3704 = vld [vmem:[%s4 + $0xb0] sm:$0xff]
      %v3705 = vld [vmem:[%s4 + $0xb8] sm:$0xff]
      %v3706 = vld [vmem:[%s4 + $0xc0] sm:$0xff]
      %v3707 = vld [vmem:[%s4 + $0xc8] sm:$0xff]
      %v3708 = vld [vmem:[%s4 + $0xd0] sm:$0xff]
      %v3709 = vld [vmem:[%s4 + $0xd8] sm:$0xff]
      %v3710 = vld [vmem:[%s4 + $0xe0] sm:$0xff]
      %v3711 = vld [vmem:[%s4 + $0xe8] sm:$0xff]
      %v3712 = vld [vmem:[%s4 + $0xf0] sm:$0xff]
      %v3713 = vld [vmem:[%s4 + $0xf8] sm:$0xff]
      %v3714 = vld [vmem:[%s4 + $0x100] sm:$0xff]
      %v3715 = vld [vmem:[%s4 + $0x108] sm:$0xff]
      %v3716 = vld [vmem:[%s4 + $0x110] sm:$0xff]
      %v3717 = vld [vmem:[%s4 + $0x118] sm:$0xff]
      %v3718 = vld [vmem:[%s4 + $0x120] sm:$0xff]
      %v3719 = vld [vmem:[%s4 + $0x128] sm:$0xff]
      %v3720 = vld [vmem:[%s4 + $0x130] sm:$0xff]
      %v3721 = vld [vmem:[%s4 + $0x138] sm:$0xff]
      %v3722 = vld [vmem:[%s4 + $0x140] sm:$0xff]
      %v3723 = vld [vmem:[%s4 + $0x148] sm:$0xff]
      %v3724 = vld [vmem:[%s4 + $0x150] sm:$0xff]
      %v3725 = vld [vmem:[%s4 + $0x158] sm:$0xff]
      %v3726 = vld [vmem:[%s4 + $0x160] sm:$0xff]
      %v3727 = vld [vmem:[%s4 + $0x168] sm:$0xff]
      %v3728 = vld [vmem:[%s4 + $0x170] sm:$0xff]
      %v3729 = vld [vmem:[%s4 + $0x178] sm:$0xff]
      %v3730 = vld [vmem:[%s4 + $0x180] sm:$0xff]
      %v3731 = vld [vmem:[%s4 + $0x188] sm:$0xff]
      %v3732 = vld [vmem:[%s4 + $0x190] sm:$0xff]
      %v3733 = vld [vmem:[%s4 + $0x198] sm:$0xff]
      %v3734 = vld [vmem:[%s4 + $0x1a0] sm:$0xff]
      %v3735 = vld [vmem:[%s4 + $0x1a8] sm:$0xff]
      %v3736 = vld [vmem:[%s4 + $0x1b0] sm:$0xff]
      %v3737 = vld [vmem:[%s4 + $0x1b8] sm:$0xff]
      %v3738 = vld [vmem:[%s4 + $0x1c0] sm:$0xff]
      %v3739 = vld [vmem:[%s4 + $0x1c8] sm:$0xff]
      %v3740 = vld [vmem:[%s4 + $0x1d0] sm:$0xff]
      %v3741 = vld [vmem:[%s4 + $0x1d8] sm:$0xff]
      %v3742 = vld [vmem:[%s4 + $0x1e0] sm:$0xff]
      %v3743 = vld [vmem:[%s4 + $0x1e8] sm:$0xff]
      %v3744 = vld [vmem:[%s4 + $0x1f0] sm:$0xff]
      %v3745 = vld [vmem:[%s4 + $0x1f8] sm:$0xff]
      %3746 = vmatpush.msra.mxu0 %v3742
      %3747 = vmatpush.msra.mxu0 %v3738
      %3748 = vmatpush.msra.mxu0 %v3734
      %3749 = vmatpush.msra.mxu0 %v3730
      %3750 = vmatpush.msra.mxu0 %v3726
      %3751 = vmatpush.msra.mxu0 %v3722
      %3752 = vmatpush.msra.mxu0 %v3718
      %3753 = vmatpush.msra.mxu0 %v3714
      %3754 = vmatpush.msra.mxu0 %v3710
      %3755 = vmatpush.msra.mxu0 %v3706
      %3756 = vmatpush.msra.mxu0 %v3702
      %3757 = vmatpush.msra.mxu0 %v3698
      %3758 = vmatpush.msra.mxu0 %v3694
      %3759 = vmatpush.msra.mxu0 %v3690
      %3760 = vmatpush.msra.mxu0 %v3686
      %3761 = vmatpush.msra.mxu0 %v3682
      %3762 = vmatmul.f32.gmra.mxu0 %v3673
      %v3763 = vpop.f32.mrf.mxu0
      %v3764 = vadd.f32 0.0, %v3763
      %3765 = vdwg.mxu0
      %3766 = vmatpush.msra.mxu0 %v3743
      %3767 = vmatpush.msra.mxu0 %v3739
      %3768 = vmatpush.msra.mxu0 %v3735
      %3769 = vmatpush.msra.mxu0 %v3731
      %3770 = vmatpush.msra.mxu0 %v3727
      %3771 = vmatpush.msra.mxu0 %v3723
      %3772 = vmatpush.msra.mxu0 %v3719
      %3773 = vmatpush.msra.mxu0 %v3715
      %3774 = vmatpush.msra.mxu0 %v3711
      %3775 = vmatpush.msra.mxu0 %v3707
      %3776 = vmatpush.msra.mxu0 %v3703
      %3777 = vmatpush.msra.mxu0 %v3699
      %3778 = vmatpush.msra.mxu0 %v3695
      %3779 = vmatpush.msra.mxu0 %v3691
      %3780 = vmatpush.msra.mxu0 %v3687
      %3781 = vmatpush.msra.mxu0 %v3683
      %3782 = vmatmul.f32.gmra.mxu0 %v3673
      %v3783 = vpop.f32.mrf.mxu0
      %v3784 = vadd.f32 0.0, %v3783
      %3785 = vdwg.mxu0
      %3786 = vmatpush.msra.mxu0 %v3744
      %3787 = vmatpush.msra.mxu0 %v3740
      %3788 = vmatpush.msra.mxu0 %v3736
      %3789 = vmatpush.msra.mxu0 %v3732
      %3790 = vmatpush.msra.mxu0 %v3728
      %3791 = vmatpush.msra.mxu0 %v3724
      %3792 = vmatpush.msra.mxu0 %v3720
      %3793 = vmatpush.msra.mxu0 %v3716
      %3794 = vmatpush.msra.mxu0 %v3712
      %3795 = vmatpush.msra.mxu0 %v3708
      %3796 = vmatpush.msra.mxu0 %v3704
      %3797 = vmatpush.msra.mxu0 %v3700
      %3798 = vmatpush.msra.mxu0 %v3696
      %3799 = vmatpush.msra.mxu0 %v3692
      %3800 = vmatpush.msra.mxu0 %v3688
      %3801 = vmatpush.msra.mxu0 %v3684
      %3802 = vmatmul.f32.gmra.mxu0 %v3673
      %v3803 = vpop.f32.mrf.mxu0
      %v3804 = vadd.f32 0.0, %v3803
      %3805 = vdwg.mxu0
      %3806 = vmatpush.msra.mxu0 %v3745
      %3807 = vmatpush.msra.mxu0 %v3741
      %3808 = vmatpush.msra.mxu0 %v3737
      %3809 = vmatpush.msra.mxu0 %v3733
      %3810 = vmatpush.msra.mxu0 %v3729
      %3811 = vmatpush.msra.mxu0 %v3725
      %3812 = vmatpush.msra.mxu0 %v3721
      %3813 = vmatpush.msra.mxu0 %v3717
      %3814 = vmatpush.msra.mxu0 %v3713
      %3815 = vmatpush.msra.mxu0 %v3709
      %3816 = vmatpush.msra.mxu0 %v3705
      %3817 = vmatpush.msra.mxu0 %v3701
      %3818 = vmatpush.msra.mxu0 %v3697
      %3819 = vmatpush.msra.mxu0 %v3693
      %3820 = vmatpush.msra.mxu0 %v3689
      %3821 = vmatpush.msra.mxu0 %v3685
      %3822 = vmatmul.f32.gmra.mxu0 %v3673
      %v3823 = vpop.f32.mrf.mxu0
      %v3824 = vadd.f32 0.0, %v3823
      %3825 = vdwg.mxu0
      %v3826 = vadd.f32 %v3678, %v3764
      %v3827 = vadd.f32 %v3679, %v3784
      %v3828 = vadd.f32 %v3680, %v3804
      %v3829 = vadd.f32 %v3681, %v3824
      %v3830 = vxor.u32 %v3826, 2147483648
      %v3831 = vmul.f32 %v3830, 1.442695
      %v3832 = vpow.pop %v3831
      %v3833 = vadd.f32 %v3832, 1.0
      %v3834 = vrcp.pop %v3833
      %v3835 = vmul.f32 %v3833, %v3834
      %v3836 = vsub.f32 1.0, %v3835
      %v3837 = vmul.f32 %v3834, %v3836
      %v3838 = vadd.f32 %v3834, %v3837
      %vm3839 = vweird.f32 %v3833
      %vm3840 = vweird.f32 %v3834
      %vm3841 = vmor %vm3839, %vm3840
      %v3842 = vsel %vm3841, %v3834, %v3838
      %v3843 = vand.u32 2147483647, %v3833
      %vm3844 = vcmp.eq.f32.partialorder %v3843, 8.507059e+37
      %v3845 = vand.u32 %v3833, 2147483648
      %v3846 = vor.u32 1.1754944e-38, %v3845
      %v3847 = vsel %vm3844, %v3846, %v3842
      %v3848 = vmul.f32 1.0, %v3847
      %v3849 = vxor.u32 %v3827, 2147483648
      %v3850 = vmul.f32 %v3849, 1.442695
      %v3851 = vpow.pop %v3850
      %v3852 = vadd.f32 %v3851, 1.0
      %v3853 = vrcp.pop %v3852
      %v3854 = vmul.f32 %v3852, %v3853
      %v3855 = vsub.f32 1.0, %v3854
      %v3856 = vmul.f32 %v3853, %v3855
      %v3857 = vadd.f32 %v3853, %v3856
      %vm3858 = vweird.f32 %v3852
      %vm3859 = vweird.f32 %v3853
      %vm3860 = vmor %vm3858, %vm3859
      %v3861 = vsel %vm3860, %v3853, %v3857
      %v3862 = vand.u32 2147483647, %v3852
      %vm3863 = vcmp.eq.f32.partialorder %v3862, 8.507059e+37
      %v3864 = vand.u32 %v3852, 2147483648
      %v3865 = vor.u32 1.1754944e-38, %v3864
      %v3866 = vsel %vm3863, %v3865, %v3861
      %v3867 = vmul.f32 1.0, %v3866
      %v3868 = vtanh.pop %v3828
      %v3869 = vxor.u32 %v3829, 2147483648
      %v3870 = vmul.f32 %v3869, 1.442695
      %v3871 = vpow.pop %v3870
      %v3872 = vadd.f32 %v3871, 1.0
      %v3873 = vrcp.pop %v3872
      %v3874 = vmul.f32 %v3872, %v3873
      %v3875 = vsub.f32 1.0, %v3874
      %v3876 = vmul.f32 %v3873, %v3875
      %v3877 = vadd.f32 %v3873, %v3876
      %vm3878 = vweird.f32 %v3872
      %vm3879 = vweird.f32 %v3873
      %vm3880 = vmor %vm3878, %vm3879
      %v3881 = vsel %vm3880, %v3873, %v3877
      %v3882 = vand.u32 2147483647, %v3872
      %vm3883 = vcmp.eq.f32.partialorder %v3882, 8.507059e+37
      %v3884 = vand.u32 %v3872, 2147483648
      %v3885 = vor.u32 1.1754944e-38, %v3884
      %v3886 = vsel %vm3883, %v3885, %v3881
      %v3887 = vmul.f32 1.0, %v3886
      %v3888 = vmul.f32 %v3867, %v3674
      %v3889 = vmul.f32 %v3848, %v3868
      %v3890 = vadd.f32 %v3888, %v3889
      %v3891 = vtanh.pop %v3890
      %v3892 = vmul.f32 %v3887, %v3891
      %s3893 = scalar_lea.vmem %s302, 104
      %3894 = vst [vmem:[%s3893] sm:$0xff] %v3892
      %s3895 = sadd.s32 %s944, 13
      %p3896 = scmp.lt.s32.totalorder %s3895, 37
      %s3897 = scalar_select %p3896, 1, 0
      %v3898 = vstv %s3897
      %vm3899 = vcmp.eq.s32.totalorder %v3898, 1
      %v3900 = vsel %vm3899, %v3892, %v3673
      %v3901 = vsel %vm3899, %v3890, %v3674
      %s3902 = smul.u32 14, 4
      %s3903 = smul.addr %s3902, 8
      %s3904 = scalar_lea.vmem [#allocation2], %s3903
      %v3905 = vld [vmem:[%s3904] sm:$0xff]
      %v3906 = vld [vmem:[%s3904 + $0x8] sm:$0xff]
      %v3907 = vld [vmem:[%s3904 + $0x10] sm:$0xff]
      %v3908 = vld [vmem:[%s3904 + $0x18] sm:$0xff]
      %v3909 = vld [vmem:[%s4] sm:$0xff]
      %v3910 = vld [vmem:[%s4 + $0x8] sm:$0xff]
      %v3911 = vld [vmem:[%s4 + $0x10] sm:$0xff]
      %v3912 = vld [vmem:[%s4 + $0x18] sm:$0xff]
      %v3913 = vld [vmem:[%s4 + $0x20] sm:$0xff]
      %v3914 = vld [vmem:[%s4 + $0x28] sm:$0xff]
      %v3915 = vld [vmem:[%s4 + $0x30] sm:$0xff]
      %v3916 = vld [vmem:[%s4 + $0x38] sm:$0xff]
      %v3917 = vld [vmem:[%s4 + $0x40] sm:$0xff]
      %v3918 = vld [vmem:[%s4 + $0x48] sm:$0xff]
      %v3919 = vld [vmem:[%s4 + $0x50] sm:$0xff]
      %v3920 = vld [vmem:[%s4 + $0x58] sm:$0xff]
      %v3921 = vld [vmem:[%s4 + $0x60] sm:$0xff]
      %v3922 = vld [vmem:[%s4 + $0x68] sm:$0xff]
      %v3923 = vld [vmem:[%s4 + $0x70] sm:$0xff]
      %v3924 = vld [vmem:[%s4 + $0x78] sm:$0xff]
      %v3925 = vld [vmem:[%s4 + $0x80] sm:$0xff]
      %v3926 = vld [vmem:[%s4 + $0x88] sm:$0xff]
      %v3927 = vld [vmem:[%s4 + $0x90] sm:$0xff]
      %v3928 = vld [vmem:[%s4 + $0x98] sm:$0xff]
      %v3929 = vld [vmem:[%s4 + $0xa0] sm:$0xff]
      %v3930 = vld [vmem:[%s4 + $0xa8] sm:$0xff]
      %v3931 = vld [vmem:[%s4 + $0xb0] sm:$0xff]
      %v3932 = vld [vmem:[%s4 + $0xb8] sm:$0xff]
      %v3933 = vld [vmem:[%s4 + $0xc0] sm:$0xff]
      %v3934 = vld [vmem:[%s4 + $0xc8] sm:$0xff]
      %v3935 = vld [vmem:[%s4 + $0xd0] sm:$0xff]
      %v3936 = vld [vmem:[%s4 + $0xd8] sm:$0xff]
      %v3937 = vld [vmem:[%s4 + $0xe0] sm:$0xff]
      %v3938 = vld [vmem:[%s4 + $0xe8] sm:$0xff]
      %v3939 = vld [vmem:[%s4 + $0xf0] sm:$0xff]
      %v3940 = vld [vmem:[%s4 + $0xf8] sm:$0xff]
      %v3941 = vld [vmem:[%s4 + $0x100] sm:$0xff]
      %v3942 = vld [vmem:[%s4 + $0x108] sm:$0xff]
      %v3943 = vld [vmem:[%s4 + $0x110] sm:$0xff]
      %v3944 = vld [vmem:[%s4 + $0x118] sm:$0xff]
      %v3945 = vld [vmem:[%s4 + $0x120] sm:$0xff]
      %v3946 = vld [vmem:[%s4 + $0x128] sm:$0xff]
      %v3947 = vld [vmem:[%s4 + $0x130] sm:$0xff]
      %v3948 = vld [vmem:[%s4 + $0x138] sm:$0xff]
      %v3949 = vld [vmem:[%s4 + $0x140] sm:$0xff]
      %v3950 = vld [vmem:[%s4 + $0x148] sm:$0xff]
      %v3951 = vld [vmem:[%s4 + $0x150] sm:$0xff]
      %v3952 = vld [vmem:[%s4 + $0x158] sm:$0xff]
      %v3953 = vld [vmem:[%s4 + $0x160] sm:$0xff]
      %v3954 = vld [vmem:[%s4 + $0x168] sm:$0xff]
      %v3955 = vld [vmem:[%s4 + $0x170] sm:$0xff]
      %v3956 = vld [vmem:[%s4 + $0x178] sm:$0xff]
      %v3957 = vld [vmem:[%s4 + $0x180] sm:$0xff]
      %v3958 = vld [vmem:[%s4 + $0x188] sm:$0xff]
      %v3959 = vld [vmem:[%s4 + $0x190] sm:$0xff]
      %v3960 = vld [vmem:[%s4 + $0x198] sm:$0xff]
      %v3961 = vld [vmem:[%s4 + $0x1a0] sm:$0xff]
      %v3962 = vld [vmem:[%s4 + $0x1a8] sm:$0xff]
      %v3963 = vld [vmem:[%s4 + $0x1b0] sm:$0xff]
      %v3964 = vld [vmem:[%s4 + $0x1b8] sm:$0xff]
      %v3965 = vld [vmem:[%s4 + $0x1c0] sm:$0xff]
      %v3966 = vld [vmem:[%s4 + $0x1c8] sm:$0xff]
      %v3967 = vld [vmem:[%s4 + $0x1d0] sm:$0xff]
      %v3968 = vld [vmem:[%s4 + $0x1d8] sm:$0xff]
      %v3969 = vld [vmem:[%s4 + $0x1e0] sm:$0xff]
      %v3970 = vld [vmem:[%s4 + $0x1e8] sm:$0xff]
      %v3971 = vld [vmem:[%s4 + $0x1f0] sm:$0xff]
      %v3972 = vld [vmem:[%s4 + $0x1f8] sm:$0xff]
      %3973 = vmatpush.msra.mxu0 %v3969
      %3974 = vmatpush.msra.mxu0 %v3965
      %3975 = vmatpush.msra.mxu0 %v3961
      %3976 = vmatpush.msra.mxu0 %v3957
      %3977 = vmatpush.msra.mxu0 %v3953
      %3978 = vmatpush.msra.mxu0 %v3949
      %3979 = vmatpush.msra.mxu0 %v3945
      %3980 = vmatpush.msra.mxu0 %v3941
      %3981 = vmatpush.msra.mxu0 %v3937
      %3982 = vmatpush.msra.mxu0 %v3933
      %3983 = vmatpush.msra.mxu0 %v3929
      %3984 = vmatpush.msra.mxu0 %v3925
      %3985 = vmatpush.msra.mxu0 %v3921
      %3986 = vmatpush.msra.mxu0 %v3917
      %3987 = vmatpush.msra.mxu0 %v3913
      %3988 = vmatpush.msra.mxu0 %v3909
      %3989 = vmatmul.f32.gmra.mxu0 %v3900
      %v3990 = vpop.f32.mrf.mxu0
      %v3991 = vadd.f32 0.0, %v3990
      %3992 = vdwg.mxu0
      %3993 = vmatpush.msra.mxu0 %v3970
      %3994 = vmatpush.msra.mxu0 %v3966
      %3995 = vmatpush.msra.mxu0 %v3962
      %3996 = vmatpush.msra.mxu0 %v3958
      %3997 = vmatpush.msra.mxu0 %v3954
      %3998 = vmatpush.msra.mxu0 %v3950
      %3999 = vmatpush.msra.mxu0 %v3946
      %4000 = vmatpush.msra.mxu0 %v3942
      %4001 = vmatpush.msra.mxu0 %v3938
      %4002 = vmatpush.msra.mxu0 %v3934
      %4003 = vmatpush.msra.mxu0 %v3930
      %4004 = vmatpush.msra.mxu0 %v3926
      %4005 = vmatpush.msra.mxu0 %v3922
      %4006 = vmatpush.msra.mxu0 %v3918
      %4007 = vmatpush.msra.mxu0 %v3914
      %4008 = vmatpush.msra.mxu0 %v3910
      %4009 = vmatmul.f32.gmra.mxu0 %v3900
      %v4010 = vpop.f32.mrf.mxu0
      %v4011 = vadd.f32 0.0, %v4010
      %4012 = vdwg.mxu0
      %4013 = vmatpush.msra.mxu0 %v3971
      %4014 = vmatpush.msra.mxu0 %v3967
      %4015 = vmatpush.msra.mxu0 %v3963
      %4016 = vmatpush.msra.mxu0 %v3959
      %4017 = vmatpush.msra.mxu0 %v3955
      %4018 = vmatpush.msra.mxu0 %v3951
      %4019 = vmatpush.msra.mxu0 %v3947
      %4020 = vmatpush.msra.mxu0 %v3943
      %4021 = vmatpush.msra.mxu0 %v3939
      %4022 = vmatpush.msra.mxu0 %v3935
      %4023 = vmatpush.msra.mxu0 %v3931
      %4024 = vmatpush.msra.mxu0 %v3927
      %4025 = vmatpush.msra.mxu0 %v3923
      %4026 = vmatpush.msra.mxu0 %v3919
      %4027 = vmatpush.msra.mxu0 %v3915
      %4028 = vmatpush.msra.mxu0 %v3911
      %4029 = vmatmul.f32.gmra.mxu0 %v3900
      %v4030 = vpop.f32.mrf.mxu0
      %v4031 = vadd.f32 0.0, %v4030
      %4032 = vdwg.mxu0
      %4033 = vmatpush.msra.mxu0 %v3972
      %4034 = vmatpush.msra.mxu0 %v3968
      %4035 = vmatpush.msra.mxu0 %v3964
      %4036 = vmatpush.msra.mxu0 %v3960
      %4037 = vmatpush.msra.mxu0 %v3956
      %4038 = vmatpush.msra.mxu0 %v3952
      %4039 = vmatpush.msra.mxu0 %v3948
      %4040 = vmatpush.msra.mxu0 %v3944
      %4041 = vmatpush.msra.mxu0 %v3940
      %4042 = vmatpush.msra.mxu0 %v3936
      %4043 = vmatpush.msra.mxu0 %v3932
      %4044 = vmatpush.msra.mxu0 %v3928
      %4045 = vmatpush.msra.mxu0 %v3924
      %4046 = vmatpush.msra.mxu0 %v3920
      %4047 = vmatpush.msra.mxu0 %v3916
      %4048 = vmatpush.msra.mxu0 %v3912
      %4049 = vmatmul.f32.gmra.mxu0 %v3900
      %v4050 = vpop.f32.mrf.mxu0
      %v4051 = vadd.f32 0.0, %v4050
      %4052 = vdwg.mxu0
      %v4053 = vadd.f32 %v3905, %v3991
      %v4054 = vadd.f32 %v3906, %v4011
      %v4055 = vadd.f32 %v3907, %v4031
      %v4056 = vadd.f32 %v3908, %v4051
      %v4057 = vxor.u32 %v4053, 2147483648
      %v4058 = vmul.f32 %v4057, 1.442695
      %v4059 = vpow.pop %v4058
      %v4060 = vadd.f32 %v4059, 1.0
      %v4061 = vrcp.pop %v4060
      %v4062 = vmul.f32 %v4060, %v4061
      %v4063 = vsub.f32 1.0, %v4062
      %v4064 = vmul.f32 %v4061, %v4063
      %v4065 = vadd.f32 %v4061, %v4064
      %vm4066 = vweird.f32 %v4060
      %vm4067 = vweird.f32 %v4061
      %vm4068 = vmor %vm4066, %vm4067
      %v4069 = vsel %vm4068, %v4061, %v4065
      %v4070 = vand.u32 2147483647, %v4060
      %vm4071 = vcmp.eq.f32.partialorder %v4070, 8.507059e+37
      %v4072 = vand.u32 %v4060, 2147483648
      %v4073 = vor.u32 1.1754944e-38, %v4072
      %v4074 = vsel %vm4071, %v4073, %v4069
      %v4075 = vmul.f32 1.0, %v4074
      %v4076 = vxor.u32 %v4054, 2147483648
      %v4077 = vmul.f32 %v4076, 1.442695
      %v4078 = vpow.pop %v4077
      %v4079 = vadd.f32 %v4078, 1.0
      %v4080 = vrcp.pop %v4079
      %v4081 = vmul.f32 %v4079, %v4080
      %v4082 = vsub.f32 1.0, %v4081
      %v4083 = vmul.f32 %v4080, %v4082
      %v4084 = vadd.f32 %v4080, %v4083
      %vm4085 = vweird.f32 %v4079
      %vm4086 = vweird.f32 %v4080
      %vm4087 = vmor %vm4085, %vm4086
      %v4088 = vsel %vm4087, %v4080, %v4084
      %v4089 = vand.u32 2147483647, %v4079
      %vm4090 = vcmp.eq.f32.partialorder %v4089, 8.507059e+37
      %v4091 = vand.u32 %v4079, 2147483648
      %v4092 = vor.u32 1.1754944e-38, %v4091
      %v4093 = vsel %vm4090, %v4092, %v4088
      %v4094 = vmul.f32 1.0, %v4093
      %v4095 = vtanh.pop %v4055
      %v4096 = vxor.u32 %v4056, 2147483648
      %v4097 = vmul.f32 %v4096, 1.442695
      %v4098 = vpow.pop %v4097
      %v4099 = vadd.f32 %v4098, 1.0
      %v4100 = vrcp.pop %v4099
      %v4101 = vmul.f32 %v4099, %v4100
      %v4102 = vsub.f32 1.0, %v4101
      %v4103 = vmul.f32 %v4100, %v4102
      %v4104 = vadd.f32 %v4100, %v4103
      %vm4105 = vweird.f32 %v4099
      %vm4106 = vweird.f32 %v4100
      %vm4107 = vmor %vm4105, %vm4106
      %v4108 = vsel %vm4107, %v4100, %v4104
      %v4109 = vand.u32 2147483647, %v4099
      %vm4110 = vcmp.eq.f32.partialorder %v4109, 8.507059e+37
      %v4111 = vand.u32 %v4099, 2147483648
      %v4112 = vor.u32 1.1754944e-38, %v4111
      %v4113 = vsel %vm4110, %v4112, %v4108
      %v4114 = vmul.f32 1.0, %v4113
      %v4115 = vmul.f32 %v4094, %v3901
      %v4116 = vmul.f32 %v4075, %v4095
      %v4117 = vadd.f32 %v4115, %v4116
      %v4118 = vtanh.pop %v4117
      %v4119 = vmul.f32 %v4114, %v4118
      %s4120 = scalar_lea.vmem %s302, 112
      %4121 = vst [vmem:[%s4120] sm:$0xff] %v4119
      %s4122 = sadd.s32 %s944, 14
      %p4123 = scmp.lt.s32.totalorder %s4122, 37
      %s4124 = scalar_select %p4123, 1, 0
      %v4125 = vstv %s4124
      %vm4126 = vcmp.eq.s32.totalorder %v4125, 1
      %v4127 = vsel %vm4126, %v4119, %v3900
      %v4128 = vsel %vm4126, %v4117, %v3901
      %s4129 = smul.u32 15, 4
      %s4130 = smul.addr %s4129, 8
      %s4131 = scalar_lea.vmem [#allocation2], %s4130
      %v4132 = vld [vmem:[%s4131] sm:$0xff]
      %v4133 = vld [vmem:[%s4131 + $0x8] sm:$0xff]
      %v4134 = vld [vmem:[%s4131 + $0x10] sm:$0xff]
      %v4135 = vld [vmem:[%s4131 + $0x18] sm:$0xff]
      %v4136 = vld [vmem:[%s4] sm:$0xff]
      %v4137 = vld [vmem:[%s4 + $0x8] sm:$0xff]
      %v4138 = vld [vmem:[%s4 + $0x10] sm:$0xff]
      %v4139 = vld [vmem:[%s4 + $0x18] sm:$0xff]
      %v4140 = vld [vmem:[%s4 + $0x20] sm:$0xff]
      %v4141 = vld [vmem:[%s4 + $0x28] sm:$0xff]
      %v4142 = vld [vmem:[%s4 + $0x30] sm:$0xff]
      %v4143 = vld [vmem:[%s4 + $0x38] sm:$0xff]
      %v4144 = vld [vmem:[%s4 + $0x40] sm:$0xff]
      %v4145 = vld [vmem:[%s4 + $0x48] sm:$0xff]
      %v4146 = vld [vmem:[%s4 + $0x50] sm:$0xff]
      %v4147 = vld [vmem:[%s4 + $0x58] sm:$0xff]
      %v4148 = vld [vmem:[%s4 + $0x60] sm:$0xff]
      %v4149 = vld [vmem:[%s4 + $0x68] sm:$0xff]
      %v4150 = vld [vmem:[%s4 + $0x70] sm:$0xff]
      %v4151 = vld [vmem:[%s4 + $0x78] sm:$0xff]
      %v4152 = vld [vmem:[%s4 + $0x80] sm:$0xff]
      %v4153 = vld [vmem:[%s4 + $0x88] sm:$0xff]
      %v4154 = vld [vmem:[%s4 + $0x90] sm:$0xff]
      %v4155 = vld [vmem:[%s4 + $0x98] sm:$0xff]
      %v4156 = vld [vmem:[%s4 + $0xa0] sm:$0xff]
      %v4157 = vld [vmem:[%s4 + $0xa8] sm:$0xff]
      %v4158 = vld [vmem:[%s4 + $0xb0] sm:$0xff]
      %v4159 = vld [vmem:[%s4 + $0xb8] sm:$0xff]
      %v4160 = vld [vmem:[%s4 + $0xc0] sm:$0xff]
      %v4161 = vld [vmem:[%s4 + $0xc8] sm:$0xff]
      %v4162 = vld [vmem:[%s4 + $0xd0] sm:$0xff]
      %v4163 = vld [vmem:[%s4 + $0xd8] sm:$0xff]
      %v4164 = vld [vmem:[%s4 + $0xe0] sm:$0xff]
      %v4165 = vld [vmem:[%s4 + $0xe8] sm:$0xff]
      %v4166 = vld [vmem:[%s4 + $0xf0] sm:$0xff]
      %v4167 = vld [vmem:[%s4 + $0xf8] sm:$0xff]
      %v4168 = vld [vmem:[%s4 + $0x100] sm:$0xff]
      %v4169 = vld [vmem:[%s4 + $0x108] sm:$0xff]
      %v4170 = vld [vmem:[%s4 + $0x110] sm:$0xff]
      %v4171 = vld [vmem:[%s4 + $0x118] sm:$0xff]
      %v4172 = vld [vmem:[%s4 + $0x120] sm:$0xff]
      %v4173 = vld [vmem:[%s4 + $0x128] sm:$0xff]
      %v4174 = vld [vmem:[%s4 + $0x130] sm:$0xff]
      %v4175 = vld [vmem:[%s4 + $0x138] sm:$0xff]
      %v4176 = vld [vmem:[%s4 + $0x140] sm:$0xff]
      %v4177 = vld [vmem:[%s4 + $0x148] sm:$0xff]
      %v4178 = vld [vmem:[%s4 + $0x150] sm:$0xff]
      %v4179 = vld [vmem:[%s4 + $0x158] sm:$0xff]
      %v4180 = vld [vmem:[%s4 + $0x160] sm:$0xff]
      %v4181 = vld [vmem:[%s4 + $0x168] sm:$0xff]
      %v4182 = vld [vmem:[%s4 + $0x170] sm:$0xff]
      %v4183 = vld [vmem:[%s4 + $0x178] sm:$0xff]
      %v4184 = vld [vmem:[%s4 + $0x180] sm:$0xff]
      %v4185 = vld [vmem:[%s4 + $0x188] sm:$0xff]
      %v4186 = vld [vmem:[%s4 + $0x190] sm:$0xff]
      %v4187 = vld [vmem:[%s4 + $0x198] sm:$0xff]
      %v4188 = vld [vmem:[%s4 + $0x1a0] sm:$0xff]
      %v4189 = vld [vmem:[%s4 + $0x1a8] sm:$0xff]
      %v4190 = vld [vmem:[%s4 + $0x1b0] sm:$0xff]
      %v4191 = vld [vmem:[%s4 + $0x1b8] sm:$0xff]
      %v4192 = vld [vmem:[%s4 + $0x1c0] sm:$0xff]
      %v4193 = vld [vmem:[%s4 + $0x1c8] sm:$0xff]
      %v4194 = vld [vmem:[%s4 + $0x1d0] sm:$0xff]
      %v4195 = vld [vmem:[%s4 + $0x1d8] sm:$0xff]
      %v4196 = vld [vmem:[%s4 + $0x1e0] sm:$0xff]
      %v4197 = vld [vmem:[%s4 + $0x1e8] sm:$0xff]
      %v4198 = vld [vmem:[%s4 + $0x1f0] sm:$0xff]
      %v4199 = vld [vmem:[%s4 + $0x1f8] sm:$0xff]
      %4200 = vmatpush.msra.mxu0 %v4196
      %4201 = vmatpush.msra.mxu0 %v4192
      %4202 = vmatpush.msra.mxu0 %v4188
      %4203 = vmatpush.msra.mxu0 %v4184
      %4204 = vmatpush.msra.mxu0 %v4180
      %4205 = vmatpush.msra.mxu0 %v4176
      %4206 = vmatpush.msra.mxu0 %v4172
      %4207 = vmatpush.msra.mxu0 %v4168
      %4208 = vmatpush.msra.mxu0 %v4164
      %4209 = vmatpush.msra.mxu0 %v4160
      %4210 = vmatpush.msra.mxu0 %v4156
      %4211 = vmatpush.msra.mxu0 %v4152
      %4212 = vmatpush.msra.mxu0 %v4148
      %4213 = vmatpush.msra.mxu0 %v4144
      %4214 = vmatpush.msra.mxu0 %v4140
      %4215 = vmatpush.msra.mxu0 %v4136
      %4216 = vmatmul.f32.gmra.mxu0 %v4127
      %v4217 = vpop.f32.mrf.mxu0
      %v4218 = vadd.f32 0.0, %v4217
      %4219 = vdwg.mxu0
      %4220 = vmatpush.msra.mxu0 %v4197
      %4221 = vmatpush.msra.mxu0 %v4193
      %4222 = vmatpush.msra.mxu0 %v4189
      %4223 = vmatpush.msra.mxu0 %v4185
      %4224 = vmatpush.msra.mxu0 %v4181
      %4225 = vmatpush.msra.mxu0 %v4177
      %4226 = vmatpush.msra.mxu0 %v4173
      %4227 = vmatpush.msra.mxu0 %v4169
      %4228 = vmatpush.msra.mxu0 %v4165
      %4229 = vmatpush.msra.mxu0 %v4161
      %4230 = vmatpush.msra.mxu0 %v4157
      %4231 = vmatpush.msra.mxu0 %v4153
      %4232 = vmatpush.msra.mxu0 %v4149
      %4233 = vmatpush.msra.mxu0 %v4145
      %4234 = vmatpush.msra.mxu0 %v4141
      %4235 = vmatpush.msra.mxu0 %v4137
      %4236 = vmatmul.f32.gmra.mxu0 %v4127
      %v4237 = vpop.f32.mrf.mxu0
      %v4238 = vadd.f32 0.0, %v4237
      %4239 = vdwg.mxu0
      %4240 = vmatpush.msra.mxu0 %v4198
      %4241 = vmatpush.msra.mxu0 %v4194
      %4242 = vmatpush.msra.mxu0 %v4190
      %4243 = vmatpush.msra.mxu0 %v4186
      %4244 = vmatpush.msra.mxu0 %v4182
      %4245 = vmatpush.msra.mxu0 %v4178
      %4246 = vmatpush.msra.mxu0 %v4174
      %4247 = vmatpush.msra.mxu0 %v4170
      %4248 = vmatpush.msra.mxu0 %v4166
      %4249 = vmatpush.msra.mxu0 %v4162
      %4250 = vmatpush.msra.mxu0 %v4158
      %4251 = vmatpush.msra.mxu0 %v4154
      %4252 = vmatpush.msra.mxu0 %v4150
      %4253 = vmatpush.msra.mxu0 %v4146
      %4254 = vmatpush.msra.mxu0 %v4142
      %4255 = vmatpush.msra.mxu0 %v4138
      %4256 = vmatmul.f32.gmra.mxu0 %v4127
      %v4257 = vpop.f32.mrf.mxu0
      %v4258 = vadd.f32 0.0, %v4257
      %4259 = vdwg.mxu0
      %4260 = vmatpush.msra.mxu0 %v4199
      %4261 = vmatpush.msra.mxu0 %v4195
      %4262 = vmatpush.msra.mxu0 %v4191
      %4263 = vmatpush.msra.mxu0 %v4187
      %4264 = vmatpush.msra.mxu0 %v4183
      %4265 = vmatpush.msra.mxu0 %v4179
      %4266 = vmatpush.msra.mxu0 %v4175
      %4267 = vmatpush.msra.mxu0 %v4171
      %4268 = vmatpush.msra.mxu0 %v4167
      %4269 = vmatpush.msra.mxu0 %v4163
      %4270 = vmatpush.msra.mxu0 %v4159
      %4271 = vmatpush.msra.mxu0 %v4155
      %4272 = vmatpush.msra.mxu0 %v4151
      %4273 = vmatpush.msra.mxu0 %v4147
      %4274 = vmatpush.msra.mxu0 %v4143
      %4275 = vmatpush.msra.mxu0 %v4139
      %4276 = vmatmul.f32.gmra.mxu0 %v4127
      %v4277 = vpop.f32.mrf.mxu0
      %v4278 = vadd.f32 0.0, %v4277
      %4279 = vdwg.mxu0
      %v4280 = vadd.f32 %v4132, %v4218
      %v4281 = vadd.f32 %v4133, %v4238
      %v4282 = vadd.f32 %v4134, %v4258
      %v4283 = vadd.f32 %v4135, %v4278
      %v4284 = vxor.u32 %v4280, 2147483648
      %v4285 = vmul.f32 %v4284, 1.442695
      %v4286 = vpow.pop %v4285
      %v4287 = vadd.f32 %v4286, 1.0
      %v4288 = vrcp.pop %v4287
      %v4289 = vmul.f32 %v4287, %v4288
      %v4290 = vsub.f32 1.0, %v4289
      %v4291 = vmul.f32 %v4288, %v4290
      %v4292 = vadd.f32 %v4288, %v4291
      %vm4293 = vweird.f32 %v4287
      %vm4294 = vweird.f32 %v4288
      %vm4295 = vmor %vm4293, %vm4294
      %v4296 = vsel %vm4295, %v4288, %v4292
      %v4297 = vand.u32 2147483647, %v4287
      %vm4298 = vcmp.eq.f32.partialorder %v4297, 8.507059e+37
      %v4299 = vand.u32 %v4287, 2147483648
      %v4300 = vor.u32 1.1754944e-38, %v4299
      %v4301 = vsel %vm4298, %v4300, %v4296
      %v4302 = vmul.f32 1.0, %v4301
      %v4303 = vxor.u32 %v4281, 2147483648
      %v4304 = vmul.f32 %v4303, 1.442695
      %v4305 = vpow.pop %v4304
      %v4306 = vadd.f32 %v4305, 1.0
      %v4307 = vrcp.pop %v4306
      %v4308 = vmul.f32 %v4306, %v4307
      %v4309 = vsub.f32 1.0, %v4308
      %v4310 = vmul.f32 %v4307, %v4309
      %v4311 = vadd.f32 %v4307, %v4310
      %vm4312 = vweird.f32 %v4306
      %vm4313 = vweird.f32 %v4307
      %vm4314 = vmor %vm4312, %vm4313
      %v4315 = vsel %vm4314, %v4307, %v4311
      %v4316 = vand.u32 2147483647, %v4306
      %vm4317 = vcmp.eq.f32.partialorder %v4316, 8.507059e+37
      %v4318 = vand.u32 %v4306, 2147483648
      %v4319 = vor.u32 1.1754944e-38, %v4318
      %v4320 = vsel %vm4317, %v4319, %v4315
      %v4321 = vmul.f32 1.0, %v4320
      %v4322 = vtanh.pop %v4282
      %v4323 = vxor.u32 %v4283, 2147483648
      %v4324 = vmul.f32 %v4323, 1.442695
      %v4325 = vpow.pop %v4324
      %v4326 = vadd.f32 %v4325, 1.0
      %v4327 = vrcp.pop %v4326
      %v4328 = vmul.f32 %v4326, %v4327
      %v4329 = vsub.f32 1.0, %v4328
      %v4330 = vmul.f32 %v4327, %v4329
      %v4331 = vadd.f32 %v4327, %v4330
      %vm4332 = vweird.f32 %v4326
      %vm4333 = vweird.f32 %v4327
      %vm4334 = vmor %vm4332, %vm4333
      %v4335 = vsel %vm4334, %v4327, %v4331
      %v4336 = vand.u32 2147483647, %v4326
      %vm4337 = vcmp.eq.f32.partialorder %v4336, 8.507059e+37
      %v4338 = vand.u32 %v4326, 2147483648
      %v4339 = vor.u32 1.1754944e-38, %v4338
      %v4340 = vsel %vm4337, %v4339, %v4335
      %v4341 = vmul.f32 1.0, %v4340
      %v4342 = vmul.f32 %v4321, %v4128
      %v4343 = vmul.f32 %v4302, %v4322
      %v4344 = vadd.f32 %v4342, %v4343
      %v4345 = vtanh.pop %v4344
      %v4346 = vmul.f32 %v4341, %v4345
      %s4347 = scalar_lea.vmem %s302, 120
      %4348 = vst [vmem:[%s4347] sm:$0xff] %v4346
      %s4349 = sadd.s32 %s944, 15
      %p4350 = scmp.lt.s32.totalorder %s4349, 37
      %s4351 = scalar_select %p4350, 1, 0
      %v4352 = vstv %s4351
      %vm4353 = vcmp.eq.s32.totalorder %v4352, 1
      %v4354 = vsel %vm4353, %v4346, %v4127
      %v4355 = vsel %vm4353, %v4344, %v4128
      %4356 = vst [vmem:[#allocation3] sm:$0xff] %v4354
      %4357 = vst [vmem:[#allocation4] sm:$0xff] %v4355
      %p4358 = scmp.eq.s32.totalorder %s20, 2
      // Predicated region
      $region49: #{_manual_lstm_impl.1} parent=43 // pred_check
        %p4359 = pneg %p4358
      $region50: #{_manual_lstm_impl.1} parent=43 // pred_check_branch
        %4361 = sbr.rel (%p4359) target = $region52
      $region51: #{_manual_lstm_impl.1} parent=43 // pred_region
        %4362 = vst [vmem:[%s7] sm:$0xff] %v4354
        %4363 = vst [vmem:[%s8] sm:$0xff] %v4355
      $region52: #{_manual_lstm_impl.1} parent=43 // pred_fallthru
        _
      %s4364 = smul.u32 16, %s20
      %p4365 = scmp.lt.s32.totalorder %s4364, 47
      %s4366 = scalar_select %p4365, %s4364, 47
      %s4367 = smul.addr %s4366, 8
      %s4368 = scalar_lea.vmem %s6, %s4367
      // Predicated region
      $region53: #{_manual_lstm_impl.1} parent=43 // pred_check
        %p4369 = pneg %p169
      $region54: #{_manual_lstm_impl.1} parent=43 // pred_check_branch
        %4371 = sbr.rel (%p4369) target = $region56
      $region55: #{_manual_lstm_impl.1} parent=43 // pred_region
        %s4372 = smul.u32 16, %s20
      $region56: #{_manual_lstm_impl.1} parent=43 // pred_fallthru
        _
      // Predicated region
      $region57: #{_manual_lstm_impl.1} parent=43 // pred_check
        %p4373 = pneg %p190
      $region58: #{_manual_lstm_impl.1} parent=43 // pred_check_branch
        %4375 = sbr.rel (%p4373) target = $region60
      $region59: #{_manual_lstm_impl.1} parent=43 // pred_region
        _
      $region60: #{_manual_lstm_impl.1} parent=43 // pred_fallthru
        _
      // Predicated region
      $region61: #{_manual_lstm_impl.1} parent=43 // pred_check
        %p4376 = pneg %p211
      $region62: #{_manual_lstm_impl.1} parent=43 // pred_check_branch
        %4378 = sbr.rel (%p4376) target = $region64
      $region63: #{_manual_lstm_impl.1} parent=43 // pred_region
        _
      $region64: #{_manual_lstm_impl.1} parent=43 // pred_fallthru
        _
      // Predicated region
      $region65: #{_manual_lstm_impl.1} parent=43 // pred_check
        %p4379 = pneg %p190
      $region66: #{_manual_lstm_impl.1} parent=43 // pred_check_branch
        %4381 = sbr.rel (%p4379) target = $region68
      $region67: #{_manual_lstm_impl.1} parent=43 // pred_region
        _
      $region68: #{_manual_lstm_impl.1} parent=43 // pred_fallthru
        _
      // Predicated region
      $region69: #{_manual_lstm_impl.1} parent=43 // pred_check
        %p4382 = pneg %p211
      $region70: #{_manual_lstm_impl.1} parent=43 // pred_check_branch
        %4384 = sbr.rel (%p4382) target = $region72
      $region71: #{_manual_lstm_impl.1} parent=43 // pred_region
        _
      $region72: #{_manual_lstm_impl.1} parent=43 // pred_fallthru
        _
    $region44: #{_manual_lstm_impl.1} parent=5 // pred_fallthru
      _
    %p4385 = scmp.le.s32.totalorder 2, %s15
    // Predicated region
    $region73: #{_manual_lstm_impl.1} parent=5 // pred_check
      %p4386 = pneg %p4385
    $region74: #{_manual_lstm_impl.1} parent=5 // pred_check_branch
      %4388 = sbr.rel (%p4386) target = $region76
    $region75: #{_manual_lstm_impl.1} parent=5 // pred_region
      %s4389 = ssub.s32 %s15, 2
      // Predicated region
      $region77: #{_manual_lstm_impl.1} parent=75 // pred_check
        %p4390 = pneg %p175
      $region78: #{_manual_lstm_impl.1} parent=75 // pred_check_branch
        %4392 = sbr.rel (%p4390) target = $region80
      $region79: #{_manual_lstm_impl.1} parent=75 // pred_region
        %s4393 = smul.u32 16, %s21
        %p4394 = scmp.lt.s32.totalorder %s4393, 47
        %s4395 = scalar_select %p4394, %s4393, 47
        %s4396 = smul.addr %s4395, 8
        %s4397 = scalar_lea.vmem %s6, %s4396
      $region80: #{_manual_lstm_impl.1} parent=75 // pred_fallthru
        _
    $region76: #{_manual_lstm_impl.1} parent=5 // pred_fallthru
      _
  $region6: #{_manual_lstm_impl.1} parent=0 // loop_footer
    %s19 = sadd.s32 1, %s15
  $region7: #{_manual_lstm_impl.1} parent=0 // loop_footer_branch
    %14 = sbr.rel target = $region3
  $region8: #{_manual_lstm_impl.1} parent=0 // loop_exit
    _

</llo_original>
